<compile_context>
chip_gen: v6e
topology: v6e:2x2x1
jax: 0.10.0
libtpu: 0.0.40
codegen_flags: <defaults>
</compile_context>

<pallas_src>
import functools

import jax
import jax.numpy as jnp
from jax import lax
from jax.experimental import pallas as pl
from jax.experimental.pallas import tpu as pltpu


# ----------------------------- kernel ---------------------------------------


def _fused_kernel(shifts, xy_ref, w1_ref, w2_ref, w3_ref, wo_ref, mask_ref,
                  o_ref, stk_ref):
    """Whole forward on one lane-dense tile.

    xy_ref   : (Cin, L) with L = 2*B*H*W, lanes = [x_b0 .. x_bB-1 | y_b0 .. y_bB-1]
    w{1,2,3} : (Cin, 9*Cin + 1)  -- flattened 3x3 taps, last column = bias
    wo_ref   : (Cout, Cin + 1)   -- BN-scaled 1x1 weights, last column = shift
    mask_ref : (9, L)            -- per-tap boundary masks (0/1)
    o_ref    : (Cout, L // 2)
    stk_ref  : (9*Cin + 1, L) VMEM scratch for the stacked taps (+ ones row)
    """
    cin = xy_ref.shape[0]
    L = xy_ref.shape[1]
    half = L // 2

    # Hoist per-tap boundary masks once; reused by all three convs.
    masks = [mask_ref[t:t + 1, :] for t in range(9)]          # each (1, L)

    # Ones row folds the conv bias into the stacked matmul (written once).
    stk_ref[9 * cin:9 * cin + 1, :] = jnp.ones((1, L), jnp.float32)

    def conv3x3_relu(v, w_ref):
        # v: (cin, L). Write the 9 rolled+masked taps into the stacking scratch,
        # then a single MXU matmul with K = 9*cin + 1 (bias via the ones row).
        for t in range(9):
            if shifts[t] == 0:
                tap = v                                        # center tap
            else:
                tap = pltpu.roll(v, shifts[t], axis=1) * masks[t]
            stk_ref[t * cin:(t + 1) * cin, :] = tap
        r = jnp.dot(w_ref[...], stk_ref[...],
                    preferred_element_type=jnp.float32)        # (cin, L)
        return jnp.maximum(r, 0.0)

    xy = xy_ref[...]                                           # (cin, L)
    t1 = conv3x3_relu(xy, w1_ref)
    t2 = conv3x3_relu(t1, w2_ref)
    t3 = conv3x3_relu(t2 + t1, w3_ref)

    tsum = t1 + t2 + t3                                        # (cin, L)
    s = tsum[:, :half] + tsum[:, half:]                        # x-half + y-half

    # 1x1 conv with folded bias + BN affine, then ReLU.
    r = jnp.dot(wo_ref[:, :cin], s,
                preferred_element_type=jnp.float32) + wo_ref[:, cin:]
    o_ref[...] = jnp.maximum(r, 0.0).astype(o_ref.dtype)


# --------------------------- pallas wrapper ----------------------------------


@jax.jit
def densecat_cat_add_forward(x_nchw, y_nchw, p):
    B, Cin, H, W = x_nchw.shape
    HW = H * W
    half = B * HW
    L = 2 * half
    Cout = p["wo"].shape[0]
    dt = x_nchw.dtype

    # NCHW -> lane-dense (Cin, B*HW) per branch; concat branches along lanes.
    def to_lanes(a):
        return jnp.transpose(a.reshape(B, Cin, HW), (1, 0, 2)).reshape(Cin, half)

    xy = jnp.concatenate([to_lanes(x_nchw), to_lanes(y_nchw)], axis=1)  # (Cin, L)

    # (O, I, 3, 3), (O,) -> (O, 9*I + 1); column = (kh*3 + kw)*I + i, last = bias.
    def make_what(w, b):
        taps = jnp.transpose(w, (0, 2, 3, 1)).reshape(w.shape[0], 9 * w.shape[1])
        return jnp.concatenate([taps, b[:, None]], axis=1).astype(dt)

    w1 = make_what(p["w1"], p["b1"])
    w2 = make_what(p["w2"], p["b2"])
    w3 = make_what(p["w3"], p["b3"])

    # Fold 1x1-conv bias + eval-mode BatchNorm affine into the 1x1 weights.
    eps = 1e-5
    scale = p["gamma"] / jnp.sqrt(p["rvar"] + eps)
    shift = (p["bo"] - p["rmean"]) * scale + p["beta"]
    wo = jnp.concatenate([p["wo"] * scale[:, None], shift[:, None]],
                         axis=1).astype(dt)                    # (Cout, Cin + 1)

    # Static lane-roll amounts + per-tap boundary masks (one HW image, tiled 2B x).
    pos = jnp.arange(HW, dtype=jnp.int32)
    rr, cc = pos // W, pos % W
    masks, shifts = [], []
    for kh in range(3):
        for kw in range(3):
            dh, dw = kh - 1, kw - 1
            shifts.append((-(dh * W + dw)) % L)
            valid = ((rr + dh >= 0) & (rr + dh < H) &
                     (cc + dw >= 0) & (cc + dw < W))
            masks.append(jnp.tile(valid.astype(dt), 2 * B))
    mask = jnp.stack(masks)                                    # (9, L)
    shifts = tuple(shifts)

    out = pl.pallas_call(
        functools.partial(_fused_kernel, shifts),
        out_shape=jax.ShapeDtypeStruct((Cout, half), dt),
        grid_spec=pltpu.PrefetchScalarGridSpec(
            num_scalar_prefetch=0,
            grid=(1,),                                          # one fused step
            in_specs=[
                pl.BlockSpec((Cin, L), lambda i: (0, 0)),             # xy
                pl.BlockSpec((Cin, 9 * Cin + 1), lambda i: (0, 0)),   # w1_hat
                pl.BlockSpec((Cin, 9 * Cin + 1), lambda i: (0, 0)),   # w2_hat
                pl.BlockSpec((Cin, 9 * Cin + 1), lambda i: (0, 0)),   # w3_hat
                pl.BlockSpec((Cout, Cin + 1), lambda i: (0, 0)),      # wo_hat
                pl.BlockSpec((9, L), lambda i: (0, 0)),               # tap masks
            ],
            out_specs=pl.BlockSpec((Cout, half), lambda i: (0, 0)),
            scratch_shapes=[pltpu.VMEM((9 * Cin + 1, L), jnp.float32)],
        ),
        compiler_params=pltpu.CompilerParams(
            dimension_semantics=("arbitrary",)),
    )(xy, w1, w2, w3, wo, mask)

    # (Cout, B*HW) -> (B, Cout, H, W)
    return jnp.transpose(out.reshape(Cout, B, H, W), (1, 0, 2, 3))


# ----------------------------- params ----------------------------------------


def init_params(key, in_chn, out_chn):
    ks = jax.random.split(key, 8)
    return {
        # PyTorch layouts: conv3x3 (O, I, KH, KW); conv1x1 (O, I)
        "w1": jax.random.normal(ks[0], (in_chn, in_chn, 3, 3), jnp.float32) * 0.1,
        "b1": jax.random.normal(ks[1], (in_chn,), jnp.float32) * 0.05,
        "w2": jax.random.normal(ks[2], (in_chn, in_chn, 3, 3), jnp.float32) * 0.1,
        "b2": jax.random.normal(ks[3], (in_chn,), jnp.float32) * 0.05,
        "w3": jax.random.normal(ks[4], (in_chn, in_chn, 3, 3), jnp.float32) * 0.1,
        "b3": jax.random.normal(ks[5], (in_chn,), jnp.float32) * 0.05,
        "wo": jax.random.normal(ks[6], (out_chn, in_chn), jnp.float32) * 0.1,
        "bo": jax.random.normal(ks[7], (out_chn,), jnp.float32) * 0.05,
        # BatchNorm2d(out_chn) freshly-initialized stats/affine (eval mode)
        "gamma": jnp.ones((out_chn,), jnp.float32),
        "beta": jnp.zeros((out_chn,), jnp.float32),
        "rmean": jnp.zeros((out_chn,), jnp.float32),
        "rvar": jnp.ones((out_chn,), jnp.float32),
    }


# ----------------------------- reference (plain JAX) --------------------------


def _ref_conv3x3_relu(x, w, b):
    out = lax.conv_general_dilated(
        x, w, window_strides=(1, 1), padding=((1, 1), (1, 1)),
        dimension_numbers=("NCHW", "OIHW", "NCHW"))
    return jnp.maximum(out + b[None, :, None, None], 0.0)


def reference_forward(x, y, p):
    x1 = _ref_conv3x3_relu(x, p["w1"], p["b1"])
    x2 = _ref_conv3x3_relu(x1, p["w2"], p["b2"])
    x3 = _ref_conv3x3_relu(x2 + x1, p["w3"], p["b3"])
    y1 = _ref_conv3x3_relu(y, p["w1"], p["b1"])
    y2 = _ref_conv3x3_relu(y1, p["w2"], p["b2"])
    y3 = _ref_conv3x3_relu(y2 + y1, p["w3"], p["b3"])
    s = x1 + x2 + x3 + y1 + y2 + y3
    conv = jnp.einsum("oc,bchw->bohw", p["wo"], s) + p["bo"][None, :, None, None]
    eps = 1e-5
    bn = ((conv - p["rmean"][None, :, None, None]) /
          jnp.sqrt(p["rvar"][None, :, None, None] + eps) *
          p["gamma"][None, :, None, None] + p["beta"][None, :, None, None])
    return jnp.maximum(bn, 0.0)


# ----------------------------------- main -------------------------------------


if __name__ == "__main__":
    B, in_chn, out_chn, H, W = 2, 4, 8, 16, 16
    key = jax.random.PRNGKey(0)
    kx, ky, kp = jax.random.split(key, 3)
    x = jax.random.normal(kx, (B, in_chn, H, W), jnp.float32)
    y = jax.random.normal(ky, (B, in_chn, H, W), jnp.float32)
    params = init_params(kp, in_chn, out_chn)

    out = densecat_cat_add_forward(x, y, params)
    out = jax.block_until_ready(out)

    ref = reference_forward(x, y, params)
    assert out.shape == (B, out_chn, H, W), out.shape
    assert jnp.allclose(out, ref, atol=1e-3, rtol=1e-3), float(
        jnp.max(jnp.abs(out - ref)))

    print("KERNEL_OK")
</pallas_src>

<mosaic_0001>
module attributes {stable_mosaic.version = 11 : i64} {
  func.func @_fused_kernel(%arg0: i32, %arg1: memref<4x1024xf32, #tpu.memory_space<vmem>>, %arg2: memref<4x37xf32, #tpu.memory_space<vmem>>, %arg3: memref<4x37xf32, #tpu.memory_space<vmem>>, %arg4: memref<4x37xf32, #tpu.memory_space<vmem>>, %arg5: memref<8x5xf32, #tpu.memory_space<vmem>>, %arg6: memref<9x1024xf32, #tpu.memory_space<vmem>>, %arg7: memref<8x512xf32, #tpu.memory_space<vmem>>, %arg8: memref<37x1024xf32, #tpu.memory_space<vmem>>) attributes {dimension_semantics = [#tpu.dimension_semantics<arbitrary>], iteration_bounds = array<i64: 1>, scalar_prefetch = 0 : i64, scratch_operands = 1 : i64, tpu.core_type = #tpu.core_type<tc>, window_params = [{pipeline_mode = #tpu.pipeline_mode<synchronous>, transform_indices = @transform_0, window_bounds = array<i64: 4, 1024>}, {pipeline_mode = #tpu.pipeline_mode<synchronous>, transform_indices = @transform_1, window_bounds = array<i64: 4, 37>}, {pipeline_mode = #tpu.pipeline_mode<synchronous>, transform_indices = @transform_2, window_bounds = array<i64: 4, 37>}, {pipeline_mode = #tpu.pipeline_mode<synchronous>, transform_indices = @transform_3, window_bounds = array<i64: 4, 37>}, {pipeline_mode = #tpu.pipeline_mode<synchronous>, transform_indices = @transform_4, window_bounds = array<i64: 8, 5>}, {pipeline_mode = #tpu.pipeline_mode<synchronous>, transform_indices = @transform_5, window_bounds = array<i64: 9, 1024>}, {pipeline_mode = #tpu.pipeline_mode<synchronous>, transform_indices = @transform_6, window_bounds = array<i64: 8, 512>}]} {
    %c0 = arith.constant 0 : index
    %c0_0 = arith.constant 0 : index
    %0 = vector.load %arg6[%c0, %c0_0] : memref<9x1024xf32, #tpu.memory_space<vmem>>, vector<1x1024xf32>
    %c1 = arith.constant 1 : index
    %c0_1 = arith.constant 0 : index
    %1 = vector.load %arg6[%c1, %c0_1] : memref<9x1024xf32, #tpu.memory_space<vmem>>, vector<1x1024xf32>
    %c2 = arith.constant 2 : index
    %c0_2 = arith.constant 0 : index
    %2 = vector.load %arg6[%c2, %c0_2] : memref<9x1024xf32, #tpu.memory_space<vmem>>, vector<1x1024xf32>
    %c3 = arith.constant 3 : index
    %c0_3 = arith.constant 0 : index
    %3 = vector.load %arg6[%c3, %c0_3] : memref<9x1024xf32, #tpu.memory_space<vmem>>, vector<1x1024xf32>
    %c5 = arith.constant 5 : index
    %c0_4 = arith.constant 0 : index
    %4 = vector.load %arg6[%c5, %c0_4] : memref<9x1024xf32, #tpu.memory_space<vmem>>, vector<1x1024xf32>
    %c6 = arith.constant 6 : index
    %c0_5 = arith.constant 0 : index
    %5 = vector.load %arg6[%c6, %c0_5] : memref<9x1024xf32, #tpu.memory_space<vmem>>, vector<1x1024xf32>
    %c7 = arith.constant 7 : index
    %c0_6 = arith.constant 0 : index
    %6 = vector.load %arg6[%c7, %c0_6] : memref<9x1024xf32, #tpu.memory_space<vmem>>, vector<1x1024xf32>
    %c8 = arith.constant 8 : index
    %c0_7 = arith.constant 0 : index
    %7 = vector.load %arg6[%c8, %c0_7] : memref<9x1024xf32, #tpu.memory_space<vmem>>, vector<1x1024xf32>
    %cst = arith.constant 1.000000e+00 : f32
    %8 = vector.broadcast %cst : f32 to vector<1x1024xf32>
    %c36 = arith.constant 36 : index
    %c0_8 = arith.constant 0 : index
    %9 = vector.load %arg8[%c36, %c0_8] : memref<37x1024xf32, #tpu.memory_space<vmem>>, vector<1x1024xf32>
    tpu.vector_store %arg8[%c36, %c0_8], %8 {strides = array<i32>} : memref<37x1024xf32, #tpu.memory_space<vmem>>, vector<1x1024xf32>,
    %c0_9 = arith.constant 0 : index
    %c0_10 = arith.constant 0 : index
    %10 = vector.load %arg1[%c0_9, %c0_10] : memref<4x1024xf32, #tpu.memory_space<vmem>>, vector<4x1024xf32>
    %c17_i32 = arith.constant 17 : i32
    %11 = tpu.dynamic_rotate %10 by %c17_i32 dim 1 : vector<4x1024xf32>, i32 -> vector<4x1024xf32>
    %12 = vector.broadcast %0 : vector<1x1024xf32> to vector<4x1024xf32>
    %13 = arith.mulf %11, %12 : vector<4x1024xf32>
    %c0_11 = arith.constant 0 : index
    %c0_12 = arith.constant 0 : index
    %14 = vector.load %arg8[%c0_11, %c0_12] : memref<37x1024xf32, #tpu.memory_space<vmem>>, vector<4x1024xf32>
    tpu.vector_store %arg8[%c0_11, %c0_12], %13 {strides = array<i32>} : memref<37x1024xf32, #tpu.memory_space<vmem>>, vector<4x1024xf32>,
    %c16_i32 = arith.constant 16 : i32
    %15 = tpu.dynamic_rotate %10 by %c16_i32 dim 1 : vector<4x1024xf32>, i32 -> vector<4x1024xf32>
    %16 = vector.broadcast %1 : vector<1x1024xf32> to vector<4x1024xf32>
    %17 = arith.mulf %15, %16 : vector<4x1024xf32>
    %c4 = arith.constant 4 : index
    %c0_13 = arith.constant 0 : index
    %18 = vector.load %arg8[%c4, %c0_13] : memref<37x1024xf32, #tpu.memory_space<vmem>>, vector<4x1024xf32>
    tpu.vector_store %arg8[%c4, %c0_13], %17 {strides = array<i32>} : memref<37x1024xf32, #tpu.memory_space<vmem>>, vector<4x1024xf32>,
    %c15_i32 = arith.constant 15 : i32
    %19 = tpu.dynamic_rotate %10 by %c15_i32 dim 1 : vector<4x1024xf32>, i32 -> vector<4x1024xf32>
    %20 = vector.broadcast %2 : vector<1x1024xf32> to vector<4x1024xf32>
    %21 = arith.mulf %19, %20 : vector<4x1024xf32>
    %c8_14 = arith.constant 8 : index
    %c0_15 = arith.constant 0 : index
    %22 = vector.load %arg8[%c8_14, %c0_15] : memref<37x1024xf32, #tpu.memory_space<vmem>>, vector<4x1024xf32>
    tpu.vector_store %arg8[%c8_14, %c0_15], %21 {strides = array<i32>} : memref<37x1024xf32, #tpu.memory_space<vmem>>, vector<4x1024xf32>,
    %c1_i32 = arith.constant 1 : i32
    %23 = tpu.dynamic_rotate %10 by %c1_i32 dim 1 : vector<4x1024xf32>, i32 -> vector<4x1024xf32>
    %24 = vector.broadcast %3 : vector<1x1024xf32> to vector<4x1024xf32>
    %25 = arith.mulf %23, %24 : vector<4x1024xf32>
    %c12 = arith.constant 12 : index
    %c0_16 = arith.constant 0 : index
    %26 = vector.load %arg8[%c12, %c0_16] : memref<37x1024xf32, #tpu.memory_space<vmem>>, vector<4x1024xf32>
    tpu.vector_store %arg8[%c12, %c0_16], %25 {strides = array<i32>} : memref<37x1024xf32, #tpu.memory_space<vmem>>, vector<4x1024xf32>,
    %c16 = arith.constant 16 : index
    %c0_17 = arith.constant 0 : index
    %27 = vector.load %arg8[%c16, %c0_17] : memref<37x1024xf32, #tpu.memory_space<vmem>>, vector<4x1024xf32>
    tpu.vector_store %arg8[%c16, %c0_17], %10 {strides = array<i32>} : memref<37x1024xf32, #tpu.memory_space<vmem>>, vector<4x1024xf32>,
    %c1023_i32 = arith.constant 1023 : i32
    %28 = tpu.dynamic_rotate %10 by %c1023_i32 dim 1 : vector<4x1024xf32>, i32 -> vector<4x1024xf32>
    %29 = vector.broadcast %4 : vector<1x1024xf32> to vector<4x1024xf32>
    %30 = arith.mulf %28, %29 : vector<4x1024xf32>
    %c20 = arith.constant 20 : index
    %c0_18 = arith.constant 0 : index
    %31 = vector.load %arg8[%c20, %c0_18] : memref<37x1024xf32, #tpu.memory_space<vmem>>, vector<4x1024xf32>
    tpu.vector_store %arg8[%c20, %c0_18], %30 {strides = array<i32>} : memref<37x1024xf32, #tpu.memory_space<vmem>>, vector<4x1024xf32>,
    %c1009_i32 = arith.constant 1009 : i32
    %32 = tpu.dynamic_rotate %10 by %c1009_i32 dim 1 : vector<4x1024xf32>, i32 -> vector<4x1024xf32>
    %33 = vector.broadcast %5 : vector<1x1024xf32> to vector<4x1024xf32>
    %34 = arith.mulf %32, %33 : vector<4x1024xf32>
    %c24 = arith.constant 24 : index
    %c0_19 = arith.constant 0 : index
    %35 = vector.load %arg8[%c24, %c0_19] : memref<37x1024xf32, #tpu.memory_space<vmem>>, vector<4x1024xf32>
    tpu.vector_store %arg8[%c24, %c0_19], %34 {strides = array<i32>} : memref<37x1024xf32, #tpu.memory_space<vmem>>, vector<4x1024xf32>,
    %c1008_i32 = arith.constant 1008 : i32
    %36 = tpu.dynamic_rotate %10 by %c1008_i32 dim 1 : vector<4x1024xf32>, i32 -> vector<4x1024xf32>
    %37 = vector.broadcast %6 : vector<1x1024xf32> to vector<4x1024xf32>
    %38 = arith.mulf %36, %37 : vector<4x1024xf32>
    %c28 = arith.constant 28 : index
    %c0_20 = arith.constant 0 : index
    %39 = vector.load %arg8[%c28, %c0_20] : memref<37x1024xf32, #tpu.memory_space<vmem>>, vector<4x1024xf32>
    tpu.vector_store %arg8[%c28, %c0_20], %38 {strides = array<i32>} : memref<37x1024xf32, #tpu.memory_space<vmem>>, vector<4x1024xf32>,
    %c1007_i32 = arith.constant 1007 : i32
    %40 = tpu.dynamic_rotate %10 by %c1007_i32 dim 1 : vector<4x1024xf32>, i32 -> vector<4x1024xf32>
    %41 = vector.broadcast %7 : vector<1x1024xf32> to vector<4x1024xf32>
    %42 = arith.mulf %40, %41 : vector<4x1024xf32>
    %c32 = arith.constant 32 : index
    %c0_21 = arith.constant 0 : index
    %43 = vector.load %arg8[%c32, %c0_21] : memref<37x1024xf32, #tpu.memory_space<vmem>>, vector<4x1024xf32>
    tpu.vector_store %arg8[%c32, %c0_21], %42 {strides = array<i32>} : memref<37x1024xf32, #tpu.memory_space<vmem>>, vector<4x1024xf32>,
    %c0_22 = arith.constant 0 : index
    %c0_23 = arith.constant 0 : index
    %44 = vector.load %arg2[%c0_22, %c0_23] : memref<4x37xf32, #tpu.memory_space<vmem>>, vector<4x37xf32>
    %c0_24 = arith.constant 0 : index
    %c0_25 = arith.constant 0 : index
    %45 = vector.load %arg8[%c0_24, %c0_25] : memref<37x1024xf32, #tpu.memory_space<vmem>>, vector<37x1024xf32>
    %cst_26 = arith.constant dense<0.000000e+00> : vector<4x1024xf32>
    %46 = tpu.matmul %44, %45, %cst_26 {dimension_numbers = #tpu.dot_dimension_numbers<[1], [0], [0], [1], [0, 0, 1, 1], [], []>} : vector<4x37xf32>, vector<37x1024xf32>, vector<4x1024xf32> -> vector<4x1024xf32>
    %cst_27 = arith.constant 0.000000e+00 : f32
    %47 = vector.broadcast %cst_27 : f32 to vector<4x1024xf32>
    %48 = arith.maximumf %46, %47 : vector<4x1024xf32>
    %c17_i32_28 = arith.constant 17 : i32
    %49 = tpu.dynamic_rotate %48 by %c17_i32_28 dim 1 : vector<4x1024xf32>, i32 -> vector<4x1024xf32>
    %50 = vector.broadcast %0 : vector<1x1024xf32> to vector<4x1024xf32>
    %51 = arith.mulf %49, %50 : vector<4x1024xf32>
    %c0_29 = arith.constant 0 : index
    %c0_30 = arith.constant 0 : index
    %52 = vector.load %arg8[%c0_29, %c0_30] : memref<37x1024xf32, #tpu.memory_space<vmem>>, vector<4x1024xf32>
    tpu.vector_store %arg8[%c0_29, %c0_30], %51 {strides = array<i32>} : memref<37x1024xf32, #tpu.memory_space<vmem>>, vector<4x1024xf32>,
    %c16_i32_31 = arith.constant 16 : i32
    %53 = tpu.dynamic_rotate %48 by %c16_i32_31 dim 1 : vector<4x1024xf32>, i32 -> vector<4x1024xf32>
    %54 = vector.broadcast %1 : vector<1x1024xf32> to vector<4x1024xf32>
    %55 = arith.mulf %53, %54 : vector<4x1024xf32>
    %c4_32 = arith.constant 4 : index
    %c0_33 = arith.constant 0 : index
    %56 = vector.load %arg8[%c4_32, %c0_33] : memref<37x1024xf32, #tpu.memory_space<vmem>>, vector<4x1024xf32>
    tpu.vector_store %arg8[%c4_32, %c0_33], %55 {strides = array<i32>} : memref<37x1024xf32, #tpu.memory_space<vmem>>, vector<4x1024xf32>,
    %c15_i32_34 = arith.constant 15 : i32
    %57 = tpu.dynamic_rotate %48 by %c15_i32_34 dim 1 : vector<4x1024xf32>, i32 -> vector<4x1024xf32>
    %58 = vector.broadcast %2 : vector<1x1024xf32> to vector<4x1024xf32>
    %59 = arith.mulf %57, %58 : vector<4x1024xf32>
    %c8_35 = arith.constant 8 : index
    %c0_36 = arith.constant 0 : index
    %60 = vector.load %arg8[%c8_35, %c0_36] : memref<37x1024xf32, #tpu.memory_space<vmem>>, vector<4x1024xf32>
    tpu.vector_store %arg8[%c8_35, %c0_36], %59 {strides = array<i32>} : memref<37x1024xf32, #tpu.memory_space<vmem>>, vector<4x1024xf32>,
    %c1_i32_37 = arith.constant 1 : i32
    %61 = tpu.dynamic_rotate %48 by %c1_i32_37 dim 1 : vector<4x1024xf32>, i32 -> vector<4x1024xf32>
    %62 = vector.broadcast %3 : vector<1x1024xf32> to vector<4x1024xf32>
    %63 = arith.mulf %61, %62 : vector<4x1024xf32>
    %c12_38 = arith.constant 12 : index
    %c0_39 = arith.constant 0 : index
    %64 = vector.load %arg8[%c12_38, %c0_39] : memref<37x1024xf32, #tpu.memory_space<vmem>>, vector<4x1024xf32>
    tpu.vector_store %arg8[%c12_38, %c0_39], %63 {strides = array<i32>} : memref<37x1024xf32, #tpu.memory_space<vmem>>, vector<4x1024xf32>,
    %c16_40 = arith.constant 16 : index
    %c0_41 = arith.constant 0 : index
    %65 = vector.load %arg8[%c16_40, %c0_41] : memref<37x1024xf32, #tpu.memory_space<vmem>>, vector<4x1024xf32>
    tpu.vector_store %arg8[%c16_40, %c0_41], %48 {strides = array<i32>} : memref<37x1024xf32, #tpu.memory_space<vmem>>, vector<4x1024xf32>,
    %c1023_i32_42 = arith.constant 1023 : i32
    %66 = tpu.dynamic_rotate %48 by %c1023_i32_42 dim 1 : vector<4x1024xf32>, i32 -> vector<4x1024xf32>
    %67 = vector.broadcast %4 : vector<1x1024xf32> to vector<4x1024xf32>
    %68 = arith.mulf %66, %67 : vector<4x1024xf32>
    %c20_43 = arith.constant 20 : index
    %c0_44 = arith.constant 0 : index
    %69 = vector.load %arg8[%c20_43, %c0_44] : memref<37x1024xf32, #tpu.memory_space<vmem>>, vector<4x1024xf32>
    tpu.vector_store %arg8[%c20_43, %c0_44], %68 {strides = array<i32>} : memref<37x1024xf32, #tpu.memory_space<vmem>>, vector<4x1024xf32>,
    %c1009_i32_45 = arith.constant 1009 : i32
    %70 = tpu.dynamic_rotate %48 by %c1009_i32_45 dim 1 : vector<4x1024xf32>, i32 -> vector<4x1024xf32>
    %71 = vector.broadcast %5 : vector<1x1024xf32> to vector<4x1024xf32>
    %72 = arith.mulf %70, %71 : vector<4x1024xf32>
    %c24_46 = arith.constant 24 : index
    %c0_47 = arith.constant 0 : index
    %73 = vector.load %arg8[%c24_46, %c0_47] : memref<37x1024xf32, #tpu.memory_space<vmem>>, vector<4x1024xf32>
    tpu.vector_store %arg8[%c24_46, %c0_47], %72 {strides = array<i32>} : memref<37x1024xf32, #tpu.memory_space<vmem>>, vector<4x1024xf32>,
    %c1008_i32_48 = arith.constant 1008 : i32
    %74 = tpu.dynamic_rotate %48 by %c1008_i32_48 dim 1 : vector<4x1024xf32>, i32 -> vector<4x1024xf32>
    %75 = vector.broadcast %6 : vector<1x1024xf32> to vector<4x1024xf32>
    %76 = arith.mulf %74, %75 : vector<4x1024xf32>
    %c28_49 = arith.constant 28 : index
    %c0_50 = arith.constant 0 : index
    %77 = vector.load %arg8[%c28_49, %c0_50] : memref<37x1024xf32, #tpu.memory_space<vmem>>, vector<4x1024xf32>
    tpu.vector_store %arg8[%c28_49, %c0_50], %76 {strides = array<i32>} : memref<37x1024xf32, #tpu.memory_space<vmem>>, vector<4x1024xf32>,
    %c1007_i32_51 = arith.constant 1007 : i32
    %78 = tpu.dynamic_rotate %48 by %c1007_i32_51 dim 1 : vector<4x1024xf32>, i32 -> vector<4x1024xf32>
    %79 = vector.broadcast %7 : vector<1x1024xf32> to vector<4x1024xf32>
    %80 = arith.mulf %78, %79 : vector<4x1024xf32>
    %c32_52 = arith.constant 32 : index
    %c0_53 = arith.constant 0 : index
    %81 = vector.load %arg8[%c32_52, %c0_53] : memref<37x1024xf32, #tpu.memory_space<vmem>>, vector<4x1024xf32>
    tpu.vector_store %arg8[%c32_52, %c0_53], %80 {strides = array<i32>} : memref<37x1024xf32, #tpu.memory_space<vmem>>, vector<4x1024xf32>,
    %c0_54 = arith.constant 0 : index
    %c0_55 = arith.constant 0 : index
    %82 = vector.load %arg3[%c0_54, %c0_55] : memref<4x37xf32, #tpu.memory_space<vmem>>, vector<4x37xf32>
    %c0_56 = arith.constant 0 : index
    %c0_57 = arith.constant 0 : index
    %83 = vector.load %arg8[%c0_56, %c0_57] : memref<37x1024xf32, #tpu.memory_space<vmem>>, vector<37x1024xf32>
    %cst_58 = arith.constant dense<0.000000e+00> : vector<4x1024xf32>
    %84 = tpu.matmul %82, %83, %cst_58 {dimension_numbers = #tpu.dot_dimension_numbers<[1], [0], [0], [1], [0, 0, 1, 1], [], []>} : vector<4x37xf32>, vector<37x1024xf32>, vector<4x1024xf32> -> vector<4x1024xf32>
    %cst_59 = arith.constant 0.000000e+00 : f32
    %85 = vector.broadcast %cst_59 : f32 to vector<4x1024xf32>
    %86 = arith.maximumf %84, %85 : vector<4x1024xf32>
    %87 = arith.addf %86, %48 : vector<4x1024xf32>
    %c17_i32_60 = arith.constant 17 : i32
    %88 = tpu.dynamic_rotate %87 by %c17_i32_60 dim 1 : vector<4x1024xf32>, i32 -> vector<4x1024xf32>
    %89 = vector.broadcast %0 : vector<1x1024xf32> to vector<4x1024xf32>
    %90 = arith.mulf %88, %89 : vector<4x1024xf32>
    %c0_61 = arith.constant 0 : index
    %c0_62 = arith.constant 0 : index
    %91 = vector.load %arg8[%c0_61, %c0_62] : memref<37x1024xf32, #tpu.memory_space<vmem>>, vector<4x1024xf32>
    tpu.vector_store %arg8[%c0_61, %c0_62], %90 {strides = array<i32>} : memref<37x1024xf32, #tpu.memory_space<vmem>>, vector<4x1024xf32>,
    %c16_i32_63 = arith.constant 16 : i32
    %92 = tpu.dynamic_rotate %87 by %c16_i32_63 dim 1 : vector<4x1024xf32>, i32 -> vector<4x1024xf32>
    %93 = vector.broadcast %1 : vector<1x1024xf32> to vector<4x1024xf32>
    %94 = arith.mulf %92, %93 : vector<4x1024xf32>
    %c4_64 = arith.constant 4 : index
    %c0_65 = arith.constant 0 : index
    %95 = vector.load %arg8[%c4_64, %c0_65] : memref<37x1024xf32, #tpu.memory_space<vmem>>, vector<4x1024xf32>
    tpu.vector_store %arg8[%c4_64, %c0_65], %94 {strides = array<i32>} : memref<37x1024xf32, #tpu.memory_space<vmem>>, vector<4x1024xf32>,
    %c15_i32_66 = arith.constant 15 : i32
    %96 = tpu.dynamic_rotate %87 by %c15_i32_66 dim 1 : vector<4x1024xf32>, i32 -> vector<4x1024xf32>
    %97 = vector.broadcast %2 : vector<1x1024xf32> to vector<4x1024xf32>
    %98 = arith.mulf %96, %97 : vector<4x1024xf32>
    %c8_67 = arith.constant 8 : index
    %c0_68 = arith.constant 0 : index
    %99 = vector.load %arg8[%c8_67, %c0_68] : memref<37x1024xf32, #tpu.memory_space<vmem>>, vector<4x1024xf32>
    tpu.vector_store %arg8[%c8_67, %c0_68], %98 {strides = array<i32>} : memref<37x1024xf32, #tpu.memory_space<vmem>>, vector<4x1024xf32>,
    %c1_i32_69 = arith.constant 1 : i32
    %100 = tpu.dynamic_rotate %87 by %c1_i32_69 dim 1 : vector<4x1024xf32>, i32 -> vector<4x1024xf32>
    %101 = vector.broadcast %3 : vector<1x1024xf32> to vector<4x1024xf32>
    %102 = arith.mulf %100, %101 : vector<4x1024xf32>
    %c12_70 = arith.constant 12 : index
    %c0_71 = arith.constant 0 : index
    %103 = vector.load %arg8[%c12_70, %c0_71] : memref<37x1024xf32, #tpu.memory_space<vmem>>, vector<4x1024xf32>
    tpu.vector_store %arg8[%c12_70, %c0_71], %102 {strides = array<i32>} : memref<37x1024xf32, #tpu.memory_space<vmem>>, vector<4x1024xf32>,
    %c16_72 = arith.constant 16 : index
    %c0_73 = arith.constant 0 : index
    %104 = vector.load %arg8[%c16_72, %c0_73] : memref<37x1024xf32, #tpu.memory_space<vmem>>, vector<4x1024xf32>
    tpu.vector_store %arg8[%c16_72, %c0_73], %87 {strides = array<i32>} : memref<37x1024xf32, #tpu.memory_space<vmem>>, vector<4x1024xf32>,
    %c1023_i32_74 = arith.constant 1023 : i32
    %105 = tpu.dynamic_rotate %87 by %c1023_i32_74 dim 1 : vector<4x1024xf32>, i32 -> vector<4x1024xf32>
    %106 = vector.broadcast %4 : vector<1x1024xf32> to vector<4x1024xf32>
    %107 = arith.mulf %105, %106 : vector<4x1024xf32>
    %c20_75 = arith.constant 20 : index
    %c0_76 = arith.constant 0 : index
    %108 = vector.load %arg8[%c20_75, %c0_76] : memref<37x1024xf32, #tpu.memory_space<vmem>>, vector<4x1024xf32>
    tpu.vector_store %arg8[%c20_75, %c0_76], %107 {strides = array<i32>} : memref<37x1024xf32, #tpu.memory_space<vmem>>, vector<4x1024xf32>,
    %c1009_i32_77 = arith.constant 1009 : i32
    %109 = tpu.dynamic_rotate %87 by %c1009_i32_77 dim 1 : vector<4x1024xf32>, i32 -> vector<4x1024xf32>
    %110 = vector.broadcast %5 : vector<1x1024xf32> to vector<4x1024xf32>
    %111 = arith.mulf %109, %110 : vector<4x1024xf32>
    %c24_78 = arith.constant 24 : index
    %c0_79 = arith.constant 0 : index
    %112 = vector.load %arg8[%c24_78, %c0_79] : memref<37x1024xf32, #tpu.memory_space<vmem>>, vector<4x1024xf32>
    tpu.vector_store %arg8[%c24_78, %c0_79], %111 {strides = array<i32>} : memref<37x1024xf32, #tpu.memory_space<vmem>>, vector<4x1024xf32>,
    %c1008_i32_80 = arith.constant 1008 : i32
    %113 = tpu.dynamic_rotate %87 by %c1008_i32_80 dim 1 : vector<4x1024xf32>, i32 -> vector<4x1024xf32>
    %114 = vector.broadcast %6 : vector<1x1024xf32> to vector<4x1024xf32>
    %115 = arith.mulf %113, %114 : vector<4x1024xf32>
    %c28_81 = arith.constant 28 : index
    %c0_82 = arith.constant 0 : index
    %116 = vector.load %arg8[%c28_81, %c0_82] : memref<37x1024xf32, #tpu.memory_space<vmem>>, vector<4x1024xf32>
    tpu.vector_store %arg8[%c28_81, %c0_82], %115 {strides = array<i32>} : memref<37x1024xf32, #tpu.memory_space<vmem>>, vector<4x1024xf32>,
    %c1007_i32_83 = arith.constant 1007 : i32
    %117 = tpu.dynamic_rotate %87 by %c1007_i32_83 dim 1 : vector<4x1024xf32>, i32 -> vector<4x1024xf32>
    %118 = vector.broadcast %7 : vector<1x1024xf32> to vector<4x1024xf32>
    %119 = arith.mulf %117, %118 : vector<4x1024xf32>
    %c32_84 = arith.constant 32 : index
    %c0_85 = arith.constant 0 : index
    %120 = vector.load %arg8[%c32_84, %c0_85] : memref<37x1024xf32, #tpu.memory_space<vmem>>, vector<4x1024xf32>
    tpu.vector_store %arg8[%c32_84, %c0_85], %119 {strides = array<i32>} : memref<37x1024xf32, #tpu.memory_space<vmem>>, vector<4x1024xf32>,
    %c0_86 = arith.constant 0 : index
    %c0_87 = arith.constant 0 : index
    %121 = vector.load %arg4[%c0_86, %c0_87] : memref<4x37xf32, #tpu.memory_space<vmem>>, vector<4x37xf32>
    %c0_88 = arith.constant 0 : index
    %c0_89 = arith.constant 0 : index
    %122 = vector.load %arg8[%c0_88, %c0_89] : memref<37x1024xf32, #tpu.memory_space<vmem>>, vector<37x1024xf32>
    %cst_90 = arith.constant dense<0.000000e+00> : vector<4x1024xf32>
    %123 = tpu.matmul %121, %122, %cst_90 {dimension_numbers = #tpu.dot_dimension_numbers<[1], [0], [0], [1], [0, 0, 1, 1], [], []>} : vector<4x37xf32>, vector<37x1024xf32>, vector<4x1024xf32> -> vector<4x1024xf32>
    %cst_91 = arith.constant 0.000000e+00 : f32
    %124 = vector.broadcast %cst_91 : f32 to vector<4x1024xf32>
    %125 = arith.maximumf %123, %124 : vector<4x1024xf32>
    %126 = arith.addf %48, %86 : vector<4x1024xf32>
    %127 = arith.addf %126, %125 : vector<4x1024xf32>
    %128 = vector.extract_strided_slice %127 {offsets = [0, 0], sizes = [4, 512], strides = [1, 1]} : vector<4x1024xf32> to vector<4x512xf32>
    %129 = vector.extract_strided_slice %127 {offsets = [0, 512], sizes = [4, 512], strides = [1, 1]} : vector<4x1024xf32> to vector<4x512xf32>
    %130 = arith.addf %128, %129 : vector<4x512xf32>
    %c0_92 = arith.constant 0 : index
    %c0_93 = arith.constant 0 : index
    %131 = vector.load %arg5[%c0_92, %c0_93] : memref<8x5xf32, #tpu.memory_space<vmem>>, vector<8x4xf32>
    %cst_94 = arith.constant dense<0.000000e+00> : vector<8x512xf32>
    %132 = tpu.matmul %131, %130, %cst_94 {dimension_numbers = #tpu.dot_dimension_numbers<[1], [0], [0], [1], [0, 0, 1, 1], [], []>} : vector<8x4xf32>, vector<4x512xf32>, vector<8x512xf32> -> vector<8x512xf32>
    %c0_95 = arith.constant 0 : index
    %c4_96 = arith.constant 4 : index
    %133 = vector.load %arg5[%c0_95, %c4_96] : memref<8x5xf32, #tpu.memory_space<vmem>>, vector<8x1xf32>
    %134 = vector.broadcast %133 : vector<8x1xf32> to vector<8x512xf32>
    %135 = arith.addf %132, %134 : vector<8x512xf32>
    %cst_97 = arith.constant 0.000000e+00 : f32
    %136 = vector.broadcast %cst_97 : f32 to vector<8x512xf32>
    %137 = arith.maximumf %135, %136 : vector<8x512xf32>
    %c0_98 = arith.constant 0 : index
    %c0_99 = arith.constant 0 : index
    %138 = vector.load %arg7[%c0_98, %c0_99] : memref<8x512xf32, #tpu.memory_space<vmem>>, vector<8x512xf32>
    tpu.vector_store %arg7[%c0_98, %c0_99], %137 {strides = array<i32>} : memref<8x512xf32, #tpu.memory_space<vmem>>, vector<8x512xf32>,
    return
  }
  func.func @transform_0(%arg0: i32) -> (i32, i32) {
    %c0_i32 = arith.constant 0 : i32
    %c0_i32_0 = arith.constant 0 : i32
    %c0_i32_1 = arith.constant 0 : i32
    return %c0_i32, %c0_i32_0 : i32, i32
  }
  func.func @transform_1(%arg0: i32) -> (i32, i32) {
    %c0_i32 = arith.constant 0 : i32
    %c0_i32_0 = arith.constant 0 : i32
    %c0_i32_1 = arith.constant 0 : i32
    return %c0_i32, %c0_i32_0 : i32, i32
  }
  func.func @transform_2(%arg0: i32) -> (i32, i32) {
    %c0_i32 = arith.constant 0 : i32
    %c0_i32_0 = arith.constant 0 : i32
    %c0_i32_1 = arith.constant 0 : i32
    return %c0_i32, %c0_i32_0 : i32, i32
  }
  func.func @transform_3(%arg0: i32) -> (i32, i32) {
    %c0_i32 = arith.constant 0 : i32
    %c0_i32_0 = arith.constant 0 : i32
    %c0_i32_1 = arith.constant 0 : i32
    return %c0_i32, %c0_i32_0 : i32, i32
  }
  func.func @transform_4(%arg0: i32) -> (i32, i32) {
    %c0_i32 = arith.constant 0 : i32
    %c0_i32_0 = arith.constant 0 : i32
    %c0_i32_1 = arith.constant 0 : i32
    return %c0_i32, %c0_i32_0 : i32, i32
  }
  func.func @transform_5(%arg0: i32) -> (i32, i32) {
    %c0_i32 = arith.constant 0 : i32
    %c0_i32_0 = arith.constant 0 : i32
    %c0_i32_1 = arith.constant 0 : i32
    return %c0_i32, %c0_i32_0 : i32, i32
  }
  func.func @transform_6(%arg0: i32) -> (i32, i32) {
    %c0_i32 = arith.constant 0 : i32
    %c0_i32_0 = arith.constant 0 : i32
    %c0_i32_1 = arith.constant 0 : i32
    return %c0_i32, %c0_i32_0 : i32, i32
  }
}

</mosaic_0001>

<llo_original>
// kernel: densecat_cat_add_forward.1
$region0: #{densecat_cat_add_forward.1}
  #allocation0 [shape = 'u32[]', space=smem, size = 0x4, offset = 0x4, fixed_abs, tag = 'smem constant byte address 0x4 - core index']
  #allocation1 [shape = 'u32[144,128]{1,0:T(1,128)}', space=vmem, size = 0x12000, scoped, tag = 'internal scratch']
  #allocation2 [shape = 'f32[37,1024]{1,0:T(8,128)}', space=vmem, size = 0x28000, scoped, tag = 'scratch operand']
  %s0 = inlined_call_operand.vmem [shape: f32[4,1024], index: 0, kind: input, shape index: {}]
  %s1 = inlined_call_operand.vmem [shape: f32[4,37], index: 1, kind: input, shape index: {}]
  %s2 = inlined_call_operand.vmem [shape: f32[4,37], index: 2, kind: input, shape index: {}]
  %s3 = inlined_call_operand.vmem [shape: f32[4,37], index: 3, kind: input, shape index: {}]
  %s4 = inlined_call_operand.vmem [shape: f32[8,5], index: 4, kind: input, shape index: {}]
  %s5 = inlined_call_operand.vmem [shape: f32[9,1024], index: 5, kind: input, shape index: {}]
  %s6 = inlined_call_operand.vmem [shape: f32[8,512], index: 6, kind: output, shape index: {}]
  %s7 = sld [smem:[#allocation0]]
  $region34: #{densecat_cat_add_forward.1} parent=0
    _
  %s9 = ssub.s32 1, %s7
  %s10 = scalar_select 0, %s9, %s7
  // Predicated region
  $region2: #{densecat_cat_add_forward.1} parent=0 // pred_check
    _
  $region3: #{densecat_cat_add_forward.1} parent=0 // pred_check_branch
    %12 = sbr.rel (0) target = $region5
  $region4: #{densecat_cat_add_forward.1} parent=0 // pred_region
    _
  $region5: #{densecat_cat_add_forward.1} parent=0 // pred_fallthru
    _
  // Predicated region
  $region6: #{densecat_cat_add_forward.1} parent=0 // pred_check
    _
  $region7: #{densecat_cat_add_forward.1} parent=0 // pred_check_branch
    %14 = sbr.rel (0) target = $region9
  $region8: #{densecat_cat_add_forward.1} parent=0 // pred_region
    _
  $region9: #{densecat_cat_add_forward.1} parent=0 // pred_fallthru
    _
  // Predicated region
  $region10: #{densecat_cat_add_forward.1} parent=0 // pred_check
    _
  $region11: #{densecat_cat_add_forward.1} parent=0 // pred_check_branch
    %16 = sbr.rel (0) target = $region13
  $region12: #{densecat_cat_add_forward.1} parent=0 // pred_region
    _
  $region13: #{densecat_cat_add_forward.1} parent=0 // pred_fallthru
    _
  // Predicated region
  $region14: #{densecat_cat_add_forward.1} parent=0 // pred_check
    _
  $region15: #{densecat_cat_add_forward.1} parent=0 // pred_check_branch
    %18 = sbr.rel (0) target = $region17
  $region16: #{densecat_cat_add_forward.1} parent=0 // pred_region
    _
  $region17: #{densecat_cat_add_forward.1} parent=0 // pred_fallthru
    _
  // Predicated region
  $region18: #{densecat_cat_add_forward.1} parent=0 // pred_check
    _
  $region19: #{densecat_cat_add_forward.1} parent=0 // pred_check_branch
    %20 = sbr.rel (0) target = $region21
  $region20: #{densecat_cat_add_forward.1} parent=0 // pred_region
    _
  $region21: #{densecat_cat_add_forward.1} parent=0 // pred_fallthru
    _
  // Predicated region
  $region22: #{densecat_cat_add_forward.1} parent=0 // pred_check
    _
  $region23: #{densecat_cat_add_forward.1} parent=0 // pred_check_branch
    %22 = sbr.rel (0) target = $region25
  $region24: #{densecat_cat_add_forward.1} parent=0 // pred_region
    _
  $region25: #{densecat_cat_add_forward.1} parent=0 // pred_fallthru
    _
  %v23 = vld [vmem:[%s5] ss:$8 sm:$0xf]
  %v24 = vld [vmem:[%s5] ss:$8 sm:$0xf0]
  %v25 = vor.u32 %v23, %v24
  %s26 = scalar_lea.vmem %s5, 1
  %v27 = vld [vmem:[%s26] ss:$8 sm:$0xf]
  %v28 = vld [vmem:[%s26] ss:$8 sm:$0xf0]
  %v29 = vor.u32 %v27, %v28
  %s30 = scalar_lea.vmem %s5, 2
  %v31 = vld [vmem:[%s30] ss:$8 sm:$0xf]
  %v32 = vld [vmem:[%s30] ss:$8 sm:$0xf0]
  %v33 = vor.u32 %v31, %v32
  %s34 = scalar_lea.vmem %s5, 3
  %v35 = vld [vmem:[%s34] ss:$8 sm:$0xf]
  %v36 = vld [vmem:[%s34] ss:$8 sm:$0xf0]
  %v37 = vor.u32 %v35, %v36
  %s38 = scalar_lea.vmem %s5, 5
  %v39 = vld [vmem:[%s38] ss:$8 sm:$0xf]
  %v40 = vld [vmem:[%s38] ss:$8 sm:$0xf0]
  %v41 = vor.u32 %v39, %v40
  %s42 = scalar_lea.vmem %s5, 6
  %v43 = vld [vmem:[%s42] ss:$8 sm:$0xf]
  %v44 = vld [vmem:[%s42] ss:$8 sm:$0xf0]
  %v45 = vor.u32 %v43, %v44
  %s46 = scalar_lea.vmem %s5, 7
  %v47 = vld [vmem:[%s46] ss:$8 sm:$0xf]
  %v48 = vld [vmem:[%s46] ss:$8 sm:$0xf0]
  %v49 = vor.u32 %v47, %v48
  %s50 = scalar_lea.vmem %s5, 64
  %v51 = vld [vmem:[%s50] ss:$8 sm:$0xf]
  %v52 = vld [vmem:[%s50] ss:$8 sm:$0xf0]
  %v53 = vor.u32 %v51, %v52
  %s54 = scalar_lea.vmem [#allocation2], 260
  %55 = vst [vmem:[%s54] ss:$8 sm:$0xf] 1.0
  %56 = vst [vmem:[%s54] ss:$8 sm:$0xf0] 1.0
  %v57 = vld [vmem:[%s0] sm:$0xff]
  %v58 = vld [vmem:[%s0 + $0x8] sm:$0xff]
  %v59 = vld [vmem:[%s0 + $0x10] sm:$0xff]
  %v60 = vld [vmem:[%s0 + $0x18] sm:$0xff]
  %v65 = vcombine.high %v57, %v57
  %v66 = vcombine.high %v58, %v58
  %v67 = vcombine.high %v59, %v59
  %v68 = vcombine.high %v60, %v60
  %73 = vrot.lane.b32.xlu0 %v57, 17
  %v74 = vpop.permute.xlu0 %73
  %75 = vrot.lane.b32.xlu0 %v65, 17
  %v76 = vpop.permute.xlu0 %75
  %77 = vrot.lane.b32.xlu0 %v58, 17
  %v78 = vpop.permute.xlu0 %77
  %79 = vrot.lane.b32.xlu0 %v66, 17
  %v80 = vpop.permute.xlu0 %79
  %81 = vrot.lane.b32.xlu0 %v59, 17
  %v82 = vpop.permute.xlu0 %81
  %83 = vrot.lane.b32.xlu0 %v67, 17
  %v84 = vpop.permute.xlu0 %83
  %85 = vrot.lane.b32.xlu0 %v60, 17
  %v86 = vpop.permute.xlu0 %85
  %87 = vrot.lane.b32.xlu0 %v68, 17
  %v88 = vpop.permute.xlu0 %87
  %v89 = vlaneseq
  %v90 = vand.u32 %v89, 127
  %vm91 = vcmp.lt.s32.totalorder %v90, 17
  %v92 = vsel %vm91, %v86, %v88
  %v93 = vsel %vm91, %v84, %v86
  %v94 = vsel %vm91, %v82, %v84
  %v95 = vsel %vm91, %v80, %v82
  %v96 = vsel %vm91, %v78, %v80
  %v97 = vsel %vm91, %v76, %v78
  %v98 = vsel %vm91, %v74, %v76
  %v99 = vsel %vm91, %v88, %v74
  %v101 = vlaneseq
  %v102 = vshrl.u32 %v101, 7
  %v103 = vsub.s32 0, %v102
  %v104 = vrot.slane %v25, %v103
  %v105 = vlaneseq
  %v106 = vshrl.u32 %v105, 7
  %v107 = vsub.s32 1, %v106
  %v108 = vrot.slane %v25, %v107
  %v109 = vlaneseq
  %v110 = vshrl.u32 %v109, 7
  %v111 = vsub.s32 2, %v110
  %v112 = vrot.slane %v25, %v111
  %v113 = vlaneseq
  %v114 = vshrl.u32 %v113, 7
  %v115 = vsub.s32 3, %v114
  %v116 = vrot.slane %v25, %v115
  %v117 = vlaneseq
  %v118 = vshrl.u32 %v117, 7
  %v119 = vsub.s32 4, %v118
  %v120 = vrot.slane %v25, %v119
  %v121 = vlaneseq
  %v122 = vshrl.u32 %v121, 7
  %v123 = vsub.s32 5, %v122
  %v124 = vrot.slane %v25, %v123
  %v125 = vlaneseq
  %v126 = vshrl.u32 %v125, 7
  %v127 = vsub.s32 6, %v126
  %v128 = vrot.slane %v25, %v127
  %v129 = vlaneseq
  %v130 = vshrl.u32 %v129, 7
  %v131 = vsub.s32 7, %v130
  %v132 = vrot.slane %v25, %v131
  %v141 = vmul.f32 %v99, %v104
  %v142 = vmul.f32 %v98, %v108
  %v143 = vmul.f32 %v97, %v112
  %v144 = vmul.f32 %v96, %v116
  %v145 = vmul.f32 %v95, %v120
  %v146 = vmul.f32 %v94, %v124
  %v147 = vmul.f32 %v93, %v128
  %v148 = vmul.f32 %v92, %v132
  %149 = vst [vmem:[#allocation2] sm:$0xf] %v141
  %150 = vst [vmem:[#allocation2 + $0x8] sm:$0xf] %v142
  %151 = vst [vmem:[#allocation2 + $0x10] sm:$0xf] %v143
  %152 = vst [vmem:[#allocation2 + $0x18] sm:$0xf] %v144
  %153 = vst [vmem:[#allocation2 + $0x20] sm:$0xf] %v145
  %154 = vst [vmem:[#allocation2 + $0x28] sm:$0xf] %v146
  %155 = vst [vmem:[#allocation2 + $0x30] sm:$0xf] %v147
  %156 = vst [vmem:[#allocation2 + $0x38] sm:$0xf] %v148
  %157 = vrot.lane.b32.xlu0 %v57, 16
  %v158 = vpop.permute.xlu0 %157
  %159 = vrot.lane.b32.xlu0 %v65, 16
  %v160 = vpop.permute.xlu0 %159
  %161 = vrot.lane.b32.xlu0 %v58, 16
  %v162 = vpop.permute.xlu0 %161
  %163 = vrot.lane.b32.xlu0 %v66, 16
  %v164 = vpop.permute.xlu0 %163
  %165 = vrot.lane.b32.xlu0 %v59, 16
  %v166 = vpop.permute.xlu0 %165
  %167 = vrot.lane.b32.xlu0 %v67, 16
  %v168 = vpop.permute.xlu0 %167
  %169 = vrot.lane.b32.xlu0 %v60, 16
  %v170 = vpop.permute.xlu0 %169
  %171 = vrot.lane.b32.xlu0 %v68, 16
  %v172 = vpop.permute.xlu0 %171
  %vm173 = vcmp.lt.s32.totalorder %v90, 16
  %v174 = vsel %vm173, %v170, %v172
  %v175 = vsel %vm173, %v168, %v170
  %v176 = vsel %vm173, %v166, %v168
  %v177 = vsel %vm173, %v164, %v166
  %v178 = vsel %vm173, %v162, %v164
  %v179 = vsel %vm173, %v160, %v162
  %v180 = vsel %vm173, %v158, %v160
  %v181 = vsel %vm173, %v172, %v158
  %v183 = vlaneseq
  %v184 = vshrl.u32 %v183, 7
  %v185 = vsub.s32 0, %v184
  %v186 = vrot.slane %v29, %v185
  %v187 = vlaneseq
  %v188 = vshrl.u32 %v187, 7
  %v189 = vsub.s32 1, %v188
  %v190 = vrot.slane %v29, %v189
  %v191 = vlaneseq
  %v192 = vshrl.u32 %v191, 7
  %v193 = vsub.s32 2, %v192
  %v194 = vrot.slane %v29, %v193
  %v195 = vlaneseq
  %v196 = vshrl.u32 %v195, 7
  %v197 = vsub.s32 3, %v196
  %v198 = vrot.slane %v29, %v197
  %v199 = vlaneseq
  %v200 = vshrl.u32 %v199, 7
  %v201 = vsub.s32 4, %v200
  %v202 = vrot.slane %v29, %v201
  %v203 = vlaneseq
  %v204 = vshrl.u32 %v203, 7
  %v205 = vsub.s32 5, %v204
  %v206 = vrot.slane %v29, %v205
  %v207 = vlaneseq
  %v208 = vshrl.u32 %v207, 7
  %v209 = vsub.s32 6, %v208
  %v210 = vrot.slane %v29, %v209
  %v211 = vlaneseq
  %v212 = vshrl.u32 %v211, 7
  %v213 = vsub.s32 7, %v212
  %v214 = vrot.slane %v29, %v213
  %v223 = vmul.f32 %v181, %v186
  %v224 = vmul.f32 %v180, %v190
  %v225 = vmul.f32 %v179, %v194
  %v226 = vmul.f32 %v178, %v198
  %v227 = vmul.f32 %v177, %v202
  %v228 = vmul.f32 %v176, %v206
  %v229 = vmul.f32 %v175, %v210
  %v230 = vmul.f32 %v174, %v214
  %v239 = vrot.slane %v223, 4
  %v240 = vrot.slane %v224, 4
  %v241 = vrot.slane %v225, 4
  %v242 = vrot.slane %v226, 4
  %v243 = vrot.slane %v227, 4
  %v244 = vrot.slane %v228, 4
  %v245 = vrot.slane %v229, 4
  %v246 = vrot.slane %v230, 4
  %255 = vst [vmem:[#allocation2] sm:$0xf0] %v239
  %256 = vst [vmem:[#allocation2 + $0x8] sm:$0xf0] %v240
  %257 = vst [vmem:[#allocation2 + $0x10] sm:$0xf0] %v241
  %258 = vst [vmem:[#allocation2 + $0x18] sm:$0xf0] %v242
  %259 = vst [vmem:[#allocation2 + $0x20] sm:$0xf0] %v243
  %260 = vst [vmem:[#allocation2 + $0x28] sm:$0xf0] %v244
  %261 = vst [vmem:[#allocation2 + $0x30] sm:$0xf0] %v245
  %262 = vst [vmem:[#allocation2 + $0x38] sm:$0xf0] %v246
  %263 = vrot.lane.b32.xlu0 %v57, 15
  %v264 = vpop.permute.xlu0 %263
  %265 = vrot.lane.b32.xlu0 %v65, 15
  %v266 = vpop.permute.xlu0 %265
  %267 = vrot.lane.b32.xlu0 %v58, 15
  %v268 = vpop.permute.xlu0 %267
  %269 = vrot.lane.b32.xlu0 %v66, 15
  %v270 = vpop.permute.xlu0 %269
  %271 = vrot.lane.b32.xlu0 %v59, 15
  %v272 = vpop.permute.xlu0 %271
  %273 = vrot.lane.b32.xlu0 %v67, 15
  %v274 = vpop.permute.xlu0 %273
  %275 = vrot.lane.b32.xlu0 %v60, 15
  %v276 = vpop.permute.xlu0 %275
  %277 = vrot.lane.b32.xlu0 %v68, 15
  %v278 = vpop.permute.xlu0 %277
  %vm279 = vcmp.lt.s32.totalorder %v90, 15
  %v280 = vsel %vm279, %v276, %v278
  %v281 = vsel %vm279, %v274, %v276
  %v282 = vsel %vm279, %v272, %v274
  %v283 = vsel %vm279, %v270, %v272
  %v284 = vsel %vm279, %v268, %v270
  %v285 = vsel %vm279, %v266, %v268
  %v286 = vsel %vm279, %v264, %v266
  %v287 = vsel %vm279, %v278, %v264
  %v289 = vlaneseq
  %v290 = vshrl.u32 %v289, 7
  %v291 = vsub.s32 0, %v290
  %v292 = vrot.slane %v33, %v291
  %v293 = vlaneseq
  %v294 = vshrl.u32 %v293, 7
  %v295 = vsub.s32 1, %v294
  %v296 = vrot.slane %v33, %v295
  %v297 = vlaneseq
  %v298 = vshrl.u32 %v297, 7
  %v299 = vsub.s32 2, %v298
  %v300 = vrot.slane %v33, %v299
  %v301 = vlaneseq
  %v302 = vshrl.u32 %v301, 7
  %v303 = vsub.s32 3, %v302
  %v304 = vrot.slane %v33, %v303
  %v305 = vlaneseq
  %v306 = vshrl.u32 %v305, 7
  %v307 = vsub.s32 4, %v306
  %v308 = vrot.slane %v33, %v307
  %v309 = vlaneseq
  %v310 = vshrl.u32 %v309, 7
  %v311 = vsub.s32 5, %v310
  %v312 = vrot.slane %v33, %v311
  %v313 = vlaneseq
  %v314 = vshrl.u32 %v313, 7
  %v315 = vsub.s32 6, %v314
  %v316 = vrot.slane %v33, %v315
  %v317 = vlaneseq
  %v318 = vshrl.u32 %v317, 7
  %v319 = vsub.s32 7, %v318
  %v320 = vrot.slane %v33, %v319
  %v329 = vmul.f32 %v287, %v292
  %v330 = vmul.f32 %v286, %v296
  %v331 = vmul.f32 %v285, %v300
  %v332 = vmul.f32 %v284, %v304
  %v333 = vmul.f32 %v283, %v308
  %v334 = vmul.f32 %v282, %v312
  %v335 = vmul.f32 %v281, %v316
  %v336 = vmul.f32 %v280, %v320
  %337 = vst [vmem:[#allocation2 + $0x40] sm:$0xf] %v329
  %338 = vst [vmem:[#allocation2 + $0x48] sm:$0xf] %v330
  %339 = vst [vmem:[#allocation2 + $0x50] sm:$0xf] %v331
  %340 = vst [vmem:[#allocation2 + $0x58] sm:$0xf] %v332
  %341 = vst [vmem:[#allocation2 + $0x60] sm:$0xf] %v333
  %342 = vst [vmem:[#allocation2 + $0x68] sm:$0xf] %v334
  %343 = vst [vmem:[#allocation2 + $0x70] sm:$0xf] %v335
  %344 = vst [vmem:[#allocation2 + $0x78] sm:$0xf] %v336
  %345 = vrot.lane.b32.xlu0 %v57, 1
  %v346 = vpop.permute.xlu0 %345
  %347 = vrot.lane.b32.xlu0 %v65, 1
  %v348 = vpop.permute.xlu0 %347
  %349 = vrot.lane.b32.xlu0 %v58, 1
  %v350 = vpop.permute.xlu0 %349
  %351 = vrot.lane.b32.xlu0 %v66, 1
  %v352 = vpop.permute.xlu0 %351
  %353 = vrot.lane.b32.xlu0 %v59, 1
  %v354 = vpop.permute.xlu0 %353
  %355 = vrot.lane.b32.xlu0 %v67, 1
  %v356 = vpop.permute.xlu0 %355
  %357 = vrot.lane.b32.xlu0 %v60, 1
  %v358 = vpop.permute.xlu0 %357
  %359 = vrot.lane.b32.xlu0 %v68, 1
  %v360 = vpop.permute.xlu0 %359
  %vm361 = vcmp.lt.s32.totalorder %v90, 1
  %v362 = vsel %vm361, %v358, %v360
  %v363 = vsel %vm361, %v356, %v358
  %v364 = vsel %vm361, %v354, %v356
  %v365 = vsel %vm361, %v352, %v354
  %v366 = vsel %vm361, %v350, %v352
  %v367 = vsel %vm361, %v348, %v350
  %v368 = vsel %vm361, %v346, %v348
  %v369 = vsel %vm361, %v360, %v346
  %v371 = vlaneseq
  %v372 = vshrl.u32 %v371, 7
  %v373 = vsub.s32 0, %v372
  %v374 = vrot.slane %v37, %v373
  %v375 = vlaneseq
  %v376 = vshrl.u32 %v375, 7
  %v377 = vsub.s32 1, %v376
  %v378 = vrot.slane %v37, %v377
  %v379 = vlaneseq
  %v380 = vshrl.u32 %v379, 7
  %v381 = vsub.s32 2, %v380
  %v382 = vrot.slane %v37, %v381
  %v383 = vlaneseq
  %v384 = vshrl.u32 %v383, 7
  %v385 = vsub.s32 3, %v384
  %v386 = vrot.slane %v37, %v385
  %v387 = vlaneseq
  %v388 = vshrl.u32 %v387, 7
  %v389 = vsub.s32 4, %v388
  %v390 = vrot.slane %v37, %v389
  %v391 = vlaneseq
  %v392 = vshrl.u32 %v391, 7
  %v393 = vsub.s32 5, %v392
  %v394 = vrot.slane %v37, %v393
  %v395 = vlaneseq
  %v396 = vshrl.u32 %v395, 7
  %v397 = vsub.s32 6, %v396
  %v398 = vrot.slane %v37, %v397
  %v399 = vlaneseq
  %v400 = vshrl.u32 %v399, 7
  %v401 = vsub.s32 7, %v400
  %v402 = vrot.slane %v37, %v401
  %v411 = vmul.f32 %v369, %v374
  %v412 = vmul.f32 %v368, %v378
  %v413 = vmul.f32 %v367, %v382
  %v414 = vmul.f32 %v366, %v386
  %v415 = vmul.f32 %v365, %v390
  %v416 = vmul.f32 %v364, %v394
  %v417 = vmul.f32 %v363, %v398
  %v418 = vmul.f32 %v362, %v402
  %v427 = vrot.slane %v411, 4
  %v428 = vrot.slane %v412, 4
  %v429 = vrot.slane %v413, 4
  %v430 = vrot.slane %v414, 4
  %v431 = vrot.slane %v415, 4
  %v432 = vrot.slane %v416, 4
  %v433 = vrot.slane %v417, 4
  %v434 = vrot.slane %v418, 4
  %443 = vst [vmem:[#allocation2 + $0x40] sm:$0xf0] %v427
  %444 = vst [vmem:[#allocation2 + $0x48] sm:$0xf0] %v428
  %445 = vst [vmem:[#allocation2 + $0x50] sm:$0xf0] %v429
  %446 = vst [vmem:[#allocation2 + $0x58] sm:$0xf0] %v430
  %447 = vst [vmem:[#allocation2 + $0x60] sm:$0xf0] %v431
  %448 = vst [vmem:[#allocation2 + $0x68] sm:$0xf0] %v432
  %449 = vst [vmem:[#allocation2 + $0x70] sm:$0xf0] %v433
  %450 = vst [vmem:[#allocation2 + $0x78] sm:$0xf0] %v434
  %451 = vst [vmem:[#allocation2 + $0x80] sm:$0xf] %v57
  %452 = vst [vmem:[#allocation2 + $0x88] sm:$0xf] %v65
  %453 = vst [vmem:[#allocation2 + $0x90] sm:$0xf] %v58
  %454 = vst [vmem:[#allocation2 + $0x98] sm:$0xf] %v66
  %455 = vst [vmem:[#allocation2 + $0xa0] sm:$0xf] %v59
  %456 = vst [vmem:[#allocation2 + $0xa8] sm:$0xf] %v67
  %457 = vst [vmem:[#allocation2 + $0xb0] sm:$0xf] %v60
  %458 = vst [vmem:[#allocation2 + $0xb8] sm:$0xf] %v68
  %459 = vrot.lane.b32.xlu0 %v57, 127
  %v460 = vpop.permute.xlu0 %459
  %461 = vrot.lane.b32.xlu0 %v65, 127
  %v462 = vpop.permute.xlu0 %461
  %463 = vrot.lane.b32.xlu0 %v58, 127
  %v464 = vpop.permute.xlu0 %463
  %465 = vrot.lane.b32.xlu0 %v66, 127
  %v466 = vpop.permute.xlu0 %465
  %467 = vrot.lane.b32.xlu0 %v59, 127
  %v468 = vpop.permute.xlu0 %467
  %469 = vrot.lane.b32.xlu0 %v67, 127
  %v470 = vpop.permute.xlu0 %469
  %471 = vrot.lane.b32.xlu0 %v60, 127
  %v472 = vpop.permute.xlu0 %471
  %473 = vrot.lane.b32.xlu0 %v68, 127
  %v474 = vpop.permute.xlu0 %473
  %vm475 = vcmp.lt.s32.totalorder %v90, 127
  %v476 = vsel %vm475, %v472, %v474
  %v477 = vsel %vm475, %v470, %v472
  %v478 = vsel %vm475, %v468, %v470
  %v479 = vsel %vm475, %v466, %v468
  %v480 = vsel %vm475, %v464, %v466
  %v481 = vsel %vm475, %v462, %v464
  %v482 = vsel %vm475, %v460, %v462
  %v483 = vsel %vm475, %v474, %v460
  %v485 = vlaneseq
  %v486 = vshrl.u32 %v485, 7
  %v487 = vsub.s32 0, %v486
  %v488 = vrot.slane %v41, %v487
  %v489 = vlaneseq
  %v490 = vshrl.u32 %v489, 7
  %v491 = vsub.s32 1, %v490
  %v492 = vrot.slane %v41, %v491
  %v493 = vlaneseq
  %v494 = vshrl.u32 %v493, 7
  %v495 = vsub.s32 2, %v494
  %v496 = vrot.slane %v41, %v495
  %v497 = vlaneseq
  %v498 = vshrl.u32 %v497, 7
  %v499 = vsub.s32 3, %v498
  %v500 = vrot.slane %v41, %v499
  %v501 = vlaneseq
  %v502 = vshrl.u32 %v501, 7
  %v503 = vsub.s32 4, %v502
  %v504 = vrot.slane %v41, %v503
  %v505 = vlaneseq
  %v506 = vshrl.u32 %v505, 7
  %v507 = vsub.s32 5, %v506
  %v508 = vrot.slane %v41, %v507
  %v509 = vlaneseq
  %v510 = vshrl.u32 %v509, 7
  %v511 = vsub.s32 6, %v510
  %v512 = vrot.slane %v41, %v511
  %v513 = vlaneseq
  %v514 = vshrl.u32 %v513, 7
  %v515 = vsub.s32 7, %v514
  %v516 = vrot.slane %v41, %v515
  %v525 = vmul.f32 %v482, %v488
  %v526 = vmul.f32 %v481, %v492
  %v527 = vmul.f32 %v480, %v496
  %v528 = vmul.f32 %v479, %v500
  %v529 = vmul.f32 %v478, %v504
  %v530 = vmul.f32 %v477, %v508
  %v531 = vmul.f32 %v476, %v512
  %v532 = vmul.f32 %v483, %v516
  %v541 = vrot.slane %v525, 4
  %v542 = vrot.slane %v526, 4
  %v543 = vrot.slane %v527, 4
  %v544 = vrot.slane %v528, 4
  %v545 = vrot.slane %v529, 4
  %v546 = vrot.slane %v530, 4
  %v547 = vrot.slane %v531, 4
  %v548 = vrot.slane %v532, 4
  %557 = vst [vmem:[#allocation2 + $0x80] sm:$0xf0] %v541
  %558 = vst [vmem:[#allocation2 + $0x88] sm:$0xf0] %v542
  %559 = vst [vmem:[#allocation2 + $0x90] sm:$0xf0] %v543
  %560 = vst [vmem:[#allocation2 + $0x98] sm:$0xf0] %v544
  %561 = vst [vmem:[#allocation2 + $0xa0] sm:$0xf0] %v545
  %562 = vst [vmem:[#allocation2 + $0xa8] sm:$0xf0] %v546
  %563 = vst [vmem:[#allocation2 + $0xb0] sm:$0xf0] %v547
  %564 = vst [vmem:[#allocation2 + $0xb8] sm:$0xf0] %v548
  %565 = vrot.lane.b32.xlu0 %v57, 113
  %v566 = vpop.permute.xlu0 %565
  %567 = vrot.lane.b32.xlu0 %v65, 113
  %v568 = vpop.permute.xlu0 %567
  %569 = vrot.lane.b32.xlu0 %v58, 113
  %v570 = vpop.permute.xlu0 %569
  %571 = vrot.lane.b32.xlu0 %v66, 113
  %v572 = vpop.permute.xlu0 %571
  %573 = vrot.lane.b32.xlu0 %v59, 113
  %v574 = vpop.permute.xlu0 %573
  %575 = vrot.lane.b32.xlu0 %v67, 113
  %v576 = vpop.permute.xlu0 %575
  %577 = vrot.lane.b32.xlu0 %v60, 113
  %v578 = vpop.permute.xlu0 %577
  %579 = vrot.lane.b32.xlu0 %v68, 113
  %v580 = vpop.permute.xlu0 %579
  %vm581 = vcmp.lt.s32.totalorder %v90, 113
  %v582 = vsel %vm581, %v578, %v580
  %v583 = vsel %vm581, %v576, %v578
  %v584 = vsel %vm581, %v574, %v576
  %v585 = vsel %vm581, %v572, %v574
  %v586 = vsel %vm581, %v570, %v572
  %v587 = vsel %vm581, %v568, %v570
  %v588 = vsel %vm581, %v566, %v568
  %v589 = vsel %vm581, %v580, %v566
  %v591 = vlaneseq
  %v592 = vshrl.u32 %v591, 7
  %v593 = vsub.s32 0, %v592
  %v594 = vrot.slane %v45, %v593
  %v595 = vlaneseq
  %v596 = vshrl.u32 %v595, 7
  %v597 = vsub.s32 1, %v596
  %v598 = vrot.slane %v45, %v597
  %v599 = vlaneseq
  %v600 = vshrl.u32 %v599, 7
  %v601 = vsub.s32 2, %v600
  %v602 = vrot.slane %v45, %v601
  %v603 = vlaneseq
  %v604 = vshrl.u32 %v603, 7
  %v605 = vsub.s32 3, %v604
  %v606 = vrot.slane %v45, %v605
  %v607 = vlaneseq
  %v608 = vshrl.u32 %v607, 7
  %v609 = vsub.s32 4, %v608
  %v610 = vrot.slane %v45, %v609
  %v611 = vlaneseq
  %v612 = vshrl.u32 %v611, 7
  %v613 = vsub.s32 5, %v612
  %v614 = vrot.slane %v45, %v613
  %v615 = vlaneseq
  %v616 = vshrl.u32 %v615, 7
  %v617 = vsub.s32 6, %v616
  %v618 = vrot.slane %v45, %v617
  %v619 = vlaneseq
  %v620 = vshrl.u32 %v619, 7
  %v621 = vsub.s32 7, %v620
  %v622 = vrot.slane %v45, %v621
  %v631 = vmul.f32 %v588, %v594
  %v632 = vmul.f32 %v587, %v598
  %v633 = vmul.f32 %v586, %v602
  %v634 = vmul.f32 %v585, %v606
  %v635 = vmul.f32 %v584, %v610
  %v636 = vmul.f32 %v583, %v614
  %v637 = vmul.f32 %v582, %v618
  %v638 = vmul.f32 %v589, %v622
  %639 = vst [vmem:[#allocation2 + $0xc0] sm:$0xf] %v631
  %640 = vst [vmem:[#allocation2 + $0xc8] sm:$0xf] %v632
  %641 = vst [vmem:[#allocation2 + $0xd0] sm:$0xf] %v633
  %642 = vst [vmem:[#allocation2 + $0xd8] sm:$0xf] %v634
  %643 = vst [vmem:[#allocation2 + $0xe0] sm:$0xf] %v635
  %644 = vst [vmem:[#allocation2 + $0xe8] sm:$0xf] %v636
  %645 = vst [vmem:[#allocation2 + $0xf0] sm:$0xf] %v637
  %646 = vst [vmem:[#allocation2 + $0xf8] sm:$0xf] %v638
  %647 = vrot.lane.b32.xlu0 %v57, 112
  %v648 = vpop.permute.xlu0 %647
  %649 = vrot.lane.b32.xlu0 %v65, 112
  %v650 = vpop.permute.xlu0 %649
  %651 = vrot.lane.b32.xlu0 %v58, 112
  %v652 = vpop.permute.xlu0 %651
  %653 = vrot.lane.b32.xlu0 %v66, 112
  %v654 = vpop.permute.xlu0 %653
  %655 = vrot.lane.b32.xlu0 %v59, 112
  %v656 = vpop.permute.xlu0 %655
  %657 = vrot.lane.b32.xlu0 %v67, 112
  %v658 = vpop.permute.xlu0 %657
  %659 = vrot.lane.b32.xlu0 %v60, 112
  %v660 = vpop.permute.xlu0 %659
  %661 = vrot.lane.b32.xlu0 %v68, 112
  %v662 = vpop.permute.xlu0 %661
  %vm663 = vcmp.lt.s32.totalorder %v90, 112
  %v664 = vsel %vm663, %v660, %v662
  %v665 = vsel %vm663, %v658, %v660
  %v666 = vsel %vm663, %v656, %v658
  %v667 = vsel %vm663, %v654, %v656
  %v668 = vsel %vm663, %v652, %v654
  %v669 = vsel %vm663, %v650, %v652
  %v670 = vsel %vm663, %v648, %v650
  %v671 = vsel %vm663, %v662, %v648
  %v673 = vlaneseq
  %v674 = vshrl.u32 %v673, 7
  %v675 = vsub.s32 0, %v674
  %v676 = vrot.slane %v49, %v675
  %v677 = vlaneseq
  %v678 = vshrl.u32 %v677, 7
  %v679 = vsub.s32 1, %v678
  %v680 = vrot.slane %v49, %v679
  %v681 = vlaneseq
  %v682 = vshrl.u32 %v681, 7
  %v683 = vsub.s32 2, %v682
  %v684 = vrot.slane %v49, %v683
  %v685 = vlaneseq
  %v686 = vshrl.u32 %v685, 7
  %v687 = vsub.s32 3, %v686
  %v688 = vrot.slane %v49, %v687
  %v689 = vlaneseq
  %v690 = vshrl.u32 %v689, 7
  %v691 = vsub.s32 4, %v690
  %v692 = vrot.slane %v49, %v691
  %v693 = vlaneseq
  %v694 = vshrl.u32 %v693, 7
  %v695 = vsub.s32 5, %v694
  %v696 = vrot.slane %v49, %v695
  %v697 = vlaneseq
  %v698 = vshrl.u32 %v697, 7
  %v699 = vsub.s32 6, %v698
  %v700 = vrot.slane %v49, %v699
  %v701 = vlaneseq
  %v702 = vshrl.u32 %v701, 7
  %v703 = vsub.s32 7, %v702
  %v704 = vrot.slane %v49, %v703
  %v713 = vmul.f32 %v670, %v676
  %v714 = vmul.f32 %v669, %v680
  %v715 = vmul.f32 %v668, %v684
  %v716 = vmul.f32 %v667, %v688
  %v717 = vmul.f32 %v666, %v692
  %v718 = vmul.f32 %v665, %v696
  %v719 = vmul.f32 %v664, %v700
  %v720 = vmul.f32 %v671, %v704
  %v729 = vrot.slane %v713, 4
  %v730 = vrot.slane %v714, 4
  %v731 = vrot.slane %v715, 4
  %v732 = vrot.slane %v716, 4
  %v733 = vrot.slane %v717, 4
  %v734 = vrot.slane %v718, 4
  %v735 = vrot.slane %v719, 4
  %v736 = vrot.slane %v720, 4
  %745 = vst [vmem:[#allocation2 + $0xc0] sm:$0xf0] %v729
  %746 = vst [vmem:[#allocation2 + $0xc8] sm:$0xf0] %v730
  %747 = vst [vmem:[#allocation2 + $0xd0] sm:$0xf0] %v731
  %748 = vst [vmem:[#allocation2 + $0xd8] sm:$0xf0] %v732
  %749 = vst [vmem:[#allocation2 + $0xe0] sm:$0xf0] %v733
  %750 = vst [vmem:[#allocation2 + $0xe8] sm:$0xf0] %v734
  %751 = vst [vmem:[#allocation2 + $0xf0] sm:$0xf0] %v735
  %752 = vst [vmem:[#allocation2 + $0xf8] sm:$0xf0] %v736
  %753 = vrot.lane.b32.xlu0 %v57, 111
  %v754 = vpop.permute.xlu0 %753
  %755 = vrot.lane.b32.xlu0 %v65, 111
  %v756 = vpop.permute.xlu0 %755
  %757 = vrot.lane.b32.xlu0 %v58, 111
  %v758 = vpop.permute.xlu0 %757
  %759 = vrot.lane.b32.xlu0 %v66, 111
  %v760 = vpop.permute.xlu0 %759
  %761 = vrot.lane.b32.xlu0 %v59, 111
  %v762 = vpop.permute.xlu0 %761
  %763 = vrot.lane.b32.xlu0 %v67, 111
  %v764 = vpop.permute.xlu0 %763
  %765 = vrot.lane.b32.xlu0 %v60, 111
  %v766 = vpop.permute.xlu0 %765
  %767 = vrot.lane.b32.xlu0 %v68, 111
  %v768 = vpop.permute.xlu0 %767
  %vm769 = vcmp.lt.s32.totalorder %v90, 111
  %v770 = vsel %vm769, %v766, %v768
  %v771 = vsel %vm769, %v764, %v766
  %v772 = vsel %vm769, %v762, %v764
  %v773 = vsel %vm769, %v760, %v762
  %v774 = vsel %vm769, %v758, %v760
  %v775 = vsel %vm769, %v756, %v758
  %v776 = vsel %vm769, %v754, %v756
  %v777 = vsel %vm769, %v768, %v754
  %v779 = vlaneseq
  %v780 = vshrl.u32 %v779, 7
  %v781 = vsub.s32 0, %v780
  %v782 = vrot.slane %v53, %v781
  %v783 = vlaneseq
  %v784 = vshrl.u32 %v783, 7
  %v785 = vsub.s32 1, %v784
  %v786 = vrot.slane %v53, %v785
  %v787 = vlaneseq
  %v788 = vshrl.u32 %v787, 7
  %v789 = vsub.s32 2, %v788
  %v790 = vrot.slane %v53, %v789
  %v791 = vlaneseq
  %v792 = vshrl.u32 %v791, 7
  %v793 = vsub.s32 3, %v792
  %v794 = vrot.slane %v53, %v793
  %v795 = vlaneseq
  %v796 = vshrl.u32 %v795, 7
  %v797 = vsub.s32 4, %v796
  %v798 = vrot.slane %v53, %v797
  %v799 = vlaneseq
  %v800 = vshrl.u32 %v799, 7
  %v801 = vsub.s32 5, %v800
  %v802 = vrot.slane %v53, %v801
  %v803 = vlaneseq
  %v804 = vshrl.u32 %v803, 7
  %v805 = vsub.s32 6, %v804
  %v806 = vrot.slane %v53, %v805
  %v807 = vlaneseq
  %v808 = vshrl.u32 %v807, 7
  %v809 = vsub.s32 7, %v808
  %v810 = vrot.slane %v53, %v809
  %v819 = vmul.f32 %v776, %v782
  %v820 = vmul.f32 %v775, %v786
  %v821 = vmul.f32 %v774, %v790
  %v822 = vmul.f32 %v773, %v794
  %v823 = vmul.f32 %v772, %v798
  %v824 = vmul.f32 %v771, %v802
  %v825 = vmul.f32 %v770, %v806
  %v826 = vmul.f32 %v777, %v810
  %827 = vst [vmem:[#allocation2 + $0x100] sm:$0xf] %v819
  %828 = vst [vmem:[#allocation2 + $0x108] sm:$0xf] %v820
  %829 = vst [vmem:[#allocation2 + $0x110] sm:$0xf] %v821
  %830 = vst [vmem:[#allocation2 + $0x118] sm:$0xf] %v822
  %831 = vst [vmem:[#allocation2 + $0x120] sm:$0xf] %v823
  %832 = vst [vmem:[#allocation2 + $0x128] sm:$0xf] %v824
  %833 = vst [vmem:[#allocation2 + $0x130] sm:$0xf] %v825
  %834 = vst [vmem:[#allocation2 + $0x138] sm:$0xf] %v826
  %v835 = vld [vmem:[%s1] sm:$0xf]
  %v836 = vld [vmem:[#allocation2] sm:$0xff]
  %v837 = vld [vmem:[#allocation2 + $0x8] sm:$0xff]
  %v838 = vld [vmem:[#allocation2 + $0x10] sm:$0xff]
  %v839 = vld [vmem:[#allocation2 + $0x18] sm:$0xff]
  %v840 = vld [vmem:[#allocation2 + $0x20] sm:$0xff]
  %v841 = vld [vmem:[#allocation2 + $0x28] sm:$0xff]
  %v842 = vld [vmem:[#allocation2 + $0x30] sm:$0xff]
  %v843 = vld [vmem:[#allocation2 + $0x38] sm:$0xff]
  %v844 = vld [vmem:[#allocation2 + $0x40] sm:$0xff]
  %v845 = vld [vmem:[#allocation2 + $0x48] sm:$0xff]
  %v846 = vld [vmem:[#allocation2 + $0x50] sm:$0xff]
  %v847 = vld [vmem:[#allocation2 + $0x58] sm:$0xff]
  %v848 = vld [vmem:[#allocation2 + $0x60] sm:$0xff]
  %v849 = vld [vmem:[#allocation2 + $0x68] sm:$0xff]
  %v850 = vld [vmem:[#allocation2 + $0x70] sm:$0xff]
  %v851 = vld [vmem:[#allocation2 + $0x78] sm:$0xff]
  %v852 = vld [vmem:[#allocation2 + $0x80] sm:$0xff]
  %v853 = vld [vmem:[#allocation2 + $0x88] sm:$0xff]
  %v854 = vld [vmem:[#allocation2 + $0x90] sm:$0xff]
  %v855 = vld [vmem:[#allocation2 + $0x98] sm:$0xff]
  %v856 = vld [vmem:[#allocation2 + $0xa0] sm:$0xff]
  %v857 = vld [vmem:[#allocation2 + $0xa8] sm:$0xff]
  %v858 = vld [vmem:[#allocation2 + $0xb0] sm:$0xff]
  %v859 = vld [vmem:[#allocation2 + $0xb8] sm:$0xff]
  %v860 = vld [vmem:[#allocation2 + $0xc0] sm:$0xff]
  %v861 = vld [vmem:[#allocation2 + $0xc8] sm:$0xff]
  %v862 = vld [vmem:[#allocation2 + $0xd0] sm:$0xff]
  %v863 = vld [vmem:[#allocation2 + $0xd8] sm:$0xff]
  %v864 = vld [vmem:[#allocation2 + $0xe0] sm:$0xff]
  %v865 = vld [vmem:[#allocation2 + $0xe8] sm:$0xff]
  %v866 = vld [vmem:[#allocation2 + $0xf0] sm:$0xff]
  %v867 = vld [vmem:[#allocation2 + $0xf8] sm:$0xff]
  %v868 = vld [vmem:[#allocation2 + $0x100] sm:$0x1f]
  %v869 = vld [vmem:[#allocation2 + $0x108] sm:$0x1f]
  %v870 = vld [vmem:[#allocation2 + $0x110] sm:$0x1f]
  %v871 = vld [vmem:[#allocation2 + $0x118] sm:$0x1f]
  %v872 = vld [vmem:[#allocation2 + $0x120] sm:$0x1f]
  %v873 = vld [vmem:[#allocation2 + $0x128] sm:$0x1f]
  %v874 = vld [vmem:[#allocation2 + $0x130] sm:$0x1f]
  %v875 = vld [vmem:[#allocation2 + $0x138] sm:$0x1f]
  %vm876 = vcmask 302080
  %v878 = vsel %vm876, %v835, 0
  %vm880 = vcmask 1044480
  %v882 = vsel %vm880, %v868, 0
  %v885 = vsel %vm880, %v869, 0
  %v888 = vsel %vm880, %v870, 0
  %v891 = vsel %vm880, %v871, 0
  %v894 = vsel %vm880, %v872, 0
  %v897 = vsel %vm880, %v873, 0
  %v900 = vsel %vm880, %v874, 0
  %v903 = vsel %vm880, %v875, 0
  %905 = vmatprep.subr.mxu0 0.0
  %906 = vmatpush1.msra.mxu0 0.0
  %907 = vmatprep.subr.mxu0 0.0
  %908 = vmatpush1.msra.mxu0 0.0
  %909 = vmatprep.subr.mxu0 0.0
  %910 = vmatpush1.msra.mxu0 0.0
  %911 = vmatprep.subr.mxu0 0.0
  %912 = vmatpush1.msra.mxu0 0.0
  %913 = vmatprep.subr.mxu0 0.0
  %914 = vmatpush1.msra.mxu0 0.0
  %915 = vmatprep.subr.mxu0 0.0
  %916 = vmatpush1.msra.mxu0 0.0
  %917 = vmatprep.subr.mxu0 0.0
  %918 = vmatpush1.msra.mxu0 0.0
  %919 = vmatprep.subr.mxu0 0.0
  %920 = vmatpush1.msra.mxu0 0.0
  %921 = vmatprep.subr.mxu0 0.0
  %922 = vmatpush1.msra.mxu0 0.0
  %923 = vmatprep.subr.mxu0 0.0
  %924 = vmatpush1.msra.mxu0 0.0
  %925 = vmatprep.subr.mxu0 0.0
  %926 = vmatpush1.msra.mxu0 0.0
  %927 = vmatprep.subr.mxu0 %v885
  %928 = vmatpush1.msra.mxu0 %v882
  %929 = vmatprep.subr.mxu0 %v861
  %930 = vmatpush1.msra.mxu0 %v860
  %931 = vmatprep.subr.mxu0 %v853
  %932 = vmatpush1.msra.mxu0 %v852
  %933 = vmatprep.subr.mxu0 %v845
  %934 = vmatpush1.msra.mxu0 %v844
  %935 = vmatprep.subr.mxu0 %v837
  %936 = vmatpush1.msra.mxu0 %v836
  %937 = vmatprep.subr.mxu0 0.0
  %938 = vmatpush2.msra.mxu0 0.0
  %939 = vmatprep.subr.mxu0 0.0
  %940 = vmatpush2.msra.mxu0 0.0
  %941 = vmatprep.subr.mxu0 0.0
  %942 = vmatpush2.msra.mxu0 0.0
  %943 = vmatprep.subr.mxu0 0.0
  %944 = vmatpush2.msra.mxu0 0.0
  %945 = vmatprep.subr.mxu0 0.0
  %946 = vmatpush2.msra.mxu0 0.0
  %947 = vmatprep.subr.mxu0 0.0
  %948 = vmatpush2.msra.mxu0 0.0
  %949 = vmatprep.subr.mxu0 0.0
  %950 = vmatpush2.msra.mxu0 0.0
  %951 = vmatprep.subr.mxu0 0.0
  %952 = vmatpush2.msra.mxu0 0.0
  %953 = vmatprep.subr.mxu0 0.0
  %954 = vmatpush2.msra.mxu0 0.0
  %955 = vmatprep.subr.mxu0 0.0
  %956 = vmatpush2.msra.mxu0 0.0
  %957 = vmatprep.subr.mxu0 0.0
  %958 = vmatpush2.msra.mxu0 0.0
  %959 = vmatprep.subr.mxu0 0.0
  %960 = vmatpush2.msra.mxu0 0.0
  %961 = vmatprep.subr.mxu0 0.0
  %962 = vmatpush2.msra.mxu0 0.0
  %963 = vmatprep.subr.mxu0 0.0
  %964 = vmatpush2.msra.mxu0 0.0
  %965 = vmatprep.subr.mxu0 0.0
  %966 = vmatpush2.msra.mxu0 0.0
  %967 = vmatprep.subr.mxu0 0.0
  %968 = vmatpush2.msra.mxu0 0.0
  %969 = vmatprep.mubr.f32.mxu0 0.0
  %970 = vmatmul.mubr.f32.gmra.mxu0 %v878
  %v971 = vpop.f32.mrf.mxu0
  %v972 = vadd.f32 0.0, %v971
  %v973 = vpop.f32.mrf.mxu0
  %v974 = vadd.f32 0.0, %v973
  %975 = vdwg.mxu0
  %976 = vmatprep.subr.mxu0 0.0
  %977 = vmatpush1.msra.mxu0 0.0
  %978 = vmatprep.subr.mxu0 0.0
  %979 = vmatpush1.msra.mxu0 0.0
  %980 = vmatprep.subr.mxu0 0.0
  %981 = vmatpush1.msra.mxu0 0.0
  %982 = vmatprep.subr.mxu0 0.0
  %983 = vmatpush1.msra.mxu0 0.0
  %984 = vmatprep.subr.mxu0 0.0
  %985 = vmatpush1.msra.mxu0 0.0
  %986 = vmatprep.subr.mxu0 0.0
  %987 = vmatpush1.msra.mxu0 0.0
  %988 = vmatprep.subr.mxu0 0.0
  %989 = vmatpush1.msra.mxu0 0.0
  %990 = vmatprep.subr.mxu0 0.0
  %991 = vmatpush1.msra.mxu0 0.0
  %992 = vmatprep.subr.mxu0 0.0
  %993 = vmatpush1.msra.mxu0 0.0
  %994 = vmatprep.subr.mxu0 0.0
  %995 = vmatpush1.msra.mxu0 0.0
  %996 = vmatprep.subr.mxu0 0.0
  %997 = vmatpush1.msra.mxu0 0.0
  %998 = vmatprep.subr.mxu0 %v891
  %999 = vmatpush1.msra.mxu0 %v888
  %1000 = vmatprep.subr.mxu0 %v863
  %1001 = vmatpush1.msra.mxu0 %v862
  %1002 = vmatprep.subr.mxu0 %v855
  %1003 = vmatpush1.msra.mxu0 %v854
  %1004 = vmatprep.subr.mxu0 %v847
  %1005 = vmatpush1.msra.mxu0 %v846
  %1006 = vmatprep.subr.mxu0 %v839
  %1007 = vmatpush1.msra.mxu0 %v838
  %1008 = vmatprep.subr.mxu0 0.0
  %1009 = vmatpush2.msra.mxu0 0.0
  %1010 = vmatprep.subr.mxu0 0.0
  %1011 = vmatpush2.msra.mxu0 0.0
  %1012 = vmatprep.subr.mxu0 0.0
  %1013 = vmatpush2.msra.mxu0 0.0
  %1014 = vmatprep.subr.mxu0 0.0
  %1015 = vmatpush2.msra.mxu0 0.0
  %1016 = vmatprep.subr.mxu0 0.0
  %1017 = vmatpush2.msra.mxu0 0.0
  %1018 = vmatprep.subr.mxu0 0.0
  %1019 = vmatpush2.msra.mxu0 0.0
  %1020 = vmatprep.subr.mxu0 0.0
  %1021 = vmatpush2.msra.mxu0 0.0
  %1022 = vmatprep.subr.mxu0 0.0
  %1023 = vmatpush2.msra.mxu0 0.0
  %1024 = vmatprep.subr.mxu0 0.0
  %1025 = vmatpush2.msra.mxu0 0.0
  %1026 = vmatprep.subr.mxu0 0.0
  %1027 = vmatpush2.msra.mxu0 0.0
  %1028 = vmatprep.subr.mxu0 0.0
  %1029 = vmatpush2.msra.mxu0 0.0
  %1030 = vmatprep.subr.mxu0 0.0
  %1031 = vmatpush2.msra.mxu0 0.0
  %1032 = vmatprep.subr.mxu0 0.0
  %1033 = vmatpush2.msra.mxu0 0.0
  %1034 = vmatprep.subr.mxu0 0.0
  %1035 = vmatpush2.msra.mxu0 0.0
  %1036 = vmatprep.subr.mxu0 0.0
  %1037 = vmatpush2.msra.mxu0 0.0
  %1038 = vmatprep.subr.mxu0 0.0
  %1039 = vmatpush2.msra.mxu0 0.0
  %1040 = vmatprep.mubr.f32.mxu0 0.0
  %1041 = vmatmul.mubr.f32.gmra.mxu0 %v878
  %v1042 = vpop.f32.mrf.mxu0
  %v1043 = vadd.f32 0.0, %v1042
  %v1044 = vpop.f32.mrf.mxu0
  %v1045 = vadd.f32 0.0, %v1044
  %1046 = vdwg.mxu0
  %1047 = vmatprep.subr.mxu0 0.0
  %1048 = vmatpush1.msra.mxu0 0.0
  %1049 = vmatprep.subr.mxu0 0.0
  %1050 = vmatpush1.msra.mxu0 0.0
  %1051 = vmatprep.subr.mxu0 0.0
  %1052 = vmatpush1.msra.mxu0 0.0
  %1053 = vmatprep.subr.mxu0 0.0
  %1054 = vmatpush1.msra.mxu0 0.0
  %1055 = vmatprep.subr.mxu0 0.0
  %1056 = vmatpush1.msra.mxu0 0.0
  %1057 = vmatprep.subr.mxu0 0.0
  %1058 = vmatpush1.msra.mxu0 0.0
  %1059 = vmatprep.subr.mxu0 0.0
  %1060 = vmatpush1.msra.mxu0 0.0
  %1061 = vmatprep.subr.mxu0 0.0
  %1062 = vmatpush1.msra.mxu0 0.0
  %1063 = vmatprep.subr.mxu0 0.0
  %1064 = vmatpush1.msra.mxu0 0.0
  %1065 = vmatprep.subr.mxu0 0.0
  %1066 = vmatpush1.msra.mxu0 0.0
  %1067 = vmatprep.subr.mxu0 0.0
  %1068 = vmatpush1.msra.mxu0 0.0
  %1069 = vmatprep.subr.mxu0 %v897
  %1070 = vmatpush1.msra.mxu0 %v894
  %1071 = vmatprep.subr.mxu0 %v865
  %1072 = vmatpush1.msra.mxu0 %v864
  %1073 = vmatprep.subr.mxu0 %v857
  %1074 = vmatpush1.msra.mxu0 %v856
  %1075 = vmatprep.subr.mxu0 %v849
  %1076 = vmatpush1.msra.mxu0 %v848
  %1077 = vmatprep.subr.mxu0 %v841
  %1078 = vmatpush1.msra.mxu0 %v840
  %1079 = vmatprep.subr.mxu0 0.0
  %1080 = vmatpush2.msra.mxu0 0.0
  %1081 = vmatprep.subr.mxu0 0.0
  %1082 = vmatpush2.msra.mxu0 0.0
  %1083 = vmatprep.subr.mxu0 0.0
  %1084 = vmatpush2.msra.mxu0 0.0
  %1085 = vmatprep.subr.mxu0 0.0
  %1086 = vmatpush2.msra.mxu0 0.0
  %1087 = vmatprep.subr.mxu0 0.0
  %1088 = vmatpush2.msra.mxu0 0.0
  %1089 = vmatprep.subr.mxu0 0.0
  %1090 = vmatpush2.msra.mxu0 0.0
  %1091 = vmatprep.subr.mxu0 0.0
  %1092 = vmatpush2.msra.mxu0 0.0
  %1093 = vmatprep.subr.mxu0 0.0
  %1094 = vmatpush2.msra.mxu0 0.0
  %1095 = vmatprep.subr.mxu0 0.0
  %1096 = vmatpush2.msra.mxu0 0.0
  %1097 = vmatprep.subr.mxu0 0.0
  %1098 = vmatpush2.msra.mxu0 0.0
  %1099 = vmatprep.subr.mxu0 0.0
  %1100 = vmatpush2.msra.mxu0 0.0
  %1101 = vmatprep.subr.mxu0 0.0
  %1102 = vmatpush2.msra.mxu0 0.0
  %1103 = vmatprep.subr.mxu0 0.0
  %1104 = vmatpush2.msra.mxu0 0.0
  %1105 = vmatprep.subr.mxu0 0.0
  %1106 = vmatpush2.msra.mxu0 0.0
  %1107 = vmatprep.subr.mxu0 0.0
  %1108 = vmatpush2.msra.mxu0 0.0
  %1109 = vmatprep.subr.mxu0 0.0
  %1110 = vmatpush2.msra.mxu0 0.0
  %1111 = vmatprep.mubr.f32.mxu0 0.0
  %1112 = vmatmul.mubr.f32.gmra.mxu0 %v878
  %v1113 = vpop.f32.mrf.mxu0
  %v1114 = vadd.f32 0.0, %v1113
  %v1115 = vpop.f32.mrf.mxu0
  %v1116 = vadd.f32 0.0, %v1115
  %1117 = vdwg.mxu0
  %1118 = vmatprep.subr.mxu0 0.0
  %1119 = vmatpush1.msra.mxu0 0.0
  %1120 = vmatprep.subr.mxu0 0.0
  %1121 = vmatpush1.msra.mxu0 0.0
  %1122 = vmatprep.subr.mxu0 0.0
  %1123 = vmatpush1.msra.mxu0 0.0
  %1124 = vmatprep.subr.mxu0 0.0
  %1125 = vmatpush1.msra.mxu0 0.0
  %1126 = vmatprep.subr.mxu0 0.0
  %1127 = vmatpush1.msra.mxu0 0.0
  %1128 = vmatprep.subr.mxu0 0.0
  %1129 = vmatpush1.msra.mxu0 0.0
  %1130 = vmatprep.subr.mxu0 0.0
  %1131 = vmatpush1.msra.mxu0 0.0
  %1132 = vmatprep.subr.mxu0 0.0
  %1133 = vmatpush1.msra.mxu0 0.0
  %1134 = vmatprep.subr.mxu0 0.0
  %1135 = vmatpush1.msra.mxu0 0.0
  %1136 = vmatprep.subr.mxu0 0.0
  %1137 = vmatpush1.msra.mxu0 0.0
  %1138 = vmatprep.subr.mxu0 0.0
  %1139 = vmatpush1.msra.mxu0 0.0
  %1140 = vmatprep.subr.mxu0 %v903
  %1141 = vmatpush1.msra.mxu0 %v900
  %1142 = vmatprep.subr.mxu0 %v867
  %1143 = vmatpush1.msra.mxu0 %v866
  %1144 = vmatprep.subr.mxu0 %v859
  %1145 = vmatpush1.msra.mxu0 %v858
  %1146 = vmatprep.subr.mxu0 %v851
  %1147 = vmatpush1.msra.mxu0 %v850
  %1148 = vmatprep.subr.mxu0 %v843
  %1149 = vmatpush1.msra.mxu0 %v842
  %1150 = vmatprep.subr.mxu0 0.0
  %1151 = vmatpush2.msra.mxu0 0.0
  %1152 = vmatprep.subr.mxu0 0.0
  %1153 = vmatpush2.msra.mxu0 0.0
  %1154 = vmatprep.subr.mxu0 0.0
  %1155 = vmatpush2.msra.mxu0 0.0
  %1156 = vmatprep.subr.mxu0 0.0
  %1157 = vmatpush2.msra.mxu0 0.0
  %1158 = vmatprep.subr.mxu0 0.0
  %1159 = vmatpush2.msra.mxu0 0.0
  %1160 = vmatprep.subr.mxu0 0.0
  %1161 = vmatpush2.msra.mxu0 0.0
  %1162 = vmatprep.subr.mxu0 0.0
  %1163 = vmatpush2.msra.mxu0 0.0
  %1164 = vmatprep.subr.mxu0 0.0
  %1165 = vmatpush2.msra.mxu0 0.0
  %1166 = vmatprep.subr.mxu0 0.0
  %1167 = vmatpush2.msra.mxu0 0.0
  %1168 = vmatprep.subr.mxu0 0.0
  %1169 = vmatpush2.msra.mxu0 0.0
  %1170 = vmatprep.subr.mxu0 0.0
  %1171 = vmatpush2.msra.mxu0 0.0
  %1172 = vmatprep.subr.mxu0 0.0
  %1173 = vmatpush2.msra.mxu0 0.0
  %1174 = vmatprep.subr.mxu0 0.0
  %1175 = vmatpush2.msra.mxu0 0.0
  %1176 = vmatprep.subr.mxu0 0.0
  %1177 = vmatpush2.msra.mxu0 0.0
  %1178 = vmatprep.subr.mxu0 0.0
  %1179 = vmatpush2.msra.mxu0 0.0
  %1180 = vmatprep.subr.mxu0 0.0
  %1181 = vmatpush2.msra.mxu0 0.0
  %1182 = vmatprep.mubr.f32.mxu0 0.0
  %1183 = vmatmul.mubr.f32.gmra.mxu0 %v878
  %v1184 = vpop.f32.mrf.mxu0
  %v1185 = vadd.f32 0.0, %v1184
  %v1186 = vpop.f32.mrf.mxu0
  %v1187 = vadd.f32 0.0, %v1186
  %1188 = vdwg.mxu0
  %v1189 = vmax.f32 %v972, 0.0
  %v1190 = vmax.f32 %v974, 0.0
  %v1191 = vmax.f32 %v1043, 0.0
  %v1192 = vmax.f32 %v1045, 0.0
  %v1193 = vmax.f32 %v1114, 0.0
  %v1194 = vmax.f32 %v1116, 0.0
  %v1195 = vmax.f32 %v1185, 0.0
  %v1196 = vmax.f32 %v1187, 0.0
  %1197 = vrot.lane.b32.xlu0 %v1189, 17
  %v1198 = vpop.permute.xlu0 %1197
  %1199 = vrot.lane.b32.xlu0 %v1190, 17
  %v1200 = vpop.permute.xlu0 %1199
  %1201 = vrot.lane.b32.xlu0 %v1191, 17
  %v1202 = vpop.permute.xlu0 %1201
  %1203 = vrot.lane.b32.xlu0 %v1192, 17
  %v1204 = vpop.permute.xlu0 %1203
  %1205 = vrot.lane.b32.xlu0 %v1193, 17
  %v1206 = vpop.permute.xlu0 %1205
  %1207 = vrot.lane.b32.xlu0 %v1194, 17
  %v1208 = vpop.permute.xlu0 %1207
  %1209 = vrot.lane.b32.xlu0 %v1195, 17
  %v1210 = vpop.permute.xlu0 %1209
  %1211 = vrot.lane.b32.xlu0 %v1196, 17
  %v1212 = vpop.permute.xlu0 %1211
  %v1213 = vsel %vm91, %v1210, %v1212
  %v1214 = vsel %vm91, %v1208, %v1210
  %v1215 = vsel %vm91, %v1206, %v1208
  %v1216 = vsel %vm91, %v1204, %v1206
  %v1217 = vsel %vm91, %v1202, %v1204
  %v1218 = vsel %vm91, %v1200, %v1202
  %v1219 = vsel %vm91, %v1198, %v1200
  %v1220 = vsel %vm91, %v1212, %v1198
  %v1221 = vmul.f32 %v1220, %v104
  %v1222 = vmul.f32 %v1219, %v108
  %v1223 = vmul.f32 %v1218, %v112
  %v1224 = vmul.f32 %v1217, %v116
  %v1225 = vmul.f32 %v1216, %v120
  %v1226 = vmul.f32 %v1215, %v124
  %v1227 = vmul.f32 %v1214, %v128
  %v1228 = vmul.f32 %v1213, %v132
  %1229 = vst [vmem:[#allocation2] sm:$0xf] %v1221
  %1230 = vst [vmem:[#allocation2 + $0x8] sm:$0xf] %v1222
  %1231 = vst [vmem:[#allocation2 + $0x10] sm:$0xf] %v1223
  %1232 = vst [vmem:[#allocation2 + $0x18] sm:$0xf] %v1224
  %1233 = vst [vmem:[#allocation2 + $0x20] sm:$0xf] %v1225
  %1234 = vst [vmem:[#allocation2 + $0x28] sm:$0xf] %v1226
  %1235 = vst [vmem:[#allocation2 + $0x30] sm:$0xf] %v1227
  %1236 = vst [vmem:[#allocation2 + $0x38] sm:$0xf] %v1228
  %1237 = vrot.lane.b32.xlu0 %v1189, 16
  %v1238 = vpop.permute.xlu0 %1237
  %1239 = vrot.lane.b32.xlu0 %v1190, 16
  %v1240 = vpop.permute.xlu0 %1239
  %1241 = vrot.lane.b32.xlu0 %v1191, 16
  %v1242 = vpop.permute.xlu0 %1241
  %1243 = vrot.lane.b32.xlu0 %v1192, 16
  %v1244 = vpop.permute.xlu0 %1243
  %1245 = vrot.lane.b32.xlu0 %v1193, 16
  %v1246 = vpop.permute.xlu0 %1245
  %1247 = vrot.lane.b32.xlu0 %v1194, 16
  %v1248 = vpop.permute.xlu0 %1247
  %1249 = vrot.lane.b32.xlu0 %v1195, 16
  %v1250 = vpop.permute.xlu0 %1249
  %1251 = vrot.lane.b32.xlu0 %v1196, 16
  %v1252 = vpop.permute.xlu0 %1251
  %v1253 = vsel %vm173, %v1250, %v1252
  %v1254 = vsel %vm173, %v1248, %v1250
  %v1255 = vsel %vm173, %v1246, %v1248
  %v1256 = vsel %vm173, %v1244, %v1246
  %v1257 = vsel %vm173, %v1242, %v1244
  %v1258 = vsel %vm173, %v1240, %v1242
  %v1259 = vsel %vm173, %v1238, %v1240
  %v1260 = vsel %vm173, %v1252, %v1238
  %v1261 = vmul.f32 %v1260, %v186
  %v1262 = vmul.f32 %v1259, %v190
  %v1263 = vmul.f32 %v1258, %v194
  %v1264 = vmul.f32 %v1257, %v198
  %v1265 = vmul.f32 %v1256, %v202
  %v1266 = vmul.f32 %v1255, %v206
  %v1267 = vmul.f32 %v1254, %v210
  %v1268 = vmul.f32 %v1253, %v214
  %v1277 = vrot.slane %v1261, 4
  %v1278 = vrot.slane %v1262, 4
  %v1279 = vrot.slane %v1263, 4
  %v1280 = vrot.slane %v1264, 4
  %v1281 = vrot.slane %v1265, 4
  %v1282 = vrot.slane %v1266, 4
  %v1283 = vrot.slane %v1267, 4
  %v1284 = vrot.slane %v1268, 4
  %1293 = vst [vmem:[#allocation2] sm:$0xf0] %v1277
  %1294 = vst [vmem:[#allocation2 + $0x8] sm:$0xf0] %v1278
  %1295 = vst [vmem:[#allocation2 + $0x10] sm:$0xf0] %v1279
  %1296 = vst [vmem:[#allocation2 + $0x18] sm:$0xf0] %v1280
  %1297 = vst [vmem:[#allocation2 + $0x20] sm:$0xf0] %v1281
  %1298 = vst [vmem:[#allocation2 + $0x28] sm:$0xf0] %v1282
  %1299 = vst [vmem:[#allocation2 + $0x30] sm:$0xf0] %v1283
  %1300 = vst [vmem:[#allocation2 + $0x38] sm:$0xf0] %v1284
  %1301 = vrot.lane.b32.xlu0 %v1189, 15
  %v1302 = vpop.permute.xlu0 %1301
  %1303 = vrot.lane.b32.xlu0 %v1190, 15
  %v1304 = vpop.permute.xlu0 %1303
  %1305 = vrot.lane.b32.xlu0 %v1191, 15
  %v1306 = vpop.permute.xlu0 %1305
  %1307 = vrot.lane.b32.xlu0 %v1192, 15
  %v1308 = vpop.permute.xlu0 %1307
  %1309 = vrot.lane.b32.xlu0 %v1193, 15
  %v1310 = vpop.permute.xlu0 %1309
  %1311 = vrot.lane.b32.xlu0 %v1194, 15
  %v1312 = vpop.permute.xlu0 %1311
  %1313 = vrot.lane.b32.xlu0 %v1195, 15
  %v1314 = vpop.permute.xlu0 %1313
  %1315 = vrot.lane.b32.xlu0 %v1196, 15
  %v1316 = vpop.permute.xlu0 %1315
  %v1317 = vsel %vm279, %v1314, %v1316
  %v1318 = vsel %vm279, %v1312, %v1314
  %v1319 = vsel %vm279, %v1310, %v1312
  %v1320 = vsel %vm279, %v1308, %v1310
  %v1321 = vsel %vm279, %v1306, %v1308
  %v1322 = vsel %vm279, %v1304, %v1306
  %v1323 = vsel %vm279, %v1302, %v1304
  %v1324 = vsel %vm279, %v1316, %v1302
  %v1325 = vmul.f32 %v1324, %v292
  %v1326 = vmul.f32 %v1323, %v296
  %v1327 = vmul.f32 %v1322, %v300
  %v1328 = vmul.f32 %v1321, %v304
  %v1329 = vmul.f32 %v1320, %v308
  %v1330 = vmul.f32 %v1319, %v312
  %v1331 = vmul.f32 %v1318, %v316
  %v1332 = vmul.f32 %v1317, %v320
  %1333 = vst [vmem:[#allocation2 + $0x40] sm:$0xf] %v1325
  %1334 = vst [vmem:[#allocation2 + $0x48] sm:$0xf] %v1326
  %1335 = vst [vmem:[#allocation2 + $0x50] sm:$0xf] %v1327
  %1336 = vst [vmem:[#allocation2 + $0x58] sm:$0xf] %v1328
  %1337 = vst [vmem:[#allocation2 + $0x60] sm:$0xf] %v1329
  %1338 = vst [vmem:[#allocation2 + $0x68] sm:$0xf] %v1330
  %1339 = vst [vmem:[#allocation2 + $0x70] sm:$0xf] %v1331
  %1340 = vst [vmem:[#allocation2 + $0x78] sm:$0xf] %v1332
  %1341 = vrot.lane.b32.xlu0 %v1189, 1
  %v1342 = vpop.permute.xlu0 %1341
  %1343 = vrot.lane.b32.xlu0 %v1190, 1
  %v1344 = vpop.permute.xlu0 %1343
  %1345 = vrot.lane.b32.xlu0 %v1191, 1
  %v1346 = vpop.permute.xlu0 %1345
  %1347 = vrot.lane.b32.xlu0 %v1192, 1
  %v1348 = vpop.permute.xlu0 %1347
  %1349 = vrot.lane.b32.xlu0 %v1193, 1
  %v1350 = vpop.permute.xlu0 %1349
  %1351 = vrot.lane.b32.xlu0 %v1194, 1
  %v1352 = vpop.permute.xlu0 %1351
  %1353 = vrot.lane.b32.xlu0 %v1195, 1
  %v1354 = vpop.permute.xlu0 %1353
  %1355 = vrot.lane.b32.xlu0 %v1196, 1
  %v1356 = vpop.permute.xlu0 %1355
  %v1357 = vsel %vm361, %v1354, %v1356
  %v1358 = vsel %vm361, %v1352, %v1354
  %v1359 = vsel %vm361, %v1350, %v1352
  %v1360 = vsel %vm361, %v1348, %v1350
  %v1361 = vsel %vm361, %v1346, %v1348
  %v1362 = vsel %vm361, %v1344, %v1346
  %v1363 = vsel %vm361, %v1342, %v1344
  %v1364 = vsel %vm361, %v1356, %v1342
  %v1365 = vmul.f32 %v1364, %v374
  %v1366 = vmul.f32 %v1363, %v378
  %v1367 = vmul.f32 %v1362, %v382
  %v1368 = vmul.f32 %v1361, %v386
  %v1369 = vmul.f32 %v1360, %v390
  %v1370 = vmul.f32 %v1359, %v394
  %v1371 = vmul.f32 %v1358, %v398
  %v1372 = vmul.f32 %v1357, %v402
  %v1381 = vrot.slane %v1365, 4
  %v1382 = vrot.slane %v1366, 4
  %v1383 = vrot.slane %v1367, 4
  %v1384 = vrot.slane %v1368, 4
  %v1385 = vrot.slane %v1369, 4
  %v1386 = vrot.slane %v1370, 4
  %v1387 = vrot.slane %v1371, 4
  %v1388 = vrot.slane %v1372, 4
  %1397 = vst [vmem:[#allocation2 + $0x40] sm:$0xf0] %v1381
  %1398 = vst [vmem:[#allocation2 + $0x48] sm:$0xf0] %v1382
  %1399 = vst [vmem:[#allocation2 + $0x50] sm:$0xf0] %v1383
  %1400 = vst [vmem:[#allocation2 + $0x58] sm:$0xf0] %v1384
  %1401 = vst [vmem:[#allocation2 + $0x60] sm:$0xf0] %v1385
  %1402 = vst [vmem:[#allocation2 + $0x68] sm:$0xf0] %v1386
  %1403 = vst [vmem:[#allocation2 + $0x70] sm:$0xf0] %v1387
  %1404 = vst [vmem:[#allocation2 + $0x78] sm:$0xf0] %v1388
  %1405 = vst [vmem:[#allocation2 + $0x80] sm:$0xf] %v1189
  %1406 = vst [vmem:[#allocation2 + $0x88] sm:$0xf] %v1190
  %1407 = vst [vmem:[#allocation2 + $0x90] sm:$0xf] %v1191
  %1408 = vst [vmem:[#allocation2 + $0x98] sm:$0xf] %v1192
  %1409 = vst [vmem:[#allocation2 + $0xa0] sm:$0xf] %v1193
  %1410 = vst [vmem:[#allocation2 + $0xa8] sm:$0xf] %v1194
  %1411 = vst [vmem:[#allocation2 + $0xb0] sm:$0xf] %v1195
  %1412 = vst [vmem:[#allocation2 + $0xb8] sm:$0xf] %v1196
  %1413 = vrot.lane.b32.xlu0 %v1189, 127
  %v1414 = vpop.permute.xlu0 %1413
  %1415 = vrot.lane.b32.xlu0 %v1190, 127
  %v1416 = vpop.permute.xlu0 %1415
  %1417 = vrot.lane.b32.xlu0 %v1191, 127
  %v1418 = vpop.permute.xlu0 %1417
  %1419 = vrot.lane.b32.xlu0 %v1192, 127
  %v1420 = vpop.permute.xlu0 %1419
  %1421 = vrot.lane.b32.xlu0 %v1193, 127
  %v1422 = vpop.permute.xlu0 %1421
  %1423 = vrot.lane.b32.xlu0 %v1194, 127
  %v1424 = vpop.permute.xlu0 %1423
  %1425 = vrot.lane.b32.xlu0 %v1195, 127
  %v1426 = vpop.permute.xlu0 %1425
  %1427 = vrot.lane.b32.xlu0 %v1196, 127
  %v1428 = vpop.permute.xlu0 %1427
  %v1429 = vsel %vm475, %v1426, %v1428
  %v1430 = vsel %vm475, %v1424, %v1426
  %v1431 = vsel %vm475, %v1422, %v1424
  %v1432 = vsel %vm475, %v1420, %v1422
  %v1433 = vsel %vm475, %v1418, %v1420
  %v1434 = vsel %vm475, %v1416, %v1418
  %v1435 = vsel %vm475, %v1414, %v1416
  %v1436 = vsel %vm475, %v1428, %v1414
  %v1437 = vmul.f32 %v1435, %v488
  %v1438 = vmul.f32 %v1434, %v492
  %v1439 = vmul.f32 %v1433, %v496
  %v1440 = vmul.f32 %v1432, %v500
  %v1441 = vmul.f32 %v1431, %v504
  %v1442 = vmul.f32 %v1430, %v508
  %v1443 = vmul.f32 %v1429, %v512
  %v1444 = vmul.f32 %v1436, %v516
  %v1453 = vrot.slane %v1437, 4
  %v1454 = vrot.slane %v1438, 4
  %v1455 = vrot.slane %v1439, 4
  %v1456 = vrot.slane %v1440, 4
  %v1457 = vrot.slane %v1441, 4
  %v1458 = vrot.slane %v1442, 4
  %v1459 = vrot.slane %v1443, 4
  %v1460 = vrot.slane %v1444, 4
  %1469 = vst [vmem:[#allocation2 + $0x80] sm:$0xf0] %v1453
  %1470 = vst [vmem:[#allocation2 + $0x88] sm:$0xf0] %v1454
  %1471 = vst [vmem:[#allocation2 + $0x90] sm:$0xf0] %v1455
  %1472 = vst [vmem:[#allocation2 + $0x98] sm:$0xf0] %v1456
  %1473 = vst [vmem:[#allocation2 + $0xa0] sm:$0xf0] %v1457
  %1474 = vst [vmem:[#allocation2 + $0xa8] sm:$0xf0] %v1458
  %1475 = vst [vmem:[#allocation2 + $0xb0] sm:$0xf0] %v1459
  %1476 = vst [vmem:[#allocation2 + $0xb8] sm:$0xf0] %v1460
  %1477 = vrot.lane.b32.xlu0 %v1189, 113
  %v1478 = vpop.permute.xlu0 %1477
  %1479 = vrot.lane.b32.xlu0 %v1190, 113
  %v1480 = vpop.permute.xlu0 %1479
  %1481 = vrot.lane.b32.xlu0 %v1191, 113
  %v1482 = vpop.permute.xlu0 %1481
  %1483 = vrot.lane.b32.xlu0 %v1192, 113
  %v1484 = vpop.permute.xlu0 %1483
  %1485 = vrot.lane.b32.xlu0 %v1193, 113
  %v1486 = vpop.permute.xlu0 %1485
  %1487 = vrot.lane.b32.xlu0 %v1194, 113
  %v1488 = vpop.permute.xlu0 %1487
  %1489 = vrot.lane.b32.xlu0 %v1195, 113
  %v1490 = vpop.permute.xlu0 %1489
  %1491 = vrot.lane.b32.xlu0 %v1196, 113
  %v1492 = vpop.permute.xlu0 %1491
  %v1493 = vsel %vm581, %v1490, %v1492
  %v1494 = vsel %vm581, %v1488, %v1490
  %v1495 = vsel %vm581, %v1486, %v1488
  %v1496 = vsel %vm581, %v1484, %v1486
  %v1497 = vsel %vm581, %v1482, %v1484
  %v1498 = vsel %vm581, %v1480, %v1482
  %v1499 = vsel %vm581, %v1478, %v1480
  %v1500 = vsel %vm581, %v1492, %v1478
  %v1501 = vmul.f32 %v1499, %v594
  %v1502 = vmul.f32 %v1498, %v598
  %v1503 = vmul.f32 %v1497, %v602
  %v1504 = vmul.f32 %v1496, %v606
  %v1505 = vmul.f32 %v1495, %v610
  %v1506 = vmul.f32 %v1494, %v614
  %v1507 = vmul.f32 %v1493, %v618
  %v1508 = vmul.f32 %v1500, %v622
  %1509 = vst [vmem:[#allocation2 + $0xc0] sm:$0xf] %v1501
  %1510 = vst [vmem:[#allocation2 + $0xc8] sm:$0xf] %v1502
  %1511 = vst [vmem:[#allocation2 + $0xd0] sm:$0xf] %v1503
  %1512 = vst [vmem:[#allocation2 + $0xd8] sm:$0xf] %v1504
  %1513 = vst [vmem:[#allocation2 + $0xe0] sm:$0xf] %v1505
  %1514 = vst [vmem:[#allocation2 + $0xe8] sm:$0xf] %v1506
  %1515 = vst [vmem:[#allocation2 + $0xf0] sm:$0xf] %v1507
  %1516 = vst [vmem:[#allocation2 + $0xf8] sm:$0xf] %v1508
  %1517 = vrot.lane.b32.xlu0 %v1189, 112
  %v1518 = vpop.permute.xlu0 %1517
  %1519 = vrot.lane.b32.xlu0 %v1190, 112
  %v1520 = vpop.permute.xlu0 %1519
  %1521 = vrot.lane.b32.xlu0 %v1191, 112
  %v1522 = vpop.permute.xlu0 %1521
  %1523 = vrot.lane.b32.xlu0 %v1192, 112
  %v1524 = vpop.permute.xlu0 %1523
  %1525 = vrot.lane.b32.xlu0 %v1193, 112
  %v1526 = vpop.permute.xlu0 %1525
  %1527 = vrot.lane.b32.xlu0 %v1194, 112
  %v1528 = vpop.permute.xlu0 %1527
  %1529 = vrot.lane.b32.xlu0 %v1195, 112
  %v1530 = vpop.permute.xlu0 %1529
  %1531 = vrot.lane.b32.xlu0 %v1196, 112
  %v1532 = vpop.permute.xlu0 %1531
  %v1533 = vsel %vm663, %v1530, %v1532
  %v1534 = vsel %vm663, %v1528, %v1530
  %v1535 = vsel %vm663, %v1526, %v1528
  %v1536 = vsel %vm663, %v1524, %v1526
  %v1537 = vsel %vm663, %v1522, %v1524
  %v1538 = vsel %vm663, %v1520, %v1522
  %v1539 = vsel %vm663, %v1518, %v1520
  %v1540 = vsel %vm663, %v1532, %v1518
  %v1541 = vmul.f32 %v1539, %v676
  %v1542 = vmul.f32 %v1538, %v680
  %v1543 = vmul.f32 %v1537, %v684
  %v1544 = vmul.f32 %v1536, %v688
  %v1545 = vmul.f32 %v1535, %v692
  %v1546 = vmul.f32 %v1534, %v696
  %v1547 = vmul.f32 %v1533, %v700
  %v1548 = vmul.f32 %v1540, %v704
  %v1557 = vrot.slane %v1541, 4
  %v1558 = vrot.slane %v1542, 4
  %v1559 = vrot.slane %v1543, 4
  %v1560 = vrot.slane %v1544, 4
  %v1561 = vrot.slane %v1545, 4
  %v1562 = vrot.slane %v1546, 4
  %v1563 = vrot.slane %v1547, 4
  %v1564 = vrot.slane %v1548, 4
  %1573 = vst [vmem:[#allocation2 + $0xc0] sm:$0xf0] %v1557
  %1574 = vst [vmem:[#allocation2 + $0xc8] sm:$0xf0] %v1558
  %1575 = vst [vmem:[#allocation2 + $0xd0] sm:$0xf0] %v1559
  %1576 = vst [vmem:[#allocation2 + $0xd8] sm:$0xf0] %v1560
  %1577 = vst [vmem:[#allocation2 + $0xe0] sm:$0xf0] %v1561
  %1578 = vst [vmem:[#allocation2 + $0xe8] sm:$0xf0] %v1562
  %1579 = vst [vmem:[#allocation2 + $0xf0] sm:$0xf0] %v1563
  %1580 = vst [vmem:[#allocation2 + $0xf8] sm:$0xf0] %v1564
  %1581 = vrot.lane.b32.xlu0 %v1189, 111
  %v1582 = vpop.permute.xlu0 %1581
  %1583 = vrot.lane.b32.xlu0 %v1190, 111
  %v1584 = vpop.permute.xlu0 %1583
  %1585 = vrot.lane.b32.xlu0 %v1191, 111
  %v1586 = vpop.permute.xlu0 %1585
  %1587 = vrot.lane.b32.xlu0 %v1192, 111
  %v1588 = vpop.permute.xlu0 %1587
  %1589 = vrot.lane.b32.xlu0 %v1193, 111
  %v1590 = vpop.permute.xlu0 %1589
  %1591 = vrot.lane.b32.xlu0 %v1194, 111
  %v1592 = vpop.permute.xlu0 %1591
  %1593 = vrot.lane.b32.xlu0 %v1195, 111
  %v1594 = vpop.permute.xlu0 %1593
  %1595 = vrot.lane.b32.xlu0 %v1196, 111
  %v1596 = vpop.permute.xlu0 %1595
  %v1597 = vsel %vm769, %v1594, %v1596
  %v1598 = vsel %vm769, %v1592, %v1594
  %v1599 = vsel %vm769, %v1590, %v1592
  %v1600 = vsel %vm769, %v1588, %v1590
  %v1601 = vsel %vm769, %v1586, %v1588
  %v1602 = vsel %vm769, %v1584, %v1586
  %v1603 = vsel %vm769, %v1582, %v1584
  %v1604 = vsel %vm769, %v1596, %v1582
  %v1605 = vmul.f32 %v1603, %v782
  %v1606 = vmul.f32 %v1602, %v786
  %v1607 = vmul.f32 %v1601, %v790
  %v1608 = vmul.f32 %v1600, %v794
  %v1609 = vmul.f32 %v1599, %v798
  %v1610 = vmul.f32 %v1598, %v802
  %v1611 = vmul.f32 %v1597, %v806
  %v1612 = vmul.f32 %v1604, %v810
  %1613 = vst [vmem:[#allocation2 + $0x100] sm:$0xf] %v1605
  %1614 = vst [vmem:[#allocation2 + $0x108] sm:$0xf] %v1606
  %1615 = vst [vmem:[#allocation2 + $0x110] sm:$0xf] %v1607
  %1616 = vst [vmem:[#allocation2 + $0x118] sm:$0xf] %v1608
  %1617 = vst [vmem:[#allocation2 + $0x120] sm:$0xf] %v1609
  %1618 = vst [vmem:[#allocation2 + $0x128] sm:$0xf] %v1610
  %1619 = vst [vmem:[#allocation2 + $0x130] sm:$0xf] %v1611
  %1620 = vst [vmem:[#allocation2 + $0x138] sm:$0xf] %v1612
  %v1621 = vld [vmem:[%s2] sm:$0xf]
  %v1622 = vld [vmem:[#allocation2] sm:$0xff]
  %v1623 = vld [vmem:[#allocation2 + $0x8] sm:$0xff]
  %v1624 = vld [vmem:[#allocation2 + $0x10] sm:$0xff]
  %v1625 = vld [vmem:[#allocation2 + $0x18] sm:$0xff]
  %v1626 = vld [vmem:[#allocation2 + $0x20] sm:$0xff]
  %v1627 = vld [vmem:[#allocation2 + $0x28] sm:$0xff]
  %v1628 = vld [vmem:[#allocation2 + $0x30] sm:$0xff]
  %v1629 = vld [vmem:[#allocation2 + $0x38] sm:$0xff]
  %v1630 = vld [vmem:[#allocation2 + $0x40] sm:$0xff]
  %v1631 = vld [vmem:[#allocation2 + $0x48] sm:$0xff]
  %v1632 = vld [vmem:[#allocation2 + $0x50] sm:$0xff]
  %v1633 = vld [vmem:[#allocation2 + $0x58] sm:$0xff]
  %v1634 = vld [vmem:[#allocation2 + $0x60] sm:$0xff]
  %v1635 = vld [vmem:[#allocation2 + $0x68] sm:$0xff]
  %v1636 = vld [vmem:[#allocation2 + $0x70] sm:$0xff]
  %v1637 = vld [vmem:[#allocation2 + $0x78] sm:$0xff]
  %v1638 = vld [vmem:[#allocation2 + $0x80] sm:$0xff]
  %v1639 = vld [vmem:[#allocation2 + $0x88] sm:$0xff]
  %v1640 = vld [vmem:[#allocation2 + $0x90] sm:$0xff]
  %v1641 = vld [vmem:[#allocation2 + $0x98] sm:$0xff]
  %v1642 = vld [vmem:[#allocation2 + $0xa0] sm:$0xff]
  %v1643 = vld [vmem:[#allocation2 + $0xa8] sm:$0xff]
  %v1644 = vld [vmem:[#allocation2 + $0xb0] sm:$0xff]
  %v1645 = vld [vmem:[#allocation2 + $0xb8] sm:$0xff]
  %v1646 = vld [vmem:[#allocation2 + $0xc0] sm:$0xff]
  %v1647 = vld [vmem:[#allocation2 + $0xc8] sm:$0xff]
  %v1648 = vld [vmem:[#allocation2 + $0xd0] sm:$0xff]
  %v1649 = vld [vmem:[#allocation2 + $0xd8] sm:$0xff]
  %v1650 = vld [vmem:[#allocation2 + $0xe0] sm:$0xff]
  %v1651 = vld [vmem:[#allocation2 + $0xe8] sm:$0xff]
  %v1652 = vld [vmem:[#allocation2 + $0xf0] sm:$0xff]
  %v1653 = vld [vmem:[#allocation2 + $0xf8] sm:$0xff]
  %v1654 = vld [vmem:[#allocation2 + $0x100] sm:$0x1f]
  %v1655 = vld [vmem:[#allocation2 + $0x108] sm:$0x1f]
  %v1656 = vld [vmem:[#allocation2 + $0x110] sm:$0x1f]
  %v1657 = vld [vmem:[#allocation2 + $0x118] sm:$0x1f]
  %v1658 = vld [vmem:[#allocation2 + $0x120] sm:$0x1f]
  %v1659 = vld [vmem:[#allocation2 + $0x128] sm:$0x1f]
  %v1660 = vld [vmem:[#allocation2 + $0x130] sm:$0x1f]
  %v1661 = vld [vmem:[#allocation2 + $0x138] sm:$0x1f]
  %v1663 = vsel %vm876, %v1621, 0
  %v1666 = vsel %vm880, %v1654, 0
  %v1669 = vsel %vm880, %v1655, 0
  %v1672 = vsel %vm880, %v1656, 0
  %v1675 = vsel %vm880, %v1657, 0
  %v1678 = vsel %vm880, %v1658, 0
  %v1681 = vsel %vm880, %v1659, 0
  %v1684 = vsel %vm880, %v1660, 0
  %v1687 = vsel %vm880, %v1661, 0
  %1689 = vmatprep.subr.mxu0 0.0
  %1690 = vmatpush1.msra.mxu0 0.0
  %1691 = vmatprep.subr.mxu0 0.0
  %1692 = vmatpush1.msra.mxu0 0.0
  %1693 = vmatprep.subr.mxu0 0.0
  %1694 = vmatpush1.msra.mxu0 0.0
  %1695 = vmatprep.subr.mxu0 0.0
  %1696 = vmatpush1.msra.mxu0 0.0
  %1697 = vmatprep.subr.mxu0 0.0
  %1698 = vmatpush1.msra.mxu0 0.0
  %1699 = vmatprep.subr.mxu0 0.0
  %1700 = vmatpush1.msra.mxu0 0.0
  %1701 = vmatprep.subr.mxu0 0.0
  %1702 = vmatpush1.msra.mxu0 0.0
  %1703 = vmatprep.subr.mxu0 0.0
  %1704 = vmatpush1.msra.mxu0 0.0
  %1705 = vmatprep.subr.mxu0 0.0
  %1706 = vmatpush1.msra.mxu0 0.0
  %1707 = vmatprep.subr.mxu0 0.0
  %1708 = vmatpush1.msra.mxu0 0.0
  %1709 = vmatprep.subr.mxu0 0.0
  %1710 = vmatpush1.msra.mxu0 0.0
  %1711 = vmatprep.subr.mxu0 %v1669
  %1712 = vmatpush1.msra.mxu0 %v1666
  %1713 = vmatprep.subr.mxu0 %v1647
  %1714 = vmatpush1.msra.mxu0 %v1646
  %1715 = vmatprep.subr.mxu0 %v1639
  %1716 = vmatpush1.msra.mxu0 %v1638
  %1717 = vmatprep.subr.mxu0 %v1631
  %1718 = vmatpush1.msra.mxu0 %v1630
  %1719 = vmatprep.subr.mxu0 %v1623
  %1720 = vmatpush1.msra.mxu0 %v1622
  %1721 = vmatprep.subr.mxu0 0.0
  %1722 = vmatpush2.msra.mxu0 0.0
  %1723 = vmatprep.subr.mxu0 0.0
  %1724 = vmatpush2.msra.mxu0 0.0
  %1725 = vmatprep.subr.mxu0 0.0
  %1726 = vmatpush2.msra.mxu0 0.0
  %1727 = vmatprep.subr.mxu0 0.0
  %1728 = vmatpush2.msra.mxu0 0.0
  %1729 = vmatprep.subr.mxu0 0.0
  %1730 = vmatpush2.msra.mxu0 0.0
  %1731 = vmatprep.subr.mxu0 0.0
  %1732 = vmatpush2.msra.mxu0 0.0
  %1733 = vmatprep.subr.mxu0 0.0
  %1734 = vmatpush2.msra.mxu0 0.0
  %1735 = vmatprep.subr.mxu0 0.0
  %1736 = vmatpush2.msra.mxu0 0.0
  %1737 = vmatprep.subr.mxu0 0.0
  %1738 = vmatpush2.msra.mxu0 0.0
  %1739 = vmatprep.subr.mxu0 0.0
  %1740 = vmatpush2.msra.mxu0 0.0
  %1741 = vmatprep.subr.mxu0 0.0
  %1742 = vmatpush2.msra.mxu0 0.0
  %1743 = vmatprep.subr.mxu0 0.0
  %1744 = vmatpush2.msra.mxu0 0.0
  %1745 = vmatprep.subr.mxu0 0.0
  %1746 = vmatpush2.msra.mxu0 0.0
  %1747 = vmatprep.subr.mxu0 0.0
  %1748 = vmatpush2.msra.mxu0 0.0
  %1749 = vmatprep.subr.mxu0 0.0
  %1750 = vmatpush2.msra.mxu0 0.0
  %1751 = vmatprep.subr.mxu0 0.0
  %1752 = vmatpush2.msra.mxu0 0.0
  %1753 = vmatprep.mubr.f32.mxu0 0.0
  %1754 = vmatmul.mubr.f32.gmra.mxu0 %v1663
  %v1755 = vpop.f32.mrf.mxu0
  %v1756 = vadd.f32 0.0, %v1755
  %v1757 = vpop.f32.mrf.mxu0
  %v1758 = vadd.f32 0.0, %v1757
  %1759 = vdwg.mxu0
  %1760 = vmatprep.subr.mxu0 0.0
  %1761 = vmatpush1.msra.mxu0 0.0
  %1762 = vmatprep.subr.mxu0 0.0
  %1763 = vmatpush1.msra.mxu0 0.0
  %1764 = vmatprep.subr.mxu0 0.0
  %1765 = vmatpush1.msra.mxu0 0.0
  %1766 = vmatprep.subr.mxu0 0.0
  %1767 = vmatpush1.msra.mxu0 0.0
  %1768 = vmatprep.subr.mxu0 0.0
  %1769 = vmatpush1.msra.mxu0 0.0
  %1770 = vmatprep.subr.mxu0 0.0
  %1771 = vmatpush1.msra.mxu0 0.0
  %1772 = vmatprep.subr.mxu0 0.0
  %1773 = vmatpush1.msra.mxu0 0.0
  %1774 = vmatprep.subr.mxu0 0.0
  %1775 = vmatpush1.msra.mxu0 0.0
  %1776 = vmatprep.subr.mxu0 0.0
  %1777 = vmatpush1.msra.mxu0 0.0
  %1778 = vmatprep.subr.mxu0 0.0
  %1779 = vmatpush1.msra.mxu0 0.0
  %1780 = vmatprep.subr.mxu0 0.0
  %1781 = vmatpush1.msra.mxu0 0.0
  %1782 = vmatprep.subr.mxu0 %v1675
  %1783 = vmatpush1.msra.mxu0 %v1672
  %1784 = vmatprep.subr.mxu0 %v1649
  %1785 = vmatpush1.msra.mxu0 %v1648
  %1786 = vmatprep.subr.mxu0 %v1641
  %1787 = vmatpush1.msra.mxu0 %v1640
  %1788 = vmatprep.subr.mxu0 %v1633
  %1789 = vmatpush1.msra.mxu0 %v1632
  %1790 = vmatprep.subr.mxu0 %v1625
  %1791 = vmatpush1.msra.mxu0 %v1624
  %1792 = vmatprep.subr.mxu0 0.0
  %1793 = vmatpush2.msra.mxu0 0.0
  %1794 = vmatprep.subr.mxu0 0.0
  %1795 = vmatpush2.msra.mxu0 0.0
  %1796 = vmatprep.subr.mxu0 0.0
  %1797 = vmatpush2.msra.mxu0 0.0
  %1798 = vmatprep.subr.mxu0 0.0
  %1799 = vmatpush2.msra.mxu0 0.0
  %1800 = vmatprep.subr.mxu0 0.0
  %1801 = vmatpush2.msra.mxu0 0.0
  %1802 = vmatprep.subr.mxu0 0.0
  %1803 = vmatpush2.msra.mxu0 0.0
  %1804 = vmatprep.subr.mxu0 0.0
  %1805 = vmatpush2.msra.mxu0 0.0
  %1806 = vmatprep.subr.mxu0 0.0
  %1807 = vmatpush2.msra.mxu0 0.0
  %1808 = vmatprep.subr.mxu0 0.0
  %1809 = vmatpush2.msra.mxu0 0.0
  %1810 = vmatprep.subr.mxu0 0.0
  %1811 = vmatpush2.msra.mxu0 0.0
  %1812 = vmatprep.subr.mxu0 0.0
  %1813 = vmatpush2.msra.mxu0 0.0
  %1814 = vmatprep.subr.mxu0 0.0
  %1815 = vmatpush2.msra.mxu0 0.0
  %1816 = vmatprep.subr.mxu0 0.0
  %1817 = vmatpush2.msra.mxu0 0.0
  %1818 = vmatprep.subr.mxu0 0.0
  %1819 = vmatpush2.msra.mxu0 0.0
  %1820 = vmatprep.subr.mxu0 0.0
  %1821 = vmatpush2.msra.mxu0 0.0
  %1822 = vmatprep.subr.mxu0 0.0
  %1823 = vmatpush2.msra.mxu0 0.0
  %1824 = vmatprep.mubr.f32.mxu0 0.0
  %1825 = vmatmul.mubr.f32.gmra.mxu0 %v1663
  %v1826 = vpop.f32.mrf.mxu0
  %v1827 = vadd.f32 0.0, %v1826
  %v1828 = vpop.f32.mrf.mxu0
  %v1829 = vadd.f32 0.0, %v1828
  %1830 = vdwg.mxu0
  %1831 = vmatprep.subr.mxu0 0.0
  %1832 = vmatpush1.msra.mxu0 0.0
  %1833 = vmatprep.subr.mxu0 0.0
  %1834 = vmatpush1.msra.mxu0 0.0
  %1835 = vmatprep.subr.mxu0 0.0
  %1836 = vmatpush1.msra.mxu0 0.0
  %1837 = vmatprep.subr.mxu0 0.0
  %1838 = vmatpush1.msra.mxu0 0.0
  %1839 = vmatprep.subr.mxu0 0.0
  %1840 = vmatpush1.msra.mxu0 0.0
  %1841 = vmatprep.subr.mxu0 0.0
  %1842 = vmatpush1.msra.mxu0 0.0
  %1843 = vmatprep.subr.mxu0 0.0
  %1844 = vmatpush1.msra.mxu0 0.0
  %1845 = vmatprep.subr.mxu0 0.0
  %1846 = vmatpush1.msra.mxu0 0.0
  %1847 = vmatprep.subr.mxu0 0.0
  %1848 = vmatpush1.msra.mxu0 0.0
  %1849 = vmatprep.subr.mxu0 0.0
  %1850 = vmatpush1.msra.mxu0 0.0
  %1851 = vmatprep.subr.mxu0 0.0
  %1852 = vmatpush1.msra.mxu0 0.0
  %1853 = vmatprep.subr.mxu0 %v1681
  %1854 = vmatpush1.msra.mxu0 %v1678
  %1855 = vmatprep.subr.mxu0 %v1651
  %1856 = vmatpush1.msra.mxu0 %v1650
  %1857 = vmatprep.subr.mxu0 %v1643
  %1858 = vmatpush1.msra.mxu0 %v1642
  %1859 = vmatprep.subr.mxu0 %v1635
  %1860 = vmatpush1.msra.mxu0 %v1634
  %1861 = vmatprep.subr.mxu0 %v1627
  %1862 = vmatpush1.msra.mxu0 %v1626
  %1863 = vmatprep.subr.mxu0 0.0
  %1864 = vmatpush2.msra.mxu0 0.0
  %1865 = vmatprep.subr.mxu0 0.0
  %1866 = vmatpush2.msra.mxu0 0.0
  %1867 = vmatprep.subr.mxu0 0.0
  %1868 = vmatpush2.msra.mxu0 0.0
  %1869 = vmatprep.subr.mxu0 0.0
  %1870 = vmatpush2.msra.mxu0 0.0
  %1871 = vmatprep.subr.mxu0 0.0
  %1872 = vmatpush2.msra.mxu0 0.0
  %1873 = vmatprep.subr.mxu0 0.0
  %1874 = vmatpush2.msra.mxu0 0.0
  %1875 = vmatprep.subr.mxu0 0.0
  %1876 = vmatpush2.msra.mxu0 0.0
  %1877 = vmatprep.subr.mxu0 0.0
  %1878 = vmatpush2.msra.mxu0 0.0
  %1879 = vmatprep.subr.mxu0 0.0
  %1880 = vmatpush2.msra.mxu0 0.0
  %1881 = vmatprep.subr.mxu0 0.0
  %1882 = vmatpush2.msra.mxu0 0.0
  %1883 = vmatprep.subr.mxu0 0.0
  %1884 = vmatpush2.msra.mxu0 0.0
  %1885 = vmatprep.subr.mxu0 0.0
  %1886 = vmatpush2.msra.mxu0 0.0
  %1887 = vmatprep.subr.mxu0 0.0
  %1888 = vmatpush2.msra.mxu0 0.0
  %1889 = vmatprep.subr.mxu0 0.0
  %1890 = vmatpush2.msra.mxu0 0.0
  %1891 = vmatprep.subr.mxu0 0.0
  %1892 = vmatpush2.msra.mxu0 0.0
  %1893 = vmatprep.subr.mxu0 0.0
  %1894 = vmatpush2.msra.mxu0 0.0
  %1895 = vmatprep.mubr.f32.mxu0 0.0
  %1896 = vmatmul.mubr.f32.gmra.mxu0 %v1663
  %v1897 = vpop.f32.mrf.mxu0
  %v1898 = vadd.f32 0.0, %v1897
  %v1899 = vpop.f32.mrf.mxu0
  %v1900 = vadd.f32 0.0, %v1899
  %1901 = vdwg.mxu0
  %1902 = vmatprep.subr.mxu0 0.0
  %1903 = vmatpush1.msra.mxu0 0.0
  %1904 = vmatprep.subr.mxu0 0.0
  %1905 = vmatpush1.msra.mxu0 0.0
  %1906 = vmatprep.subr.mxu0 0.0
  %1907 = vmatpush1.msra.mxu0 0.0
  %1908 = vmatprep.subr.mxu0 0.0
  %1909 = vmatpush1.msra.mxu0 0.0
  %1910 = vmatprep.subr.mxu0 0.0
  %1911 = vmatpush1.msra.mxu0 0.0
  %1912 = vmatprep.subr.mxu0 0.0
  %1913 = vmatpush1.msra.mxu0 0.0
  %1914 = vmatprep.subr.mxu0 0.0
  %1915 = vmatpush1.msra.mxu0 0.0
  %1916 = vmatprep.subr.mxu0 0.0
  %1917 = vmatpush1.msra.mxu0 0.0
  %1918 = vmatprep.subr.mxu0 0.0
  %1919 = vmatpush1.msra.mxu0 0.0
  %1920 = vmatprep.subr.mxu0 0.0
  %1921 = vmatpush1.msra.mxu0 0.0
  %1922 = vmatprep.subr.mxu0 0.0
  %1923 = vmatpush1.msra.mxu0 0.0
  %1924 = vmatprep.subr.mxu0 %v1687
  %1925 = vmatpush1.msra.mxu0 %v1684
  %1926 = vmatprep.subr.mxu0 %v1653
  %1927 = vmatpush1.msra.mxu0 %v1652
  %1928 = vmatprep.subr.mxu0 %v1645
  %1929 = vmatpush1.msra.mxu0 %v1644
  %1930 = vmatprep.subr.mxu0 %v1637
  %1931 = vmatpush1.msra.mxu0 %v1636
  %1932 = vmatprep.subr.mxu0 %v1629
  %1933 = vmatpush1.msra.mxu0 %v1628
  %1934 = vmatprep.subr.mxu0 0.0
  %1935 = vmatpush2.msra.mxu0 0.0
  %1936 = vmatprep.subr.mxu0 0.0
  %1937 = vmatpush2.msra.mxu0 0.0
  %1938 = vmatprep.subr.mxu0 0.0
  %1939 = vmatpush2.msra.mxu0 0.0
  %1940 = vmatprep.subr.mxu0 0.0
  %1941 = vmatpush2.msra.mxu0 0.0
  %1942 = vmatprep.subr.mxu0 0.0
  %1943 = vmatpush2.msra.mxu0 0.0
  %1944 = vmatprep.subr.mxu0 0.0
  %1945 = vmatpush2.msra.mxu0 0.0
  %1946 = vmatprep.subr.mxu0 0.0
  %1947 = vmatpush2.msra.mxu0 0.0
  %1948 = vmatprep.subr.mxu0 0.0
  %1949 = vmatpush2.msra.mxu0 0.0
  %1950 = vmatprep.subr.mxu0 0.0
  %1951 = vmatpush2.msra.mxu0 0.0
  %1952 = vmatprep.subr.mxu0 0.0
  %1953 = vmatpush2.msra.mxu0 0.0
  %1954 = vmatprep.subr.mxu0 0.0
  %1955 = vmatpush2.msra.mxu0 0.0
  %1956 = vmatprep.subr.mxu0 0.0
  %1957 = vmatpush2.msra.mxu0 0.0
  %1958 = vmatprep.subr.mxu0 0.0
  %1959 = vmatpush2.msra.mxu0 0.0
  %1960 = vmatprep.subr.mxu0 0.0
  %1961 = vmatpush2.msra.mxu0 0.0
  %1962 = vmatprep.subr.mxu0 0.0
  %1963 = vmatpush2.msra.mxu0 0.0
  %1964 = vmatprep.subr.mxu0 0.0
  %1965 = vmatpush2.msra.mxu0 0.0
  %1966 = vmatprep.mubr.f32.mxu0 0.0
  %1967 = vmatmul.mubr.f32.gmra.mxu0 %v1663
  %v1968 = vpop.f32.mrf.mxu0
  %v1969 = vadd.f32 0.0, %v1968
  %v1970 = vpop.f32.mrf.mxu0
  %v1971 = vadd.f32 0.0, %v1970
  %1972 = vdwg.mxu0
  %v1973 = vmax.f32 %v1756, 0.0
  %v1974 = vmax.f32 %v1758, 0.0
  %v1975 = vmax.f32 %v1827, 0.0
  %v1976 = vmax.f32 %v1829, 0.0
  %v1977 = vmax.f32 %v1898, 0.0
  %v1978 = vmax.f32 %v1900, 0.0
  %v1979 = vmax.f32 %v1969, 0.0
  %v1980 = vmax.f32 %v1971, 0.0
  %v1981 = vadd.f32 %v1973, %v1189
  %v1982 = vadd.f32 %v1974, %v1190
  %v1983 = vadd.f32 %v1975, %v1191
  %v1984 = vadd.f32 %v1976, %v1192
  %v1985 = vadd.f32 %v1977, %v1193
  %v1986 = vadd.f32 %v1978, %v1194
  %v1987 = vadd.f32 %v1979, %v1195
  %v1988 = vadd.f32 %v1980, %v1196
  %1989 = vrot.lane.b32.xlu0 %v1981, 17
  %v1990 = vpop.permute.xlu0 %1989
  %1991 = vrot.lane.b32.xlu0 %v1982, 17
  %v1992 = vpop.permute.xlu0 %1991
  %1993 = vrot.lane.b32.xlu0 %v1983, 17
  %v1994 = vpop.permute.xlu0 %1993
  %1995 = vrot.lane.b32.xlu0 %v1984, 17
  %v1996 = vpop.permute.xlu0 %1995
  %1997 = vrot.lane.b32.xlu0 %v1985, 17
  %v1998 = vpop.permute.xlu0 %1997
  %1999 = vrot.lane.b32.xlu0 %v1986, 17
  %v2000 = vpop.permute.xlu0 %1999
  %2001 = vrot.lane.b32.xlu0 %v1987, 17
  %v2002 = vpop.permute.xlu0 %2001
  %2003 = vrot.lane.b32.xlu0 %v1988, 17
  %v2004 = vpop.permute.xlu0 %2003
  %v2005 = vsel %vm91, %v2002, %v2004
  %v2006 = vsel %vm91, %v2000, %v2002
  %v2007 = vsel %vm91, %v1998, %v2000
  %v2008 = vsel %vm91, %v1996, %v1998
  %v2009 = vsel %vm91, %v1994, %v1996
  %v2010 = vsel %vm91, %v1992, %v1994
  %v2011 = vsel %vm91, %v1990, %v1992
  %v2012 = vsel %vm91, %v2004, %v1990
  %v2013 = vmul.f32 %v2012, %v104
  %v2014 = vmul.f32 %v2011, %v108
  %v2015 = vmul.f32 %v2010, %v112
  %v2016 = vmul.f32 %v2009, %v116
  %v2017 = vmul.f32 %v2008, %v120
  %v2018 = vmul.f32 %v2007, %v124
  %v2019 = vmul.f32 %v2006, %v128
  %v2020 = vmul.f32 %v2005, %v132
  %2021 = vst [vmem:[#allocation2] sm:$0xf] %v2013
  %2022 = vst [vmem:[#allocation2 + $0x8] sm:$0xf] %v2014
  %2023 = vst [vmem:[#allocation2 + $0x10] sm:$0xf] %v2015
  %2024 = vst [vmem:[#allocation2 + $0x18] sm:$0xf] %v2016
  %2025 = vst [vmem:[#allocation2 + $0x20] sm:$0xf] %v2017
  %2026 = vst [vmem:[#allocation2 + $0x28] sm:$0xf] %v2018
  %2027 = vst [vmem:[#allocation2 + $0x30] sm:$0xf] %v2019
  %2028 = vst [vmem:[#allocation2 + $0x38] sm:$0xf] %v2020
  %2029 = vrot.lane.b32.xlu0 %v1981, 16
  %v2030 = vpop.permute.xlu0 %2029
  %2031 = vrot.lane.b32.xlu0 %v1982, 16
  %v2032 = vpop.permute.xlu0 %2031
  %2033 = vrot.lane.b32.xlu0 %v1983, 16
  %v2034 = vpop.permute.xlu0 %2033
  %2035 = vrot.lane.b32.xlu0 %v1984, 16
  %v2036 = vpop.permute.xlu0 %2035
  %2037 = vrot.lane.b32.xlu0 %v1985, 16
  %v2038 = vpop.permute.xlu0 %2037
  %2039 = vrot.lane.b32.xlu0 %v1986, 16
  %v2040 = vpop.permute.xlu0 %2039
  %2041 = vrot.lane.b32.xlu0 %v1987, 16
  %v2042 = vpop.permute.xlu0 %2041
  %2043 = vrot.lane.b32.xlu0 %v1988, 16
  %v2044 = vpop.permute.xlu0 %2043
  %v2045 = vsel %vm173, %v2042, %v2044
  %v2046 = vsel %vm173, %v2040, %v2042
  %v2047 = vsel %vm173, %v2038, %v2040
  %v2048 = vsel %vm173, %v2036, %v2038
  %v2049 = vsel %vm173, %v2034, %v2036
  %v2050 = vsel %vm173, %v2032, %v2034
  %v2051 = vsel %vm173, %v2030, %v2032
  %v2052 = vsel %vm173, %v2044, %v2030
  %v2053 = vmul.f32 %v2052, %v186
  %v2054 = vmul.f32 %v2051, %v190
  %v2055 = vmul.f32 %v2050, %v194
  %v2056 = vmul.f32 %v2049, %v198
  %v2057 = vmul.f32 %v2048, %v202
  %v2058 = vmul.f32 %v2047, %v206
  %v2059 = vmul.f32 %v2046, %v210
  %v2060 = vmul.f32 %v2045, %v214
  %v2069 = vrot.slane %v2053, 4
  %v2070 = vrot.slane %v2054, 4
  %v2071 = vrot.slane %v2055, 4
  %v2072 = vrot.slane %v2056, 4
  %v2073 = vrot.slane %v2057, 4
  %v2074 = vrot.slane %v2058, 4
  %v2075 = vrot.slane %v2059, 4
  %v2076 = vrot.slane %v2060, 4
  %2085 = vst [vmem:[#allocation2] sm:$0xf0] %v2069
  %2086 = vst [vmem:[#allocation2 + $0x8] sm:$0xf0] %v2070
  %2087 = vst [vmem:[#allocation2 + $0x10] sm:$0xf0] %v2071
  %2088 = vst [vmem:[#allocation2 + $0x18] sm:$0xf0] %v2072
  %2089 = vst [vmem:[#allocation2 + $0x20] sm:$0xf0] %v2073
  %2090 = vst [vmem:[#allocation2 + $0x28] sm:$0xf0] %v2074
  %2091 = vst [vmem:[#allocation2 + $0x30] sm:$0xf0] %v2075
  %2092 = vst [vmem:[#allocation2 + $0x38] sm:$0xf0] %v2076
  %2093 = vrot.lane.b32.xlu0 %v1981, 15
  %v2094 = vpop.permute.xlu0 %2093
  %2095 = vrot.lane.b32.xlu0 %v1982, 15
  %v2096 = vpop.permute.xlu0 %2095
  %2097 = vrot.lane.b32.xlu0 %v1983, 15
  %v2098 = vpop.permute.xlu0 %2097
  %2099 = vrot.lane.b32.xlu0 %v1984, 15
  %v2100 = vpop.permute.xlu0 %2099
  %2101 = vrot.lane.b32.xlu0 %v1985, 15
  %v2102 = vpop.permute.xlu0 %2101
  %2103 = vrot.lane.b32.xlu0 %v1986, 15
  %v2104 = vpop.permute.xlu0 %2103
  %2105 = vrot.lane.b32.xlu0 %v1987, 15
  %v2106 = vpop.permute.xlu0 %2105
  %2107 = vrot.lane.b32.xlu0 %v1988, 15
  %v2108 = vpop.permute.xlu0 %2107
  %v2109 = vsel %vm279, %v2106, %v2108
  %v2110 = vsel %vm279, %v2104, %v2106
  %v2111 = vsel %vm279, %v2102, %v2104
  %v2112 = vsel %vm279, %v2100, %v2102
  %v2113 = vsel %vm279, %v2098, %v2100
  %v2114 = vsel %vm279, %v2096, %v2098
  %v2115 = vsel %vm279, %v2094, %v2096
  %v2116 = vsel %vm279, %v2108, %v2094
  %v2117 = vmul.f32 %v2116, %v292
  %v2118 = vmul.f32 %v2115, %v296
  %v2119 = vmul.f32 %v2114, %v300
  %v2120 = vmul.f32 %v2113, %v304
  %v2121 = vmul.f32 %v2112, %v308
  %v2122 = vmul.f32 %v2111, %v312
  %v2123 = vmul.f32 %v2110, %v316
  %v2124 = vmul.f32 %v2109, %v320
  %2125 = vst [vmem:[#allocation2 + $0x40] sm:$0xf] %v2117
  %2126 = vst [vmem:[#allocation2 + $0x48] sm:$0xf] %v2118
  %2127 = vst [vmem:[#allocation2 + $0x50] sm:$0xf] %v2119
  %2128 = vst [vmem:[#allocation2 + $0x58] sm:$0xf] %v2120
  %2129 = vst [vmem:[#allocation2 + $0x60] sm:$0xf] %v2121
  %2130 = vst [vmem:[#allocation2 + $0x68] sm:$0xf] %v2122
  %2131 = vst [vmem:[#allocation2 + $0x70] sm:$0xf] %v2123
  %2132 = vst [vmem:[#allocation2 + $0x78] sm:$0xf] %v2124
  %2133 = vrot.lane.b32.xlu0 %v1981, 1
  %v2134 = vpop.permute.xlu0 %2133
  %2135 = vrot.lane.b32.xlu0 %v1982, 1
  %v2136 = vpop.permute.xlu0 %2135
  %2137 = vrot.lane.b32.xlu0 %v1983, 1
  %v2138 = vpop.permute.xlu0 %2137
  %2139 = vrot.lane.b32.xlu0 %v1984, 1
  %v2140 = vpop.permute.xlu0 %2139
  %2141 = vrot.lane.b32.xlu0 %v1985, 1
  %v2142 = vpop.permute.xlu0 %2141
  %2143 = vrot.lane.b32.xlu0 %v1986, 1
  %v2144 = vpop.permute.xlu0 %2143
  %2145 = vrot.lane.b32.xlu0 %v1987, 1
  %v2146 = vpop.permute.xlu0 %2145
  %2147 = vrot.lane.b32.xlu0 %v1988, 1
  %v2148 = vpop.permute.xlu0 %2147
  %v2149 = vsel %vm361, %v2146, %v2148
  %v2150 = vsel %vm361, %v2144, %v2146
  %v2151 = vsel %vm361, %v2142, %v2144
  %v2152 = vsel %vm361, %v2140, %v2142
  %v2153 = vsel %vm361, %v2138, %v2140
  %v2154 = vsel %vm361, %v2136, %v2138
  %v2155 = vsel %vm361, %v2134, %v2136
  %v2156 = vsel %vm361, %v2148, %v2134
  %v2157 = vmul.f32 %v2156, %v374
  %v2158 = vmul.f32 %v2155, %v378
  %v2159 = vmul.f32 %v2154, %v382
  %v2160 = vmul.f32 %v2153, %v386
  %v2161 = vmul.f32 %v2152, %v390
  %v2162 = vmul.f32 %v2151, %v394
  %v2163 = vmul.f32 %v2150, %v398
  %v2164 = vmul.f32 %v2149, %v402
  %v2173 = vrot.slane %v2157, 4
  %v2174 = vrot.slane %v2158, 4
  %v2175 = vrot.slane %v2159, 4
  %v2176 = vrot.slane %v2160, 4
  %v2177 = vrot.slane %v2161, 4
  %v2178 = vrot.slane %v2162, 4
  %v2179 = vrot.slane %v2163, 4
  %v2180 = vrot.slane %v2164, 4
  %2189 = vst [vmem:[#allocation2 + $0x40] sm:$0xf0] %v2173
  %2190 = vst [vmem:[#allocation2 + $0x48] sm:$0xf0] %v2174
  %2191 = vst [vmem:[#allocation2 + $0x50] sm:$0xf0] %v2175
  %2192 = vst [vmem:[#allocation2 + $0x58] sm:$0xf0] %v2176
  %2193 = vst [vmem:[#allocation2 + $0x60] sm:$0xf0] %v2177
  %2194 = vst [vmem:[#allocation2 + $0x68] sm:$0xf0] %v2178
  %2195 = vst [vmem:[#allocation2 + $0x70] sm:$0xf0] %v2179
  %2196 = vst [vmem:[#allocation2 + $0x78] sm:$0xf0] %v2180
  %2197 = vst [vmem:[#allocation2 + $0x80] sm:$0xf] %v1981
  %2198 = vst [vmem:[#allocation2 + $0x88] sm:$0xf] %v1982
  %2199 = vst [vmem:[#allocation2 + $0x90] sm:$0xf] %v1983
  %2200 = vst [vmem:[#allocation2 + $0x98] sm:$0xf] %v1984
  %2201 = vst [vmem:[#allocation2 + $0xa0] sm:$0xf] %v1985
  %2202 = vst [vmem:[#allocation2 + $0xa8] sm:$0xf] %v1986
  %2203 = vst [vmem:[#allocation2 + $0xb0] sm:$0xf] %v1987
  %2204 = vst [vmem:[#allocation2 + $0xb8] sm:$0xf] %v1988
  %2205 = vrot.lane.b32.xlu0 %v1981, 127
  %v2206 = vpop.permute.xlu0 %2205
  %2207 = vrot.lane.b32.xlu0 %v1982, 127
  %v2208 = vpop.permute.xlu0 %2207
  %2209 = vrot.lane.b32.xlu0 %v1983, 127
  %v2210 = vpop.permute.xlu0 %2209
  %2211 = vrot.lane.b32.xlu0 %v1984, 127
  %v2212 = vpop.permute.xlu0 %2211
  %2213 = vrot.lane.b32.xlu0 %v1985, 127
  %v2214 = vpop.permute.xlu0 %2213
  %2215 = vrot.lane.b32.xlu0 %v1986, 127
  %v2216 = vpop.permute.xlu0 %2215
  %2217 = vrot.lane.b32.xlu0 %v1987, 127
  %v2218 = vpop.permute.xlu0 %2217
  %2219 = vrot.lane.b32.xlu0 %v1988, 127
  %v2220 = vpop.permute.xlu0 %2219
  %v2221 = vsel %vm475, %v2218, %v2220
  %v2222 = vsel %vm475, %v2216, %v2218
  %v2223 = vsel %vm475, %v2214, %v2216
  %v2224 = vsel %vm475, %v2212, %v2214
  %v2225 = vsel %vm475, %v2210, %v2212
  %v2226 = vsel %vm475, %v2208, %v2210
  %v2227 = vsel %vm475, %v2206, %v2208
  %v2228 = vsel %vm475, %v2220, %v2206
  %v2229 = vmul.f32 %v2227, %v488
  %v2230 = vmul.f32 %v2226, %v492
  %v2231 = vmul.f32 %v2225, %v496
  %v2232 = vmul.f32 %v2224, %v500
  %v2233 = vmul.f32 %v2223, %v504
  %v2234 = vmul.f32 %v2222, %v508
  %v2235 = vmul.f32 %v2221, %v512
  %v2236 = vmul.f32 %v2228, %v516
  %v2245 = vrot.slane %v2229, 4
  %v2246 = vrot.slane %v2230, 4
  %v2247 = vrot.slane %v2231, 4
  %v2248 = vrot.slane %v2232, 4
  %v2249 = vrot.slane %v2233, 4
  %v2250 = vrot.slane %v2234, 4
  %v2251 = vrot.slane %v2235, 4
  %v2252 = vrot.slane %v2236, 4
  %2261 = vst [vmem:[#allocation2 + $0x80] sm:$0xf0] %v2245
  %2262 = vst [vmem:[#allocation2 + $0x88] sm:$0xf0] %v2246
  %2263 = vst [vmem:[#allocation2 + $0x90] sm:$0xf0] %v2247
  %2264 = vst [vmem:[#allocation2 + $0x98] sm:$0xf0] %v2248
  %2265 = vst [vmem:[#allocation2 + $0xa0] sm:$0xf0] %v2249
  %2266 = vst [vmem:[#allocation2 + $0xa8] sm:$0xf0] %v2250
  %2267 = vst [vmem:[#allocation2 + $0xb0] sm:$0xf0] %v2251
  %2268 = vst [vmem:[#allocation2 + $0xb8] sm:$0xf0] %v2252
  %2269 = vrot.lane.b32.xlu0 %v1981, 113
  %v2270 = vpop.permute.xlu0 %2269
  %2271 = vrot.lane.b32.xlu0 %v1982, 113
  %v2272 = vpop.permute.xlu0 %2271
  %2273 = vrot.lane.b32.xlu0 %v1983, 113
  %v2274 = vpop.permute.xlu0 %2273
  %2275 = vrot.lane.b32.xlu0 %v1984, 113
  %v2276 = vpop.permute.xlu0 %2275
  %2277 = vrot.lane.b32.xlu0 %v1985, 113
  %v2278 = vpop.permute.xlu0 %2277
  %2279 = vrot.lane.b32.xlu0 %v1986, 113
  %v2280 = vpop.permute.xlu0 %2279
  %2281 = vrot.lane.b32.xlu0 %v1987, 113
  %v2282 = vpop.permute.xlu0 %2281
  %2283 = vrot.lane.b32.xlu0 %v1988, 113
  %v2284 = vpop.permute.xlu0 %2283
  %v2285 = vsel %vm581, %v2282, %v2284
  %v2286 = vsel %vm581, %v2280, %v2282
  %v2287 = vsel %vm581, %v2278, %v2280
  %v2288 = vsel %vm581, %v2276, %v2278
  %v2289 = vsel %vm581, %v2274, %v2276
  %v2290 = vsel %vm581, %v2272, %v2274
  %v2291 = vsel %vm581, %v2270, %v2272
  %v2292 = vsel %vm581, %v2284, %v2270
  %v2293 = vmul.f32 %v2291, %v594
  %v2294 = vmul.f32 %v2290, %v598
  %v2295 = vmul.f32 %v2289, %v602
  %v2296 = vmul.f32 %v2288, %v606
  %v2297 = vmul.f32 %v2287, %v610
  %v2298 = vmul.f32 %v2286, %v614
  %v2299 = vmul.f32 %v2285, %v618
  %v2300 = vmul.f32 %v2292, %v622
  %2301 = vst [vmem:[#allocation2 + $0xc0] sm:$0xf] %v2293
  %2302 = vst [vmem:[#allocation2 + $0xc8] sm:$0xf] %v2294
  %2303 = vst [vmem:[#allocation2 + $0xd0] sm:$0xf] %v2295
  %2304 = vst [vmem:[#allocation2 + $0xd8] sm:$0xf] %v2296
  %2305 = vst [vmem:[#allocation2 + $0xe0] sm:$0xf] %v2297
  %2306 = vst [vmem:[#allocation2 + $0xe8] sm:$0xf] %v2298
  %2307 = vst [vmem:[#allocation2 + $0xf0] sm:$0xf] %v2299
  %2308 = vst [vmem:[#allocation2 + $0xf8] sm:$0xf] %v2300
  %2309 = vrot.lane.b32.xlu0 %v1981, 112
  %v2310 = vpop.permute.xlu0 %2309
  %2311 = vrot.lane.b32.xlu0 %v1982, 112
  %v2312 = vpop.permute.xlu0 %2311
  %2313 = vrot.lane.b32.xlu0 %v1983, 112
  %v2314 = vpop.permute.xlu0 %2313
  %2315 = vrot.lane.b32.xlu0 %v1984, 112
  %v2316 = vpop.permute.xlu0 %2315
  %2317 = vrot.lane.b32.xlu0 %v1985, 112
  %v2318 = vpop.permute.xlu0 %2317
  %2319 = vrot.lane.b32.xlu0 %v1986, 112
  %v2320 = vpop.permute.xlu0 %2319
  %2321 = vrot.lane.b32.xlu0 %v1987, 112
  %v2322 = vpop.permute.xlu0 %2321
  %2323 = vrot.lane.b32.xlu0 %v1988, 112
  %v2324 = vpop.permute.xlu0 %2323
  %v2325 = vsel %vm663, %v2322, %v2324
  %v2326 = vsel %vm663, %v2320, %v2322
  %v2327 = vsel %vm663, %v2318, %v2320
  %v2328 = vsel %vm663, %v2316, %v2318
  %v2329 = vsel %vm663, %v2314, %v2316
  %v2330 = vsel %vm663, %v2312, %v2314
  %v2331 = vsel %vm663, %v2310, %v2312
  %v2332 = vsel %vm663, %v2324, %v2310
  %v2333 = vmul.f32 %v2331, %v676
  %v2334 = vmul.f32 %v2330, %v680
  %v2335 = vmul.f32 %v2329, %v684
  %v2336 = vmul.f32 %v2328, %v688
  %v2337 = vmul.f32 %v2327, %v692
  %v2338 = vmul.f32 %v2326, %v696
  %v2339 = vmul.f32 %v2325, %v700
  %v2340 = vmul.f32 %v2332, %v704
  %v2349 = vrot.slane %v2333, 4
  %v2350 = vrot.slane %v2334, 4
  %v2351 = vrot.slane %v2335, 4
  %v2352 = vrot.slane %v2336, 4
  %v2353 = vrot.slane %v2337, 4
  %v2354 = vrot.slane %v2338, 4
  %v2355 = vrot.slane %v2339, 4
  %v2356 = vrot.slane %v2340, 4
  %2365 = vst [vmem:[#allocation2 + $0xc0] sm:$0xf0] %v2349
  %2366 = vst [vmem:[#allocation2 + $0xc8] sm:$0xf0] %v2350
  %2367 = vst [vmem:[#allocation2 + $0xd0] sm:$0xf0] %v2351
  %2368 = vst [vmem:[#allocation2 + $0xd8] sm:$0xf0] %v2352
  %2369 = vst [vmem:[#allocation2 + $0xe0] sm:$0xf0] %v2353
  %2370 = vst [vmem:[#allocation2 + $0xe8] sm:$0xf0] %v2354
  %2371 = vst [vmem:[#allocation2 + $0xf0] sm:$0xf0] %v2355
  %2372 = vst [vmem:[#allocation2 + $0xf8] sm:$0xf0] %v2356
  %2373 = vrot.lane.b32.xlu0 %v1981, 111
  %v2374 = vpop.permute.xlu0 %2373
  %2375 = vrot.lane.b32.xlu0 %v1982, 111
  %v2376 = vpop.permute.xlu0 %2375
  %2377 = vrot.lane.b32.xlu0 %v1983, 111
  %v2378 = vpop.permute.xlu0 %2377
  %2379 = vrot.lane.b32.xlu0 %v1984, 111
  %v2380 = vpop.permute.xlu0 %2379
  %2381 = vrot.lane.b32.xlu0 %v1985, 111
  %v2382 = vpop.permute.xlu0 %2381
  %2383 = vrot.lane.b32.xlu0 %v1986, 111
  %v2384 = vpop.permute.xlu0 %2383
  %2385 = vrot.lane.b32.xlu0 %v1987, 111
  %v2386 = vpop.permute.xlu0 %2385
  %2387 = vrot.lane.b32.xlu0 %v1988, 111
  %v2388 = vpop.permute.xlu0 %2387
  %v2389 = vsel %vm769, %v2386, %v2388
  %v2390 = vsel %vm769, %v2384, %v2386
  %v2391 = vsel %vm769, %v2382, %v2384
  %v2392 = vsel %vm769, %v2380, %v2382
  %v2393 = vsel %vm769, %v2378, %v2380
  %v2394 = vsel %vm769, %v2376, %v2378
  %v2395 = vsel %vm769, %v2374, %v2376
  %v2396 = vsel %vm769, %v2388, %v2374
  %v2397 = vmul.f32 %v2395, %v782
  %v2398 = vmul.f32 %v2394, %v786
  %v2399 = vmul.f32 %v2393, %v790
  %v2400 = vmul.f32 %v2392, %v794
  %v2401 = vmul.f32 %v2391, %v798
  %v2402 = vmul.f32 %v2390, %v802
  %v2403 = vmul.f32 %v2389, %v806
  %v2404 = vmul.f32 %v2396, %v810
  %2405 = vst [vmem:[#allocation2 + $0x100] sm:$0xf] %v2397
  %2406 = vst [vmem:[#allocation2 + $0x108] sm:$0xf] %v2398
  %2407 = vst [vmem:[#allocation2 + $0x110] sm:$0xf] %v2399
  %2408 = vst [vmem:[#allocation2 + $0x118] sm:$0xf] %v2400
  %2409 = vst [vmem:[#allocation2 + $0x120] sm:$0xf] %v2401
  %2410 = vst [vmem:[#allocation2 + $0x128] sm:$0xf] %v2402
  %2411 = vst [vmem:[#allocation2 + $0x130] sm:$0xf] %v2403
  %2412 = vst [vmem:[#allocation2 + $0x138] sm:$0xf] %v2404
  %v2413 = vld [vmem:[%s3] sm:$0xf]
  %v2414 = vld [vmem:[#allocation2] sm:$0xff]
  %v2415 = vld [vmem:[#allocation2 + $0x8] sm:$0xff]
  %v2416 = vld [vmem:[#allocation2 + $0x10] sm:$0xff]
  %v2417 = vld [vmem:[#allocation2 + $0x18] sm:$0xff]
  %v2418 = vld [vmem:[#allocation2 + $0x20] sm:$0xff]
  %v2419 = vld [vmem:[#allocation2 + $0x28] sm:$0xff]
  %v2420 = vld [vmem:[#allocation2 + $0x30] sm:$0xff]
  %v2421 = vld [vmem:[#allocation2 + $0x38] sm:$0xff]
  %v2422 = vld [vmem:[#allocation2 + $0x40] sm:$0xff]
  %v2423 = vld [vmem:[#allocation2 + $0x48] sm:$0xff]
  %v2424 = vld [vmem:[#allocation2 + $0x50] sm:$0xff]
  %v2425 = vld [vmem:[#allocation2 + $0x58] sm:$0xff]
  %v2426 = vld [vmem:[#allocation2 + $0x60] sm:$0xff]
  %v2427 = vld [vmem:[#allocation2 + $0x68] sm:$0xff]
  %v2428 = vld [vmem:[#allocation2 + $0x70] sm:$0xff]
  %v2429 = vld [vmem:[#allocation2 + $0x78] sm:$0xff]
  %v2430 = vld [vmem:[#allocation2 + $0x80] sm:$0xff]
  %v2431 = vld [vmem:[#allocation2 + $0x88] sm:$0xff]
  %v2432 = vld [vmem:[#allocation2 + $0x90] sm:$0xff]
  %v2433 = vld [vmem:[#allocation2 + $0x98] sm:$0xff]
  %v2434 = vld [vmem:[#allocation2 + $0xa0] sm:$0xff]
  %v2435 = vld [vmem:[#allocation2 + $0xa8] sm:$0xff]
  %v2436 = vld [vmem:[#allocation2 + $0xb0] sm:$0xff]
  %v2437 = vld [vmem:[#allocation2 + $0xb8] sm:$0xff]
  %v2438 = vld [vmem:[#allocation2 + $0xc0] sm:$0xff]
  %v2439 = vld [vmem:[#allocation2 + $0xc8] sm:$0xff]
  %v2440 = vld [vmem:[#allocation2 + $0xd0] sm:$0xff]
  %v2441 = vld [vmem:[#allocation2 + $0xd8] sm:$0xff]
  %v2442 = vld [vmem:[#allocation2 + $0xe0] sm:$0xff]
  %v2443 = vld [vmem:[#allocation2 + $0xe8] sm:$0xff]
  %v2444 = vld [vmem:[#allocation2 + $0xf0] sm:$0xff]
  %v2445 = vld [vmem:[#allocation2 + $0xf8] sm:$0xff]
  %v2446 = vld [vmem:[#allocation2 + $0x100] sm:$0x1f]
  %v2447 = vld [vmem:[#allocation2 + $0x108] sm:$0x1f]
  %v2448 = vld [vmem:[#allocation2 + $0x110] sm:$0x1f]
  %v2449 = vld [vmem:[#allocation2 + $0x118] sm:$0x1f]
  %v2450 = vld [vmem:[#allocation2 + $0x120] sm:$0x1f]
  %v2451 = vld [vmem:[#allocation2 + $0x128] sm:$0x1f]
  %v2452 = vld [vmem:[#allocation2 + $0x130] sm:$0x1f]
  %v2453 = vld [vmem:[#allocation2 + $0x138] sm:$0x1f]
  %v2455 = vsel %vm876, %v2413, 0
  %v2458 = vsel %vm880, %v2446, 0
  %v2461 = vsel %vm880, %v2447, 0
  %v2464 = vsel %vm880, %v2448, 0
  %v2467 = vsel %vm880, %v2449, 0
  %v2470 = vsel %vm880, %v2450, 0
  %v2473 = vsel %vm880, %v2451, 0
  %v2476 = vsel %vm880, %v2452, 0
  %v2479 = vsel %vm880, %v2453, 0
  %2481 = vmatprep.subr.mxu0 0.0
  %2482 = vmatpush1.msra.mxu0 0.0
  %2483 = vmatprep.subr.mxu0 0.0
  %2484 = vmatpush1.msra.mxu0 0.0
  %2485 = vmatprep.subr.mxu0 0.0
  %2486 = vmatpush1.msra.mxu0 0.0
  %2487 = vmatprep.subr.mxu0 0.0
  %2488 = vmatpush1.msra.mxu0 0.0
  %2489 = vmatprep.subr.mxu0 0.0
  %2490 = vmatpush1.msra.mxu0 0.0
  %2491 = vmatprep.subr.mxu0 0.0
  %2492 = vmatpush1.msra.mxu0 0.0
  %2493 = vmatprep.subr.mxu0 0.0
  %2494 = vmatpush1.msra.mxu0 0.0
  %2495 = vmatprep.subr.mxu0 0.0
  %2496 = vmatpush1.msra.mxu0 0.0
  %2497 = vmatprep.subr.mxu0 0.0
  %2498 = vmatpush1.msra.mxu0 0.0
  %2499 = vmatprep.subr.mxu0 0.0
  %2500 = vmatpush1.msra.mxu0 0.0
  %2501 = vmatprep.subr.mxu0 0.0
  %2502 = vmatpush1.msra.mxu0 0.0
  %2503 = vmatprep.subr.mxu0 %v2461
  %2504 = vmatpush1.msra.mxu0 %v2458
  %2505 = vmatprep.subr.mxu0 %v2439
  %2506 = vmatpush1.msra.mxu0 %v2438
  %2507 = vmatprep.subr.mxu0 %v2431
  %2508 = vmatpush1.msra.mxu0 %v2430
  %2509 = vmatprep.subr.mxu0 %v2423
  %2510 = vmatpush1.msra.mxu0 %v2422
  %2511 = vmatprep.subr.mxu0 %v2415
  %2512 = vmatpush1.msra.mxu0 %v2414
  %2513 = vmatprep.subr.mxu0 0.0
  %2514 = vmatpush2.msra.mxu0 0.0
  %2515 = vmatprep.subr.mxu0 0.0
  %2516 = vmatpush2.msra.mxu0 0.0
  %2517 = vmatprep.subr.mxu0 0.0
  %2518 = vmatpush2.msra.mxu0 0.0
  %2519 = vmatprep.subr.mxu0 0.0
  %2520 = vmatpush2.msra.mxu0 0.0
  %2521 = vmatprep.subr.mxu0 0.0
  %2522 = vmatpush2.msra.mxu0 0.0
  %2523 = vmatprep.subr.mxu0 0.0
  %2524 = vmatpush2.msra.mxu0 0.0
  %2525 = vmatprep.subr.mxu0 0.0
  %2526 = vmatpush2.msra.mxu0 0.0
  %2527 = vmatprep.subr.mxu0 0.0
  %2528 = vmatpush2.msra.mxu0 0.0
  %2529 = vmatprep.subr.mxu0 0.0
  %2530 = vmatpush2.msra.mxu0 0.0
  %2531 = vmatprep.subr.mxu0 0.0
  %2532 = vmatpush2.msra.mxu0 0.0
  %2533 = vmatprep.subr.mxu0 0.0
  %2534 = vmatpush2.msra.mxu0 0.0
  %2535 = vmatprep.subr.mxu0 0.0
  %2536 = vmatpush2.msra.mxu0 0.0
  %2537 = vmatprep.subr.mxu0 0.0
  %2538 = vmatpush2.msra.mxu0 0.0
  %2539 = vmatprep.subr.mxu0 0.0
  %2540 = vmatpush2.msra.mxu0 0.0
  %2541 = vmatprep.subr.mxu0 0.0
  %2542 = vmatpush2.msra.mxu0 0.0
  %2543 = vmatprep.subr.mxu0 0.0
  %2544 = vmatpush2.msra.mxu0 0.0
  %2545 = vmatprep.mubr.f32.mxu0 0.0
  %2546 = vmatmul.mubr.f32.gmra.mxu0 %v2455
  %v2547 = vpop.f32.mrf.mxu0
  %v2548 = vadd.f32 0.0, %v2547
  %v2549 = vpop.f32.mrf.mxu0
  %v2550 = vadd.f32 0.0, %v2549
  %2551 = vdwg.mxu0
  %2552 = vmatprep.subr.mxu0 0.0
  %2553 = vmatpush1.msra.mxu0 0.0
  %2554 = vmatprep.subr.mxu0 0.0
  %2555 = vmatpush1.msra.mxu0 0.0
  %2556 = vmatprep.subr.mxu0 0.0
  %2557 = vmatpush1.msra.mxu0 0.0
  %2558 = vmatprep.subr.mxu0 0.0
  %2559 = vmatpush1.msra.mxu0 0.0
  %2560 = vmatprep.subr.mxu0 0.0
  %2561 = vmatpush1.msra.mxu0 0.0
  %2562 = vmatprep.subr.mxu0 0.0
  %2563 = vmatpush1.msra.mxu0 0.0
  %2564 = vmatprep.subr.mxu0 0.0
  %2565 = vmatpush1.msra.mxu0 0.0
  %2566 = vmatprep.subr.mxu0 0.0
  %2567 = vmatpush1.msra.mxu0 0.0
  %2568 = vmatprep.subr.mxu0 0.0
  %2569 = vmatpush1.msra.mxu0 0.0
  %2570 = vmatprep.subr.mxu0 0.0
  %2571 = vmatpush1.msra.mxu0 0.0
  %2572 = vmatprep.subr.mxu0 0.0
  %2573 = vmatpush1.msra.mxu0 0.0
  %2574 = vmatprep.subr.mxu0 %v2467
  %2575 = vmatpush1.msra.mxu0 %v2464
  %2576 = vmatprep.subr.mxu0 %v2441
  %2577 = vmatpush1.msra.mxu0 %v2440
  %2578 = vmatprep.subr.mxu0 %v2433
  %2579 = vmatpush1.msra.mxu0 %v2432
  %2580 = vmatprep.subr.mxu0 %v2425
  %2581 = vmatpush1.msra.mxu0 %v2424
  %2582 = vmatprep.subr.mxu0 %v2417
  %2583 = vmatpush1.msra.mxu0 %v2416
  %2584 = vmatprep.subr.mxu0 0.0
  %2585 = vmatpush2.msra.mxu0 0.0
  %2586 = vmatprep.subr.mxu0 0.0
  %2587 = vmatpush2.msra.mxu0 0.0
  %2588 = vmatprep.subr.mxu0 0.0
  %2589 = vmatpush2.msra.mxu0 0.0
  %2590 = vmatprep.subr.mxu0 0.0
  %2591 = vmatpush2.msra.mxu0 0.0
  %2592 = vmatprep.subr.mxu0 0.0
  %2593 = vmatpush2.msra.mxu0 0.0
  %2594 = vmatprep.subr.mxu0 0.0
  %2595 = vmatpush2.msra.mxu0 0.0
  %2596 = vmatprep.subr.mxu0 0.0
  %2597 = vmatpush2.msra.mxu0 0.0
  %2598 = vmatprep.subr.mxu0 0.0
  %2599 = vmatpush2.msra.mxu0 0.0
  %2600 = vmatprep.subr.mxu0 0.0
  %2601 = vmatpush2.msra.mxu0 0.0
  %2602 = vmatprep.subr.mxu0 0.0
  %2603 = vmatpush2.msra.mxu0 0.0
  %2604 = vmatprep.subr.mxu0 0.0
  %2605 = vmatpush2.msra.mxu0 0.0
  %2606 = vmatprep.subr.mxu0 0.0
  %2607 = vmatpush2.msra.mxu0 0.0
  %2608 = vmatprep.subr.mxu0 0.0
  %2609 = vmatpush2.msra.mxu0 0.0
  %2610 = vmatprep.subr.mxu0 0.0
  %2611 = vmatpush2.msra.mxu0 0.0
  %2612 = vmatprep.subr.mxu0 0.0
  %2613 = vmatpush2.msra.mxu0 0.0
  %2614 = vmatprep.subr.mxu0 0.0
  %2615 = vmatpush2.msra.mxu0 0.0
  %2616 = vmatprep.mubr.f32.mxu0 0.0
  %2617 = vmatmul.mubr.f32.gmra.mxu0 %v2455
  %v2618 = vpop.f32.mrf.mxu0
  %v2619 = vadd.f32 0.0, %v2618
  %v2620 = vpop.f32.mrf.mxu0
  %v2621 = vadd.f32 0.0, %v2620
  %2622 = vdwg.mxu0
  %2623 = vmatprep.subr.mxu0 0.0
  %2624 = vmatpush1.msra.mxu0 0.0
  %2625 = vmatprep.subr.mxu0 0.0
  %2626 = vmatpush1.msra.mxu0 0.0
  %2627 = vmatprep.subr.mxu0 0.0
  %2628 = vmatpush1.msra.mxu0 0.0
  %2629 = vmatprep.subr.mxu0 0.0
  %2630 = vmatpush1.msra.mxu0 0.0
  %2631 = vmatprep.subr.mxu0 0.0
  %2632 = vmatpush1.msra.mxu0 0.0
  %2633 = vmatprep.subr.mxu0 0.0
  %2634 = vmatpush1.msra.mxu0 0.0
  %2635 = vmatprep.subr.mxu0 0.0
  %2636 = vmatpush1.msra.mxu0 0.0
  %2637 = vmatprep.subr.mxu0 0.0
  %2638 = vmatpush1.msra.mxu0 0.0
  %2639 = vmatprep.subr.mxu0 0.0
  %2640 = vmatpush1.msra.mxu0 0.0
  %2641 = vmatprep.subr.mxu0 0.0
  %2642 = vmatpush1.msra.mxu0 0.0
  %2643 = vmatprep.subr.mxu0 0.0
  %2644 = vmatpush1.msra.mxu0 0.0
  %2645 = vmatprep.subr.mxu0 %v2473
  %2646 = vmatpush1.msra.mxu0 %v2470
  %2647 = vmatprep.subr.mxu0 %v2443
  %2648 = vmatpush1.msra.mxu0 %v2442
  %2649 = vmatprep.subr.mxu0 %v2435
  %2650 = vmatpush1.msra.mxu0 %v2434
  %2651 = vmatprep.subr.mxu0 %v2427
  %2652 = vmatpush1.msra.mxu0 %v2426
  %2653 = vmatprep.subr.mxu0 %v2419
  %2654 = vmatpush1.msra.mxu0 %v2418
  %2655 = vmatprep.subr.mxu0 0.0
  %2656 = vmatpush2.msra.mxu0 0.0
  %2657 = vmatprep.subr.mxu0 0.0
  %2658 = vmatpush2.msra.mxu0 0.0
  %2659 = vmatprep.subr.mxu0 0.0
  %2660 = vmatpush2.msra.mxu0 0.0
  %2661 = vmatprep.subr.mxu0 0.0
  %2662 = vmatpush2.msra.mxu0 0.0
  %2663 = vmatprep.subr.mxu0 0.0
  %2664 = vmatpush2.msra.mxu0 0.0
  %2665 = vmatprep.subr.mxu0 0.0
  %2666 = vmatpush2.msra.mxu0 0.0
  %2667 = vmatprep.subr.mxu0 0.0
  %2668 = vmatpush2.msra.mxu0 0.0
  %2669 = vmatprep.subr.mxu0 0.0
  %2670 = vmatpush2.msra.mxu0 0.0
  %2671 = vmatprep.subr.mxu0 0.0
  %2672 = vmatpush2.msra.mxu0 0.0
  %2673 = vmatprep.subr.mxu0 0.0
  %2674 = vmatpush2.msra.mxu0 0.0
  %2675 = vmatprep.subr.mxu0 0.0
  %2676 = vmatpush2.msra.mxu0 0.0
  %2677 = vmatprep.subr.mxu0 0.0
  %2678 = vmatpush2.msra.mxu0 0.0
  %2679 = vmatprep.subr.mxu0 0.0
  %2680 = vmatpush2.msra.mxu0 0.0
  %2681 = vmatprep.subr.mxu0 0.0
  %2682 = vmatpush2.msra.mxu0 0.0
  %2683 = vmatprep.subr.mxu0 0.0
  %2684 = vmatpush2.msra.mxu0 0.0
  %2685 = vmatprep.subr.mxu0 0.0
  %2686 = vmatpush2.msra.mxu0 0.0
  %2687 = vmatprep.mubr.f32.mxu0 0.0
  %2688 = vmatmul.mubr.f32.gmra.mxu0 %v2455
  %v2689 = vpop.f32.mrf.mxu0
  %v2690 = vadd.f32 0.0, %v2689
  %v2691 = vpop.f32.mrf.mxu0
  %v2692 = vadd.f32 0.0, %v2691
  %2693 = vdwg.mxu0
  %2694 = vmatprep.subr.mxu0 0.0
  %2695 = vmatpush1.msra.mxu0 0.0
  %2696 = vmatprep.subr.mxu0 0.0
  %2697 = vmatpush1.msra.mxu0 0.0
  %2698 = vmatprep.subr.mxu0 0.0
  %2699 = vmatpush1.msra.mxu0 0.0
  %2700 = vmatprep.subr.mxu0 0.0
  %2701 = vmatpush1.msra.mxu0 0.0
  %2702 = vmatprep.subr.mxu0 0.0
  %2703 = vmatpush1.msra.mxu0 0.0
  %2704 = vmatprep.subr.mxu0 0.0
  %2705 = vmatpush1.msra.mxu0 0.0
  %2706 = vmatprep.subr.mxu0 0.0
  %2707 = vmatpush1.msra.mxu0 0.0
  %2708 = vmatprep.subr.mxu0 0.0
  %2709 = vmatpush1.msra.mxu0 0.0
  %2710 = vmatprep.subr.mxu0 0.0
  %2711 = vmatpush1.msra.mxu0 0.0
  %2712 = vmatprep.subr.mxu0 0.0
  %2713 = vmatpush1.msra.mxu0 0.0
  %2714 = vmatprep.subr.mxu0 0.0
  %2715 = vmatpush1.msra.mxu0 0.0
  %2716 = vmatprep.subr.mxu0 %v2479
  %2717 = vmatpush1.msra.mxu0 %v2476
  %2718 = vmatprep.subr.mxu0 %v2445
  %2719 = vmatpush1.msra.mxu0 %v2444
  %2720 = vmatprep.subr.mxu0 %v2437
  %2721 = vmatpush1.msra.mxu0 %v2436
  %2722 = vmatprep.subr.mxu0 %v2429
  %2723 = vmatpush1.msra.mxu0 %v2428
  %2724 = vmatprep.subr.mxu0 %v2421
  %2725 = vmatpush1.msra.mxu0 %v2420
  %2726 = vmatprep.subr.mxu0 0.0
  %2727 = vmatpush2.msra.mxu0 0.0
  %2728 = vmatprep.subr.mxu0 0.0
  %2729 = vmatpush2.msra.mxu0 0.0
  %2730 = vmatprep.subr.mxu0 0.0
  %2731 = vmatpush2.msra.mxu0 0.0
  %2732 = vmatprep.subr.mxu0 0.0
  %2733 = vmatpush2.msra.mxu0 0.0
  %2734 = vmatprep.subr.mxu0 0.0
  %2735 = vmatpush2.msra.mxu0 0.0
  %2736 = vmatprep.subr.mxu0 0.0
  %2737 = vmatpush2.msra.mxu0 0.0
  %2738 = vmatprep.subr.mxu0 0.0
  %2739 = vmatpush2.msra.mxu0 0.0
  %2740 = vmatprep.subr.mxu0 0.0
  %2741 = vmatpush2.msra.mxu0 0.0
  %2742 = vmatprep.subr.mxu0 0.0
  %2743 = vmatpush2.msra.mxu0 0.0
  %2744 = vmatprep.subr.mxu0 0.0
  %2745 = vmatpush2.msra.mxu0 0.0
  %2746 = vmatprep.subr.mxu0 0.0
  %2747 = vmatpush2.msra.mxu0 0.0
  %2748 = vmatprep.subr.mxu0 0.0
  %2749 = vmatpush2.msra.mxu0 0.0
  %2750 = vmatprep.subr.mxu0 0.0
  %2751 = vmatpush2.msra.mxu0 0.0
  %2752 = vmatprep.subr.mxu0 0.0
  %2753 = vmatpush2.msra.mxu0 0.0
  %2754 = vmatprep.subr.mxu0 0.0
  %2755 = vmatpush2.msra.mxu0 0.0
  %2756 = vmatprep.subr.mxu0 0.0
  %2757 = vmatpush2.msra.mxu0 0.0
  %2758 = vmatprep.mubr.f32.mxu0 0.0
  %2759 = vmatmul.mubr.f32.gmra.mxu0 %v2455
  %v2760 = vpop.f32.mrf.mxu0
  %v2761 = vadd.f32 0.0, %v2760
  %v2762 = vpop.f32.mrf.mxu0
  %v2763 = vadd.f32 0.0, %v2762
  %2764 = vdwg.mxu0
  %v2765 = vmax.f32 %v2548, 0.0
  %v2766 = vmax.f32 %v2550, 0.0
  %v2767 = vmax.f32 %v2619, 0.0
  %v2768 = vmax.f32 %v2621, 0.0
  %v2769 = vmax.f32 %v2690, 0.0
  %v2770 = vmax.f32 %v2692, 0.0
  %v2771 = vmax.f32 %v2761, 0.0
  %v2772 = vmax.f32 %v2763, 0.0
  %v2773 = vadd.f32 %v1981, %v2765
  %v2774 = vadd.f32 %v1982, %v2766
  %v2775 = vadd.f32 %v1983, %v2767
  %v2776 = vadd.f32 %v1984, %v2768
  %v2777 = vadd.f32 %v1985, %v2769
  %v2778 = vadd.f32 %v1986, %v2770
  %v2779 = vadd.f32 %v1987, %v2771
  %v2780 = vadd.f32 %v1988, %v2772
  %v2781 = vadd.f32 %v2773, %v2777
  %v2782 = vadd.f32 %v2774, %v2778
  %v2783 = vadd.f32 %v2775, %v2779
  %v2784 = vadd.f32 %v2776, %v2780
  %v2785 = vld [vmem:[%s4] sm:$0xff]
  %2787 = vset.pattern.permute.xlu0 4
  %2788 = vperm.xlu0 %2787, %v2785
  %v2789 = vpop.permute.xlu0 %2788
  %vm2791 = vcmask 31744
  %v2792 = vsel %vm2791, %v2785, 0
  %vm2794 = vcmask 1043456
  %v2796 = vsel %vm2794, %v2781, 0
  %v2799 = vsel %vm2794, %v2782, 0
  %v2802 = vsel %vm2794, %v2783, 0
  %v2805 = vsel %vm2794, %v2784, 0
  %2807 = vmatprep.subr.mxu0 0.0
  %2808 = vmatpush1.msra.mxu0 0.0
  %2809 = vmatprep.subr.mxu0 0.0
  %2810 = vmatpush1.msra.mxu0 0.0
  %2811 = vmatprep.subr.mxu0 0.0
  %2812 = vmatpush1.msra.mxu0 0.0
  %2813 = vmatprep.subr.mxu0 0.0
  %2814 = vmatpush1.msra.mxu0 0.0
  %2815 = vmatprep.subr.mxu0 0.0
  %2816 = vmatpush1.msra.mxu0 0.0
  %2817 = vmatprep.subr.mxu0 0.0
  %2818 = vmatpush1.msra.mxu0 0.0
  %2819 = vmatprep.subr.mxu0 0.0
  %2820 = vmatpush1.msra.mxu0 0.0
  %2821 = vmatprep.subr.mxu0 0.0
  %2822 = vmatpush1.msra.mxu0 0.0
  %2823 = vmatprep.subr.mxu0 0.0
  %2824 = vmatpush1.msra.mxu0 0.0
  %2825 = vmatprep.subr.mxu0 0.0
  %2826 = vmatpush1.msra.mxu0 0.0
  %2827 = vmatprep.subr.mxu0 0.0
  %2828 = vmatpush1.msra.mxu0 0.0
  %2829 = vmatprep.subr.mxu0 0.0
  %2830 = vmatpush1.msra.mxu0 0.0
  %2831 = vmatprep.subr.mxu0 0.0
  %2832 = vmatpush1.msra.mxu0 0.0
  %2833 = vmatprep.subr.mxu0 0.0
  %2834 = vmatpush1.msra.mxu0 0.0
  %2835 = vmatprep.subr.mxu0 0.0
  %2836 = vmatpush1.msra.mxu0 0.0
  %2837 = vmatprep.subr.mxu0 %v2799
  %2838 = vmatpush1.msra.mxu0 %v2796
  %2839 = vmatprep.subr.mxu0 0.0
  %2840 = vmatpush2.msra.mxu0 0.0
  %2841 = vmatprep.subr.mxu0 0.0
  %2842 = vmatpush2.msra.mxu0 0.0
  %2843 = vmatprep.subr.mxu0 0.0
  %2844 = vmatpush2.msra.mxu0 0.0
  %2845 = vmatprep.subr.mxu0 0.0
  %2846 = vmatpush2.msra.mxu0 0.0
  %2847 = vmatprep.subr.mxu0 0.0
  %2848 = vmatpush2.msra.mxu0 0.0
  %2849 = vmatprep.subr.mxu0 0.0
  %2850 = vmatpush2.msra.mxu0 0.0
  %2851 = vmatprep.subr.mxu0 0.0
  %2852 = vmatpush2.msra.mxu0 0.0
  %2853 = vmatprep.subr.mxu0 0.0
  %2854 = vmatpush2.msra.mxu0 0.0
  %2855 = vmatprep.subr.mxu0 0.0
  %2856 = vmatpush2.msra.mxu0 0.0
  %2857 = vmatprep.subr.mxu0 0.0
  %2858 = vmatpush2.msra.mxu0 0.0
  %2859 = vmatprep.subr.mxu0 0.0
  %2860 = vmatpush2.msra.mxu0 0.0
  %2861 = vmatprep.subr.mxu0 0.0
  %2862 = vmatpush2.msra.mxu0 0.0
  %2863 = vmatprep.subr.mxu0 0.0
  %2864 = vmatpush2.msra.mxu0 0.0
  %2865 = vmatprep.subr.mxu0 0.0
  %2866 = vmatpush2.msra.mxu0 0.0
  %2867 = vmatprep.subr.mxu0 0.0
  %2868 = vmatpush2.msra.mxu0 0.0
  %2869 = vmatprep.subr.mxu0 0.0
  %2870 = vmatpush2.msra.mxu0 0.0
  %2871 = vmatprep.mubr.f32.mxu0 0.0
  %2872 = vmatmul.mubr.f32.gmra.mxu0 %v2792
  %v2873 = vpop.f32.mrf.mxu0
  %v2874 = vadd.f32 %v2789, %v2873
  %v2875 = vpop.f32.mrf.mxu0
  %v2876 = vadd.f32 %v2789, %v2875
  %2877 = vdwg.mxu0
  %2878 = vmatprep.subr.mxu0 0.0
  %2879 = vmatpush1.msra.mxu0 0.0
  %2880 = vmatprep.subr.mxu0 0.0
  %2881 = vmatpush1.msra.mxu0 0.0
  %2882 = vmatprep.subr.mxu0 0.0
  %2883 = vmatpush1.msra.mxu0 0.0
  %2884 = vmatprep.subr.mxu0 0.0
  %2885 = vmatpush1.msra.mxu0 0.0
  %2886 = vmatprep.subr.mxu0 0.0
  %2887 = vmatpush1.msra.mxu0 0.0
  %2888 = vmatprep.subr.mxu0 0.0
  %2889 = vmatpush1.msra.mxu0 0.0
  %2890 = vmatprep.subr.mxu0 0.0
  %2891 = vmatpush1.msra.mxu0 0.0
  %2892 = vmatprep.subr.mxu0 0.0
  %2893 = vmatpush1.msra.mxu0 0.0
  %2894 = vmatprep.subr.mxu0 0.0
  %2895 = vmatpush1.msra.mxu0 0.0
  %2896 = vmatprep.subr.mxu0 0.0
  %2897 = vmatpush1.msra.mxu0 0.0
  %2898 = vmatprep.subr.mxu0 0.0
  %2899 = vmatpush1.msra.mxu0 0.0
  %2900 = vmatprep.subr.mxu0 0.0
  %2901 = vmatpush1.msra.mxu0 0.0
  %2902 = vmatprep.subr.mxu0 0.0
  %2903 = vmatpush1.msra.mxu0 0.0
  %2904 = vmatprep.subr.mxu0 0.0
  %2905 = vmatpush1.msra.mxu0 0.0
  %2906 = vmatprep.subr.mxu0 0.0
  %2907 = vmatpush1.msra.mxu0 0.0
  %2908 = vmatprep.subr.mxu0 %v2805
  %2909 = vmatpush1.msra.mxu0 %v2802
  %2910 = vmatprep.subr.mxu0 0.0
  %2911 = vmatpush2.msra.mxu0 0.0
  %2912 = vmatprep.subr.mxu0 0.0
  %2913 = vmatpush2.msra.mxu0 0.0
  %2914 = vmatprep.subr.mxu0 0.0
  %2915 = vmatpush2.msra.mxu0 0.0
  %2916 = vmatprep.subr.mxu0 0.0
  %2917 = vmatpush2.msra.mxu0 0.0
  %2918 = vmatprep.subr.mxu0 0.0
  %2919 = vmatpush2.msra.mxu0 0.0
  %2920 = vmatprep.subr.mxu0 0.0
  %2921 = vmatpush2.msra.mxu0 0.0
  %2922 = vmatprep.subr.mxu0 0.0
  %2923 = vmatpush2.msra.mxu0 0.0
  %2924 = vmatprep.subr.mxu0 0.0
  %2925 = vmatpush2.msra.mxu0 0.0
  %2926 = vmatprep.subr.mxu0 0.0
  %2927 = vmatpush2.msra.mxu0 0.0
  %2928 = vmatprep.subr.mxu0 0.0
  %2929 = vmatpush2.msra.mxu0 0.0
  %2930 = vmatprep.subr.mxu0 0.0
  %2931 = vmatpush2.msra.mxu0 0.0
  %2932 = vmatprep.subr.mxu0 0.0
  %2933 = vmatpush2.msra.mxu0 0.0
  %2934 = vmatprep.subr.mxu0 0.0
  %2935 = vmatpush2.msra.mxu0 0.0
  %2936 = vmatprep.subr.mxu0 0.0
  %2937 = vmatpush2.msra.mxu0 0.0
  %2938 = vmatprep.subr.mxu0 0.0
  %2939 = vmatpush2.msra.mxu0 0.0
  %2940 = vmatprep.subr.mxu0 0.0
  %2941 = vmatpush2.msra.mxu0 0.0
  %2942 = vmatprep.mubr.f32.mxu0 0.0
  %2943 = vmatmul.mubr.f32.gmra.mxu0 %v2792
  %v2944 = vpop.f32.mrf.mxu0
  %v2945 = vadd.f32 %v2789, %v2944
  %v2946 = vpop.f32.mrf.mxu0
  %v2947 = vadd.f32 %v2789, %v2946
  %2948 = vdwg.mxu0
  %v2949 = vmax.f32 %v2874, 0.0
  %v2950 = vmax.f32 %v2876, 0.0
  %v2951 = vmax.f32 %v2945, 0.0
  %v2952 = vmax.f32 %v2947, 0.0
  %2953 = vst [vmem:[%s6] sm:$0xff] %v2949
  %2954 = vst [vmem:[%s6 + $0x8] sm:$0xff] %v2950
  %2955 = vst [vmem:[%s6 + $0x10] sm:$0xff] %v2951
  %2956 = vst [vmem:[%s6 + $0x18] sm:$0xff] %v2952
  // Predicated region
  $region26: #{densecat_cat_add_forward.1} parent=0 // pred_check
    _
  $region27: #{densecat_cat_add_forward.1} parent=0 // pred_check_branch
    %2958 = sbr.rel (0) target = $region29
  $region28: #{densecat_cat_add_forward.1} parent=0 // pred_region
    _
  $region29: #{densecat_cat_add_forward.1} parent=0 // pred_fallthru
    _
  // Predicated region
  $region30: #{densecat_cat_add_forward.1} parent=0 // pred_check
    _
  $region31: #{densecat_cat_add_forward.1} parent=0 // pred_check_branch
    %2960 = sbr.rel (0) target = $region33
  $region32: #{densecat_cat_add_forward.1} parent=0 // pred_region
    _
  $region33: #{densecat_cat_add_forward.1} parent=0 // pred_fallthru
    _

</llo_original>
